<compile_context>
chip_gen: v5e
topology: v5e:2x2
jax: 0.10.0
libtpu: 0.0.40
codegen_flags: <defaults>
</compile_context>

<pallas_src>
import functools

import jax
import jax.numpy as jnp
import numpy as np
from jax.experimental import pallas as pl
from jax.experimental.pallas import tpu as pltpu


# ---------------------------------------------------------------------------
# helpers
# ---------------------------------------------------------------------------
def _pick_block(dim, preferred, align):
    """Largest block <= preferred that divides dim and is a multiple of align,
    falling back to the full dimension (always legal)."""
    # TODO(synk): for long non-power-of-two dims the full-dim fallback can exceed the
    # VMEM budget (notably v7x's 64 MiB); pad the array instead for such shapes.
    if dim <= preferred:
        return dim
    t = (preferred // align) * align
    while t >= align:
        if dim % t == 0:
            return t
        t -= align
    return dim


# ---------------------------------------------------------------------------
# tiled matmul kernel (bf16 MXU inputs, f32 accumulation)
# ---------------------------------------------------------------------------
def matmul_kernel(x_ref, w_ref, o_ref, acc_ref):
    @pl.when(pl.program_id(2) == 0)
    def _init():
        acc_ref[...] = jnp.zeros_like(acc_ref)

    acc_ref[...] += jnp.dot(x_ref[...], w_ref[...],
                            preferred_element_type=jnp.float32)

    @pl.when(pl.program_id(2) == pl.num_programs(2) - 1)
    def _store():
        o_ref[...] = acc_ref[...].astype(o_ref.dtype)


def pallas_matmul(x, w, *, out_dtype=jnp.float32, tm=512, tn=256, tk=512):
    M, K = x.shape
    _, N = w.shape
    tm = _pick_block(M, tm, 16)
    tn = _pick_block(N, tn, 128)
    tk = _pick_block(K, tk, 128)
    # TODO(synk): consider pl.Buffered(3) on the weight spec for very large M.
    return pl.pallas_call(
        matmul_kernel,
        out_shape=jax.ShapeDtypeStruct((M, N), out_dtype),
        grid_spec=pltpu.PrefetchScalarGridSpec(
            num_scalar_prefetch=0,
            grid=(M // tm, N // tn, K // tk),
            in_specs=[
                pl.BlockSpec((tm, tk), lambda i, j, k: (i, k)),
                pl.BlockSpec((tk, tn), lambda i, j, k: (k, j)),
            ],
            out_specs=pl.BlockSpec((tm, tn), lambda i, j, k: (i, j)),
            scratch_shapes=[pltpu.VMEM((tm, tn), jnp.float32)]),
        compiler_params=pltpu.CompilerParams(
            dimension_semantics=("parallel", "parallel", "arbitrary"),
            vmem_limit_bytes=48 * 1024 * 1024),
    )(x, w)


# ---------------------------------------------------------------------------
# RoPE kernel over the fused qkv: rotates Q and K head blocks in place-layout,
# pair swap via pltpu.roll (XLU), single (T, D) cos/sin table shared by all heads.
# ---------------------------------------------------------------------------
def rope_kernel(x_ref, cos_ref, sin_ref, o_ref, *, n_q_heads, q_scale):
    hh = pl.program_id(2)                              # head index (Q heads first)
    x = x_ref[0].astype(jnp.float32)                   # (tt, D) f32 math
    D = x.shape[-1]
    lane = jax.lax.broadcasted_iota(jnp.int32, x.shape, 1)
    is_even = (lane & 1) == 0
    # partner[2i] = x[2i+1], partner[2i+1] = x[2i]; pairs never cross the head block.
    partner = jnp.where(is_even,
                        pltpu.roll(x, D - 1, 1),       # lane j -> x[j+1]
                        pltpu.roll(x, 1, 1))           # lane j -> x[j-1]
    out = x * cos_ref[...] + partner * sin_ref[...]
    # Fold log2(e)/sqrt(D) softmax scale into Q heads only (K heads keep 1.0).
    mult = jnp.where(hh < n_q_heads, jnp.float32(q_scale), jnp.float32(1.0))
    o_ref[0] = (out * mult).astype(o_ref.dtype)


def pallas_rope(qkv_btw, cos_td, sin_td, *, n_q_heads, n_kv_heads, d_head,
                q_scale, t_tile=256):
    # TODO(synk): fuse this into the qkv matmul's last-K store phase to save the
    # extra HBM round trip of Q and K.
    B, T, _ = qkv_btw.shape
    HJ = n_q_heads + n_kv_heads
    tt = _pick_block(T, t_tile, 16)
    kernel = functools.partial(rope_kernel, n_q_heads=n_q_heads, q_scale=q_scale)
    return pl.pallas_call(
        kernel,
        out_shape=jax.ShapeDtypeStruct((B, T, HJ * d_head), qkv_btw.dtype),
        grid_spec=pltpu.PrefetchScalarGridSpec(
            num_scalar_prefetch=0,
            # head innermost: the cos/sin (tt, D) block index is unchanged across
            # heads, so the pipeline does not re-DMA it.
            grid=(B, T // tt, HJ),
            in_specs=[
                pl.BlockSpec((1, tt, d_head), lambda b, ti, hh: (b, ti, hh)),
                pl.BlockSpec((tt, d_head), lambda b, ti, hh: (ti, 0)),
                pl.BlockSpec((tt, d_head), lambda b, ti, hh: (ti, 0)),
            ],
            out_specs=pl.BlockSpec((1, tt, d_head), lambda b, ti, hh: (b, ti, hh)),
        ),
        compiler_params=pltpu.CompilerParams(
            dimension_semantics=("parallel", "parallel", "parallel")),
    )(qkv_btw, cos_td, sin_td)


# ---------------------------------------------------------------------------
# flash-style sliding-window GQA attention (grouped heads, band-restricted KV grid)
# ---------------------------------------------------------------------------
def flash_gqa_kernel(q_ref, k_ref, v_ref, o_ref, m_sc, l_sc, acc_sc, *,
                     window, tq, tkv, group, d_head):
    qi = pl.program_id(1)
    kl = pl.program_id(2)
    nb = pl.num_programs(2)

    @pl.when(kl == 0)
    def _init():
        m_sc[...] = jnp.full_like(m_sc, -jnp.inf)
        l_sc[...] = jnp.zeros_like(l_sc)
        acc_sc[...] = jnp.zeros_like(acc_sc)

    q_start = qi * tq
    start_blk = jnp.maximum(q_start - window, 0) // tkv
    k_start = (start_blk + kl) * tkv      # UNclamped: skip/mask math uses this
    # Causal check also rejects band overshoot (clamped DMA block is never computed).
    not_future = k_start <= q_start + (tq - 1)
    not_stale = (q_start - (k_start + (tkv - 1))) <= window

    def online_update(keep):
        k = k_ref[0]                       # (tkv, D)        bf16, RoPE'd
        v = v_ref[0]                       # (tkv, D)        bf16
        q = q_ref[0]                       # (tq, group*D)   bf16, RoPE'd + scaled
        for g in range(group):             # static loop: K/V reused across the group
            qg = q[:, g * d_head:(g + 1) * d_head]
            s = jax.lax.dot_general(qg, k, (((1,), (1,)), ((), ())),
                                    preferred_element_type=jnp.float32)  # (tq, tkv)
            if keep is not None:
                s = jnp.where(keep, s, -1e30)          # f32-safe finite mask value
            m_prev = m_sc[g]
            m_new = jnp.maximum(m_prev, jnp.max(s, axis=-1, keepdims=True))
            alpha = jnp.exp2(m_prev - m_new)           # log2-domain online softmax
            p = jnp.exp2(s - m_new)
            if keep is not None:
                p = jnp.where(keep, p, 0.0)            # guard fully-masked rows
            l_sc[g] = alpha * l_sc[g] + jnp.sum(p, axis=-1, keepdims=True)
            acc_sc[g] = alpha * acc_sc[g] + jnp.dot(
                p.astype(v.dtype), v, preferred_element_type=jnp.float32)
            m_sc[g] = m_new

    @pl.when(jnp.logical_and(not_future, not_stale))
    def _compute():
        interior = jnp.logical_and(k_start + (tkv - 1) <= q_start,
                                   (q_start + (tq - 1)) - k_start <= window)

        @pl.when(interior)                 # fully inside the band: no mask work
        def _fast():
            online_update(None)

        @pl.when(jnp.logical_not(interior))
        def _masked():
            row = q_start + jax.lax.broadcasted_iota(jnp.int32, (tq, tkv), 0)
            col = k_start + jax.lax.broadcasted_iota(jnp.int32, (tq, tkv), 1)
            keep = (row >= col) & ((row - col) <= window)
            online_update(keep)

    @pl.when(kl == nb - 1)
    def _finalize():
        # Causal diagonal is always kept, so every query row has l >= 1.
        for g in range(group):
            inv = pl.reciprocal(l_sc[g], approx=True)
            o_ref[0, :, g * d_head:(g + 1) * d_head] = (
                acc_sc[g] * inv).astype(o_ref.dtype)


def pallas_flash_gqa(qk_rot, qkv, *, window, n_heads, n_kv_heads, d_head,
                     q_tile=256, kv_tile=256):
    B, T, _ = qk_rot.shape
    H, J = n_heads, n_kv_heads
    group = H // J
    E = H * d_head
    tq = _pick_block(T, q_tile, 16)
    tkv = _pick_block(T, kv_tile, 16)
    nq = T // tq
    nkv_total = T // tkv

    # Band width: max number of KV tiles any query tile can touch (static).
    nb = 1
    for qb in range(nq):
        q0 = qb * tq
        s_blk = max(q0 - window, 0) // tkv
        e_blk = (q0 + tq - 1) // tkv
        nb = max(nb, e_blk - s_blk + 1)

    def kv_block(qi, kl):
        s_blk = jnp.maximum(qi * tq - window, 0) // tkv
        return jnp.minimum(s_blk + kl, nkv_total - 1)   # clamp only for DMA safety

    kernel = functools.partial(flash_gqa_kernel, window=window, tq=tq, tkv=tkv,
                               group=group, d_head=d_head)
    return pl.pallas_call(
        kernel,
        out_shape=jax.ShapeDtypeStruct((B, T, E), qk_rot.dtype),
        grid_spec=pltpu.PrefetchScalarGridSpec(
            num_scalar_prefetch=0,
            # Flattened (B, n_kv_heads) leading parallel axis (even split on v7x 2 TC).
            grid=(B * J, nq, nb),
            in_specs=[
                # Q: all `group` query heads of this kv head, contiguous lane blocks.
                pl.BlockSpec((1, tq, group * d_head),
                             lambda bj, qi, kl: (bj // J, qi, bj % J)),
                # K: shared kv head, at column block H + j of the rotated q|k array.
                pl.BlockSpec((1, tkv, d_head),
                             lambda bj, qi, kl: (bj // J, kv_block(qi, kl),
                                                 H + bj % J)),
                # V: straight from the fused qkv, column block H + J + j.
                pl.BlockSpec((1, tkv, d_head),
                             lambda bj, qi, kl: (bj // J, kv_block(qi, kl),
                                                 H + J + bj % J)),
            ],
            out_specs=pl.BlockSpec((1, tq, group * d_head),
                                   lambda bj, qi, kl: (bj // J, qi, bj % J)),
            scratch_shapes=[
                pltpu.VMEM((group, tq, 1), jnp.float32),        # running max (log2)
                pltpu.VMEM((group, tq, 1), jnp.float32),        # running sum
                pltpu.VMEM((group, tq, d_head), jnp.float32),   # output accumulator
            ]),
        compiler_params=pltpu.CompilerParams(
            dimension_semantics=("parallel", "parallel", "arbitrary"),
            vmem_limit_bytes=48 * 1024 * 1024),
    )(qk_rot, qk_rot, qkv)


# ---------------------------------------------------------------------------
# full forward pass (matches PyTorch GroupedQueryAttention.forward)
# ---------------------------------------------------------------------------
def grouped_query_attention(x_bte, w_attn_t, w_out_t, freq_cis_tfc, window_size,
                            n_heads, n_kv_heads, q_tile=256, kv_tile=256):
    B, T, E = x_bte.shape
    H, J = n_heads, n_kv_heads
    D = E // H
    KV = J * D

    # --- attn_proj: tiled Pallas matmul; output stays fused as [Q | K | V] ---
    x2d = x_bte.reshape(B * T, E).astype(jnp.bfloat16)
    qkv = pallas_matmul(x2d, w_attn_t.astype(jnp.bfloat16),
                        out_dtype=jnp.bfloat16).reshape(B, T, E + 2 * KV)

    # --- single (T, D) rotary table shared by all heads; cos duplicated per pair,
    #     sign folded into sin so the kernel computes x*cos + partner*sin ---
    cos_half = freq_cis_tfc[..., 0].astype(jnp.float32)          # (T, D/2)
    sin_half = freq_cis_tfc[..., 1].astype(jnp.float32)          # (T, D/2)
    cos_d = jnp.repeat(cos_half, 2, axis=-1)                     # (T, D)
    sin_d = jnp.stack([-sin_half, sin_half], axis=-1).reshape(T, D)

    # --- RoPE over the fused Q|K blocks; log2(e)/sqrt(D) folded into Q (exp2 trick) ---
    q_scale = float(np.log2(np.e)) / float(np.sqrt(D))
    qk_rot = pallas_rope(qkv, cos_d, sin_d, n_q_heads=H, n_kv_heads=J, d_head=D,
                         q_scale=q_scale)                        # (B, T, (H+J)*D)

    # --- flash-style sliding-window causal GQA attention ---
    o = pallas_flash_gqa(qk_rot, qkv, window=window_size, n_heads=H, n_kv_heads=J,
                         d_head=D, q_tile=q_tile, kv_tile=kv_tile)  # (B, T, E) bf16

    # --- out_proj ---
    y = pallas_matmul(o.reshape(B * T, E), w_out_t.astype(jnp.bfloat16),
                      out_dtype=jnp.float32)
    return y.reshape(B, T, E)


# ---------------------------------------------------------------------------
# pure-JAX f32 reference (mirrors the PyTorch module exactly)
# ---------------------------------------------------------------------------
def reference_forward(x_bte, w_attn_t, w_out_t, freq_cis_tfc, mask_bool,
                      n_heads, n_kv_heads):
    B, T, E = x_bte.shape
    H, J = n_heads, n_kv_heads
    D = E // H
    KV = J * D
    group = E // KV

    qkv = x_bte.reshape(B * T, E) @ w_attn_t
    q = qkv[:, :E].reshape(B, T, H, D).transpose(0, 2, 1, 3)
    k = qkv[:, E:E + KV].reshape(B, T, J, D).transpose(0, 2, 1, 3)
    v = qkv[:, E + KV:].reshape(B, T, J, D).transpose(0, 2, 1, 3)

    def rope(z):
        z2 = z.reshape(*z.shape[:-1], D // 2, 2)
        c = freq_cis_tfc[..., 0]
        s = freq_cis_tfc[..., 1]
        out = jnp.stack([z2[..., 0] * c - z2[..., 1] * s,
                         z2[..., 1] * c + z2[..., 0] * s], axis=-1)
        return out.reshape(z.shape)

    q = rope(q)
    k = rope(k)
    k = jnp.repeat(k, group, axis=1)
    v = jnp.repeat(v, group, axis=1)

    s = jnp.einsum("bhqd,bhkd->bhqk", q, k) / jnp.sqrt(jnp.float32(D))
    s = jnp.where(mask_bool[None, None], s, -1e30)
    p = jax.nn.softmax(s, axis=-1)
    o = jnp.einsum("bhqk,bhkd->bhqd", p, v)
    y = o.transpose(0, 2, 1, 3).reshape(B * T, E) @ w_out_t
    return y.reshape(B, T, E)


# ---------------------------------------------------------------------------
if __name__ == "__main__":
    # Small, TPU-layout-friendly config: D = 128 (lane-dense head blocks).
    # NOTE: production calls should keep q_tile/kv_tile at the 256 defaults (v6e/v7x
    # MXU); the 64-wide tiles below just exercise the band / skip / interior paths.
    B, T = 2, 256
    d_embd, n_heads, n_kv_heads = 512, 4, 2
    d_head = d_embd // n_heads          # 128
    d_kv_embd = n_kv_heads * d_head     # 256

    key = jax.random.PRNGKey(0)
    kx, kw1, kw2 = jax.random.split(key, 3)

    x_BTE = jax.random.normal(kx, (B, T, d_embd), dtype=jnp.float32)
    # nn.Linear weights are (out, in); we pass the transposed (in, out) matrices.
    w_attn_t = 0.02 * jax.random.normal(
        kw1, (d_embd, d_embd + 2 * d_kv_embd), dtype=jnp.float32)
    w_out_t = 0.02 * jax.random.normal(kw2, (d_embd, d_embd), dtype=jnp.float32)

    # Rotary tables freq_cis_TFC with [..., 0]=cos, [..., 1]=sin.
    F = d_head // 2
    inv_freq = 1.0 / (10000.0 ** (np.arange(0, F, dtype=np.float32) * 2.0 / d_head))
    angles = np.arange(T, dtype=np.float32)[:, None] * inv_freq[None, :]   # (T, F)
    freq_cis_TFC = jnp.asarray(np.stack([np.cos(angles), np.sin(angles)], axis=-1))

    qi = np.arange(T)[:, None]
    ki = np.arange(T)[None, :]
    for window_size in (48, 160):   # 48: band-restricted grid + skips; 160: interior
        y = grouped_query_attention(x_BTE, w_attn_t, w_out_t, freq_cis_TFC,
                                    window_size, n_heads, n_kv_heads,
                                    q_tile=64, kv_tile=64)
        y = jax.block_until_ready(y)

        mask_bool = jnp.asarray((qi >= ki) & (qi - ki <= window_size))
        y_ref = reference_forward(x_BTE, w_attn_t, w_out_t, freq_cis_TFC, mask_bool,
                                  n_heads, n_kv_heads)
        np.testing.assert_allclose(np.asarray(y), np.asarray(y_ref),
                                   rtol=3e-2, atol=3e-2)

    print("KERNEL_OK")
</pallas_src>

<mosaic_0001>
module attributes {stable_mosaic.version = 11 : i64} {
  func.func @matmul_kernel(%arg0: i32, %arg1: i32, %arg2: i32, %arg3: memref<512x512xbf16, #tpu.memory_space<vmem>>, %arg4: memref<512x256xbf16, #tpu.memory_space<vmem>>, %arg5: memref<512x256xbf16, #tpu.memory_space<vmem>>, %arg6: memref<512x256xf32, #tpu.memory_space<vmem>>) attributes {dimension_semantics = [#tpu.dimension_semantics<parallel>, #tpu.dimension_semantics<parallel>, #tpu.dimension_semantics<arbitrary>], iteration_bounds = array<i64: 1, 4, 1>, scalar_prefetch = 0 : i64, scratch_operands = 1 : i64, tpu.core_type = #tpu.core_type<tc>, window_params = [{transform_indices = @transform_0, window_bounds = array<i64: 512, 512>}, {transform_indices = @transform_1, window_bounds = array<i64: 512, 256>}, {transform_indices = @transform_2, window_bounds = array<i64: 512, 256>}]} {
    %c0_i32 = arith.constant 0 : i32
    %0 = arith.cmpi eq, %arg2, %c0_i32 : i32
    %1 = arith.extui %0 : i1 to i32
    %c0_i32_0 = arith.constant 0 : i32
    %2 = arith.cmpi ne, %1, %c0_i32_0 : i32
    scf.if %2 {
      %cst_10 = arith.constant 0.000000e+00 : f32
      %12 = vector.broadcast %cst_10 : f32 to vector<512x256xf32>
      %c0_11 = arith.constant 0 : index
      %c0_12 = arith.constant 0 : index
      %13 = vector.load %arg6[%c0_11, %c0_12] : memref<512x256xf32, #tpu.memory_space<vmem>>, vector<512x256xf32>
      tpu.vector_store %arg6[%c0_11, %c0_12], %12 {strides = array<i32>} : memref<512x256xf32, #tpu.memory_space<vmem>>, vector<512x256xf32>,
    } else {
    }
    %c0 = arith.constant 0 : index
    %c0_1 = arith.constant 0 : index
    %3 = vector.load %arg6[%c0, %c0_1] : memref<512x256xf32, #tpu.memory_space<vmem>>, vector<512x256xf32>
    %c0_2 = arith.constant 0 : index
    %c0_3 = arith.constant 0 : index
    %4 = vector.load %arg3[%c0_2, %c0_3] : memref<512x512xbf16, #tpu.memory_space<vmem>>, vector<512x512xbf16>
    %c0_4 = arith.constant 0 : index
    %c0_5 = arith.constant 0 : index
    %5 = vector.load %arg4[%c0_4, %c0_5] : memref<512x256xbf16, #tpu.memory_space<vmem>>, vector<512x256xbf16>
    %cst = arith.constant dense<0.000000e+00> : vector<512x256xf32>
    %6 = tpu.matmul %4, %5, %cst {dimension_numbers = #tpu.dot_dimension_numbers<[1], [0], [0], [1], [0, 0, 1, 1], [], []>} : vector<512x512xbf16>, vector<512x256xbf16>, vector<512x256xf32> -> vector<512x256xf32>
    %7 = arith.addf %3, %6 : vector<512x256xf32>
    %c0_6 = arith.constant 0 : index
    %c0_7 = arith.constant 0 : index
    %8 = vector.load %arg6[%c0_6, %c0_7] : memref<512x256xf32, #tpu.memory_space<vmem>>, vector<512x256xf32>
    tpu.vector_store %arg6[%c0_6, %c0_7], %7 {strides = array<i32>} : memref<512x256xf32, #tpu.memory_space<vmem>>, vector<512x256xf32>,
    %c0_i32_8 = arith.constant 0 : i32
    %9 = arith.cmpi eq, %arg2, %c0_i32_8 : i32
    %10 = arith.extui %9 : i1 to i32
    %c0_i32_9 = arith.constant 0 : i32
    %11 = arith.cmpi ne, %10, %c0_i32_9 : i32
    scf.if %11 {
      %c0_10 = arith.constant 0 : index
      %c0_11 = arith.constant 0 : index
      %12 = vector.load %arg6[%c0_10, %c0_11] : memref<512x256xf32, #tpu.memory_space<vmem>>, vector<512x256xf32>
      %13 = arith.truncf %12 : vector<512x256xf32> to vector<512x256xbf16>
      %c0_12 = arith.constant 0 : index
      %c0_13 = arith.constant 0 : index
      %14 = vector.load %arg5[%c0_12, %c0_13] : memref<512x256xbf16, #tpu.memory_space<vmem>>, vector<512x256xbf16>
      tpu.vector_store %arg5[%c0_12, %c0_13], %13 {strides = array<i32>} : memref<512x256xbf16, #tpu.memory_space<vmem>>, vector<512x256xbf16>,
    } else {
    }
    return
  }
  func.func @transform_0(%arg0: i32, %arg1: i32, %arg2: i32) -> (i32, i32) {
    %c0_i32 = arith.constant 0 : i32
    return %arg0, %arg2 : i32, i32
  }
  func.func @transform_1(%arg0: i32, %arg1: i32, %arg2: i32) -> (i32, i32) {
    %c0_i32 = arith.constant 0 : i32
    return %arg2, %arg1 : i32, i32
  }
  func.func @transform_2(%arg0: i32, %arg1: i32, %arg2: i32) -> (i32, i32) {
    %c0_i32 = arith.constant 0 : i32
    return %arg0, %arg1 : i32, i32
  }
}

</mosaic_0001>

<llo_original>
// kernel: tpu_custom_call.1
$region0: #{tpu_custom_call.1}
  #allocation0 [shape = 'u32[]', space=smem, size = 0x4, offset = 0x4, fixed_abs, tag = 'smem constant byte address 0x4 - core index']
  #allocation1 [shape = 'u32[72,128]{1,0:T(1,128)}', space=vmem, size = 0x9000, scoped, tag = 'internal scratch']
  #allocation2 [shape = 'f32[512,256]{1,0:T(8,128)}', space=vmem, size = 0x80000, scoped, tag = 'scratch operand']
  %s0 = inlined_call_operand.hbm [shape: bf16[512,512], index: 0, kind: input, shape index: {}]
  %s1 = inlined_call_operand.hbm [shape: bf16[512,1024], index: 1, kind: input, shape index: {}]
  %s2 = inlined_call_operand.hbm [shape: bf16[512,1024], index: 2, kind: output, shape index: {}]
  %s3 = sld [smem:[#allocation0]]
  $region57: #{tpu_custom_call.1} parent=0
    _
  %s5 = ssub.s32 1, %s3
  %s6 = scalar_select 0, %s5, %s3
  $region1: #{tpu_custom_call.1} parent=0
    #allocation3 [shape = 'u8[524288]{0}', space=vmem, size = 0x80000, scoped, tag = 'input window, operand 0, single buffered']
    #allocation4 [shape = 's32[2]{0}', space=sflag, size = 0x8, scoped, tag = 'scoped memory for tpu_custom_call.1']
    #allocation5 [shape = 's32[2]{0}', space=sflag, size = 0x8, scoped, tag = 'scoped memory for tpu_custom_call.1']
    #allocation6 [shape = 'u8[524288]{0}', space=vmem, size = 0x80000, scoped, tag = 'input window, operand 1']
    #allocation7 [shape = 's32[2]{0}', space=sflag, size = 0x8, scoped, tag = 'scoped memory for tpu_custom_call.1']
    #allocation8 [shape = 'u8[524288]{0}', space=vmem, size = 0x80000, scoped, tag = 'output window, operand 0']
    %7 = vsyncpa [#allocation4], 0
    %8 = vsyncpa [#allocation7], 0
    %s9 = scalar_lea.sflag [#allocation7], 1
    %10 = vsyncpa %s9, 0
    %11 = vsyncpa [#allocation5], 0
    %s12 = scalar_lea.sflag [#allocation5], 1
    %13 = vsyncpa %s12, 0
    loop: start=0, step=1, limit=6
    $region2: #{tpu_custom_call.1} parent=1 // loop_pre_header
      _
    $region3: #{tpu_custom_call.1} parent=1 // loop_header
      %s15 = sphi 0, %s19
      %p16 = scmp.ge.s32.totalorder %s15, 6
      %s22 = sphi 0, %s41
      %s23 = sphi 0, %s37
      %s24 = sphi 0, %s33
      %s25 = sphi 0, %s22
      %s26 = sphi 0, %s23
      %s27 = sphi 0, %s24
      %s28 = sphi 0, %s25
      %s29 = sphi 0, %s26
      %s30 = sphi 0, %s27
      %s46 = sphi 0, %s48
      %s49 = sphi 0, %s46
      %s50 = sphi 0, %s49
      %s66 = sphi 0, %s50
      %s74 = sphi 0, %s76
      %s77 = sphi 0, %s74
      %s78 = sphi 0, %s77
      %s94 = sphi 0, %s78
      %s102 = sphi 0, %s104
      %s105 = sphi 0, %s102
      %s106 = sphi 0, %s105
      %s122 = sphi 0, %s106
    $region4: #{tpu_custom_call.1} parent=1 // loop_header_branch
      %18 = sbr.rel (%p16) target = $region8
    $region5: #{tpu_custom_call.1} parent=1 // loop_body
      %s20 = ssub.s32 %s15, 1
      %s21 = ssub.s32 %s15, 2
      %s31 = sadd.s32 1, %s24
      %p32 = scmp.ge.s32.totalorder %s31, 1
      %s33 = scalar_select %p32, 0, %s31
      %s34 = sadd.s32 1, %s23
      %s35 = scalar_select %p32, %s34, %s23
      %p36 = scmp.ge.s32.totalorder %s35, 4
      %s37 = scalar_select %p36, 0, %s35
      %s38 = sadd.s32 1, %s22
      %s39 = scalar_select %p36, %s38, %s22
      %p40 = scmp.ge.s32.totalorder %s39, 1
      %s41 = scalar_select %p40, 0, %s39
      %s42 = ssub.s32 %s22, %s41
      %s43 = ssub.s32 %s24, %s33
      %s44 = sor.u32 %s42, %s43
      %p45 = scmp.eq.s32.totalorder %s44, 0
      %s47 = sadd.s32 %s46, 1
      %s48 = scalar_select %p45, %s46, %s47
      %p51 = pneg %p45
      %p52 = scmp.eq.s32.totalorder %s15, 3
      %p53 = por %p51, %p52
      %p54 = scmp.ne.s32.totalorder %s46, %s49
      %p55 = scmp.eq.s32.totalorder %s15, 0
      %p56 = por %p54, %p55
      %p57 = scmp.ne.s32.totalorder %s46, %s49
      %p58 = scmp.eq.s32.totalorder %s20, 3
      %p59 = por %p57, %p58
      %p60 = scmp.ne.s32.totalorder %s49, %s50
      %p61 = scmp.eq.s32.totalorder %s20, 0
      %p62 = por %p60, %p61
      %p63 = scmp.ne.s32.totalorder %s49, %s50
      %p64 = scmp.eq.s32.totalorder %s21, 3
      %p65 = por %p63, %p64
      %p67 = scmp.ne.s32.totalorder %s50, %s66
      %p68 = scmp.eq.s32.totalorder %s21, 0
      %p69 = por %p67, %p68
      %s70 = ssub.s32 %s24, %s33
      %s71 = ssub.s32 %s23, %s37
      %s72 = sor.u32 %s70, %s71
      %p73 = scmp.eq.s32.totalorder %s72, 0
      %s75 = sadd.s32 %s74, 1
      %s76 = scalar_select %p73, %s74, %s75
      %p79 = pneg %p73
      %p80 = scmp.eq.s32.totalorder %s15, 3
      %p81 = por %p79, %p80
      %p82 = scmp.ne.s32.totalorder %s74, %s77
      %p83 = scmp.eq.s32.totalorder %s15, 0
      %p84 = por %p82, %p83
      %p85 = scmp.ne.s32.totalorder %s74, %s77
      %p86 = scmp.eq.s32.totalorder %s20, 3
      %p87 = por %p85, %p86
      %p88 = scmp.ne.s32.totalorder %s77, %s78
      %p89 = scmp.eq.s32.totalorder %s20, 0
      %p90 = por %p88, %p89
      %p91 = scmp.ne.s32.totalorder %s77, %s78
      %p92 = scmp.eq.s32.totalorder %s21, 3
      %p93 = por %p91, %p92
      %p95 = scmp.ne.s32.totalorder %s78, %s94
      %p96 = scmp.eq.s32.totalorder %s21, 0
      %p97 = por %p95, %p96
      %s98 = ssub.s32 %s22, %s41
      %s99 = ssub.s32 %s23, %s37
      %s100 = sor.u32 %s98, %s99
      %p101 = scmp.eq.s32.totalorder %s100, 0
      %s103 = sadd.s32 %s102, 1
      %s104 = scalar_select %p101, %s102, %s103
      %p107 = pneg %p101
      %p108 = scmp.eq.s32.totalorder %s15, 3
      %p109 = por %p107, %p108
      %p110 = scmp.ne.s32.totalorder %s102, %s105
      %p111 = scmp.eq.s32.totalorder %s15, 0
      %p112 = por %p110, %p111
      %p113 = scmp.ne.s32.totalorder %s102, %s105
      %p114 = scmp.eq.s32.totalorder %s20, 3
      %p115 = por %p113, %p114
      %p116 = scmp.ne.s32.totalorder %s105, %s106
      %p117 = scmp.eq.s32.totalorder %s20, 0
      %p118 = por %p116, %p117
      %p119 = scmp.ne.s32.totalorder %s105, %s106
      %p120 = scmp.eq.s32.totalorder %s21, 3
      %p121 = por %p119, %p120
      %p123 = scmp.ne.s32.totalorder %s106, %s122
      %p124 = scmp.eq.s32.totalorder %s21, 0
      %p125 = por %p123, %p124
      %p126 = scmp.le.s32.totalorder 1, %s15
      %p127 = scmp.lt.s32.totalorder %s15, 5
      %p128 = pnand %p126, %p127
      %p129 = pneg %p128
      // Predicated region
      $region9: #{tpu_custom_call.1} parent=5 // pred_check
        _
      $region10: #{tpu_custom_call.1} parent=5 // pred_check_branch
        %131 = sbr.rel (%p128) target = $region12
      $region11: #{tpu_custom_call.1} parent=5 // pred_region
        %s132 = ssub.s32 %s15, 1
        // Predicated region
        $region13: #{tpu_custom_call.1} parent=11 // pred_check
          %p133 = pneg %p62
        $region14: #{tpu_custom_call.1} parent=11 // pred_check_branch
          %135 = sbr.rel (%p133) target = $region16
        $region15: #{tpu_custom_call.1} parent=11 // pred_region
          %s136 = smul.u32 64, %s25
          %s137 = smul.u32 4, %s27
          %139 = vsyncadd [#allocation4], 0
          %s140 = smul.addr %s136, 4
          %s141 = sadd.s32 %s137, %s140
          %s142 = smul.addr %s141, 4
          %s143 = scalar_lea.hbm %s0, %s142
          %s144 = sshll.u32 %s143, 4
          %s145 = int_to_ptr.hbm [resolvable:$true] %s144
          %s146 = sshll.u32 [#allocation3], 4
          %s147 = int_to_ptr.vmem [resolvable:$true] %s146
          %152 = dma.hbm_to_vmem [thread:$0]  %s145, 16384, %s147, [#allocation4], 256, 256, 16
        $region16: #{tpu_custom_call.1} parent=11 // pred_fallthru
          _
      $region12: #{tpu_custom_call.1} parent=5 // pred_fallthru
        _
      %p153 = scmp.lt.s32.totalorder %s15, 4
      // Predicated region
      $region17: #{tpu_custom_call.1} parent=5 // pred_check
        %p154 = pneg %p153
      $region18: #{tpu_custom_call.1} parent=5 // pred_check_branch
        %156 = sbr.rel (%p154) target = $region20
      $region19: #{tpu_custom_call.1} parent=5 // pred_region
        // Predicated region
        $region21: #{tpu_custom_call.1} parent=19 // pred_check
          %p157 = pneg %p84
        $region22: #{tpu_custom_call.1} parent=19 // pred_check_branch
          %159 = sbr.rel (%p157) target = $region24
        $region23: #{tpu_custom_call.1} parent=19 // pred_region
          %s160 = sand.u32 %s74, 1
          %s161 = scalar_lea.sflag [#allocation7], %s160
          %s162 = sand.u32 %s74, 1
          %s163 = smul.addr %s162, 512
          %s164 = scalar_lea.vmem [#allocation6], %s163
          %s165 = smul.u32 64, %s24
          %s166 = smul.u32 2, %s23
          %168 = vsyncadd %s161, 0
          %s169 = smul.addr %s165, 8
          %s170 = sadd.s32 %s166, %s169
          %s171 = smul.addr %s170, 4
          %s172 = scalar_lea.hbm %s1, %s171
          %s173 = sshll.u32 %s172, 4
          %s174 = int_to_ptr.hbm [resolvable:$true] %s173
          %s175 = sshll.u32 %s164, 4
          %s176 = int_to_ptr.vmem [resolvable:$true] %s175
          %181 = dma.hbm_to_vmem [thread:$0]  %s174, 8192, %s176, %s161, 512, 128, 8
        $region24: #{tpu_custom_call.1} parent=19 // pred_fallthru
          _
      $region20: #{tpu_custom_call.1} parent=5 // pred_fallthru
        _
      %p182 = scmp.le.s32.totalorder 1, %s15
      %p183 = scmp.lt.s32.totalorder %s15, 5
      %p184 = pnand %p182, %p183
      %p185 = pneg %p184
      // Predicated region
      $region25: #{tpu_custom_call.1} parent=5 // pred_check
        _
      $region26: #{tpu_custom_call.1} parent=5 // pred_check_branch
        %187 = sbr.rel (%p184) target = $region28
      $region27: #{tpu_custom_call.1} parent=5 // pred_region
        %s188 = ssub.s32 %s15, 1
        // Predicated region
        $region29: #{tpu_custom_call.1} parent=27 // pred_check
          %p189 = pneg %p62
        $region30: #{tpu_custom_call.1} parent=27 // pred_check_branch
          %191 = sbr.rel (%p189) target = $region32
        $region31: #{tpu_custom_call.1} parent=27 // pred_region
          %193 = dma.done [#allocation4], 16384
        $region32: #{tpu_custom_call.1} parent=27 // pred_fallthru
          _
        %s194 = sand.u32 %s77, 1
        %s195 = scalar_lea.sflag [#allocation7], %s194
        %s196 = sand.u32 %s77, 1
        %s197 = smul.addr %s196, 512
        %s198 = scalar_lea.vmem [#allocation6], %s197
        // Predicated region
        $region33: #{tpu_custom_call.1} parent=27 // pred_check
          %p199 = pneg %p90
        $region34: #{tpu_custom_call.1} parent=27 // pred_check_branch
          %201 = sbr.rel (%p199) target = $region36
        $region35: #{tpu_custom_call.1} parent=27 // pred_region
          %203 = dma.done %s195, 8192
        $region36: #{tpu_custom_call.1} parent=27 // pred_fallthru
          _
        %p204 = pneg %p62
        %p205 = pneg %p59
        %s206 = sand.u32 %s77, 1
        %s207 = scalar_lea.sflag [#allocation7], %s206
        %s208 = sand.u32 %s77, 1
        %s209 = smul.addr %s208, 512
        %s210 = scalar_lea.vmem [#allocation6], %s209
        %p211 = pneg %p90
        %p212 = pneg %p87
        %p213 = pneg %p118
        %p214 = pneg %p115
        %s215 = sand.u32 %s105, 1
        %s216 = scalar_lea.sflag [#allocation5], %s215
        %s217 = sand.u32 %s105, 1
        %s218 = smul.addr %s217, 512
        %s219 = scalar_lea.vmem [#allocation8], %s218
        %s220 = smul.u32 64, %s25
        %s221 = smul.u32 4, %s27
        %s222 = smul.u32 64, %s27
        %s223 = smul.u32 2, %s26
        %s224 = smul.u32 64, %s25
        %s225 = smul.u32 2, %s26
        %p226 = scmp.eq.s32.totalorder %s27, 0
        // Predicated region
        $region37: #{tpu_custom_call.1} parent=27 // pred_check
          %p227 = pneg %p226
        $region38: #{tpu_custom_call.1} parent=27 // pred_check_branch
          %229 = sbr.rel (%p227) target = $region40
        $region39: #{tpu_custom_call.1} parent=27 // pred_region
          %230 = vst [vmem:[#allocation2] sm:$0xff] 0.0
          %231 = vst [vmem:[#allocation2 + $0x8] sm:$0xff] 0.0
          %232 = vst [vmem:[#allocation2 + $0x10] sm:$0xff] 0.0
          %233 = vst [vmem:[#allocation2 + $0x18] sm:$0xff] 0.0
          %234 = vst [vmem:[#allocation2 + $0x20] sm:$0xff] 0.0
          %235 = vst [vmem:[#allocation2 + $0x28] sm:$0xff] 0.0
          %236 = vst [vmem:[#allocation2 + $0x30] sm:$0xff] 0.0
          %237 = vst [vmem:[#allocation2 + $0x38] sm:$0xff] 0.0
          %238 = vst [vmem:[#allocation2 + $0x40] sm:$0xff] 0.0
          %239 = vst [vmem:[#allocation2 + $0x48] sm:$0xff] 0.0
          %240 = vst [vmem:[#allocation2 + $0x50] sm:$0xff] 0.0
          %241 = vst [vmem:[#allocation2 + $0x58] sm:$0xff] 0.0
          %242 = vst [vmem:[#allocation2 + $0x60] sm:$0xff] 0.0
          %243 = vst [vmem:[#allocation2 + $0x68] sm:$0xff] 0.0
          %244 = vst [vmem:[#allocation2 + $0x70] sm:$0xff] 0.0
          %245 = vst [vmem:[#allocation2 + $0x78] sm:$0xff] 0.0
          %246 = vst [vmem:[#allocation2 + $0x80] sm:$0xff] 0.0
          %247 = vst [vmem:[#allocation2 + $0x88] sm:$0xff] 0.0
          %248 = vst [vmem:[#allocation2 + $0x90] sm:$0xff] 0.0
          %249 = vst [vmem:[#allocation2 + $0x98] sm:$0xff] 0.0
          %250 = vst [vmem:[#allocation2 + $0xa0] sm:$0xff] 0.0
          %251 = vst [vmem:[#allocation2 + $0xa8] sm:$0xff] 0.0
          %252 = vst [vmem:[#allocation2 + $0xb0] sm:$0xff] 0.0
          %253 = vst [vmem:[#allocation2 + $0xb8] sm:$0xff] 0.0
          %254 = vst [vmem:[#allocation2 + $0xc0] sm:$0xff] 0.0
          %255 = vst [vmem:[#allocation2 + $0xc8] sm:$0xff] 0.0
          %256 = vst [vmem:[#allocation2 + $0xd0] sm:$0xff] 0.0
          %257 = vst [vmem:[#allocation2 + $0xd8] sm:$0xff] 0.0
          %258 = vst [vmem:[#allocation2 + $0xe0] sm:$0xff] 0.0
          %259 = vst [vmem:[#allocation2 + $0xe8] sm:$0xff] 0.0
          %260 = vst [vmem:[#allocation2 + $0xf0] sm:$0xff] 0.0
          %261 = vst [vmem:[#allocation2 + $0xf8] sm:$0xff] 0.0
          %262 = vst [vmem:[#allocation2 + $0x100] sm:$0xff] 0.0
          %263 = vst [vmem:[#allocation2 + $0x108] sm:$0xff] 0.0
          %264 = vst [vmem:[#allocation2 + $0x110] sm:$0xff] 0.0
          %265 = vst [vmem:[#allocation2 + $0x118] sm:$0xff] 0.0
          %266 = vst [vmem:[#allocation2 + $0x120] sm:$0xff] 0.0
          %267 = vst [vmem:[#allocation2 + $0x128] sm:$0xff] 0.0
          %268 = vst [vmem:[#allocation2 + $0x130] sm:$0xff] 0.0
          %269 = vst [vmem:[#allocation2 + $0x138] sm:$0xff] 0.0
          %270 = vst [vmem:[#allocation2 + $0x140] sm:$0xff] 0.0
          %271 = vst [vmem:[#allocation2 + $0x148] sm:$0xff] 0.0
          %272 = vst [vmem:[#allocation2 + $0x150] sm:$0xff] 0.0
          %273 = vst [vmem:[#allocation2 + $0x158] sm:$0xff] 0.0
          %274 = vst [vmem:[#allocation2 + $0x160] sm:$0xff] 0.0
          %275 = vst [vmem:[#allocation2 + $0x168] sm:$0xff] 0.0
          %276 = vst [vmem:[#allocation2 + $0x170] sm:$0xff] 0.0
          %277 = vst [vmem:[#allocation2 + $0x178] sm:$0xff] 0.0
          %278 = vst [vmem:[#allocation2 + $0x180] sm:$0xff] 0.0
          %279 = vst [vmem:[#allocation2 + $0x188] sm:$0xff] 0.0
          %280 = vst [vmem:[#allocation2 + $0x190] sm:$0xff] 0.0
          %281 = vst [vmem:[#allocation2 + $0x198] sm:$0xff] 0.0
          %282 = vst [vmem:[#allocation2 + $0x1a0] sm:$0xff] 0.0
          %283 = vst [vmem:[#allocation2 + $0x1a8] sm:$0xff] 0.0
          %284 = vst [vmem:[#allocation2 + $0x1b0] sm:$0xff] 0.0
          %285 = vst [vmem:[#allocation2 + $0x1b8] sm:$0xff] 0.0
          %286 = vst [vmem:[#allocation2 + $0x1c0] sm:$0xff] 0.0
          %287 = vst [vmem:[#allocation2 + $0x1c8] sm:$0xff] 0.0
          %288 = vst [vmem:[#allocation2 + $0x1d0] sm:$0xff] 0.0
          %289 = vst [vmem:[#allocation2 + $0x1d8] sm:$0xff] 0.0
          %290 = vst [vmem:[#allocation2 + $0x1e0] sm:$0xff] 0.0
          %291 = vst [vmem:[#allocation2 + $0x1e8] sm:$0xff] 0.0
          %292 = vst [vmem:[#allocation2 + $0x1f0] sm:$0xff] 0.0
          %293 = vst [vmem:[#allocation2 + $0x1f8] sm:$0xff] 0.0
          %294 = vst [vmem:[#allocation2 + $0x200] sm:$0xff] 0.0
          %295 = vst [vmem:[#allocation2 + $0x208] sm:$0xff] 0.0
          %296 = vst [vmem:[#allocation2 + $0x210] sm:$0xff] 0.0
          %297 = vst [vmem:[#allocation2 + $0x218] sm:$0xff] 0.0
          %298 = vst [vmem:[#allocation2 + $0x220] sm:$0xff] 0.0
          %299 = vst [vmem:[#allocation2 + $0x228] sm:$0xff] 0.0
          %300 = vst [vmem:[#allocation2 + $0x230] sm:$0xff] 0.0
          %301 = vst [vmem:[#allocation2 + $0x238] sm:$0xff] 0.0
          %302 = vst [vmem:[#allocation2 + $0x240] sm:$0xff] 0.0
          %303 = vst [vmem:[#allocation2 + $0x248] sm:$0xff] 0.0
          %304 = vst [vmem:[#allocation2 + $0x250] sm:$0xff] 0.0
          %305 = vst [vmem:[#allocation2 + $0x258] sm:$0xff] 0.0
          %306 = vst [vmem:[#allocation2 + $0x260] sm:$0xff] 0.0
          %307 = vst [vmem:[#allocation2 + $0x268] sm:$0xff] 0.0
          %308 = vst [vmem:[#allocation2 + $0x270] sm:$0xff] 0.0
          %309 = vst [vmem:[#allocation2 + $0x278] sm:$0xff] 0.0
          %310 = vst [vmem:[#allocation2 + $0x280] sm:$0xff] 0.0
          %311 = vst [vmem:[#allocation2 + $0x288] sm:$0xff] 0.0
          %312 = vst [vmem:[#allocation2 + $0x290] sm:$0xff] 0.0
          %313 = vst [vmem:[#allocation2 + $0x298] sm:$0xff] 0.0
          %314 = vst [vmem:[#allocation2 + $0x2a0] sm:$0xff] 0.0
          %315 = vst [vmem:[#allocation2 + $0x2a8] sm:$0xff] 0.0
          %316 = vst [vmem:[#allocation2 + $0x2b0] sm:$0xff] 0.0
          %317 = vst [vmem:[#allocation2 + $0x2b8] sm:$0xff] 0.0
          %318 = vst [vmem:[#allocation2 + $0x2c0] sm:$0xff] 0.0
          %319 = vst [vmem:[#allocation2 + $0x2c8] sm:$0xff] 0.0
          %320 = vst [vmem:[#allocation2 + $0x2d0] sm:$0xff] 0.0
          %321 = vst [vmem:[#allocation2 + $0x2d8] sm:$0xff] 0.0
          %322 = vst [vmem:[#allocation2 + $0x2e0] sm:$0xff] 0.0
          %323 = vst [vmem:[#allocation2 + $0x2e8] sm:$0xff] 0.0
          %324 = vst [vmem:[#allocation2 + $0x2f0] sm:$0xff] 0.0
          %325 = vst [vmem:[#allocation2 + $0x2f8] sm:$0xff] 0.0
          %326 = vst [vmem:[#allocation2 + $0x300] sm:$0xff] 0.0
          %327 = vst [vmem:[#allocation2 + $0x308] sm:$0xff] 0.0
          %328 = vst [vmem:[#allocation2 + $0x310] sm:$0xff] 0.0
          %329 = vst [vmem:[#allocation2 + $0x318] sm:$0xff] 0.0
          %330 = vst [vmem:[#allocation2 + $0x320] sm:$0xff] 0.0
          %331 = vst [vmem:[#allocation2 + $0x328] sm:$0xff] 0.0
          %332 = vst [vmem:[#allocation2 + $0x330] sm:$0xff] 0.0
          %333 = vst [vmem:[#allocation2 + $0x338] sm:$0xff] 0.0
          %334 = vst [vmem:[#allocation2 + $0x340] sm:$0xff] 0.0
          %335 = vst [vmem:[#allocation2 + $0x348] sm:$0xff] 0.0
          %336 = vst [vmem:[#allocation2 + $0x350] sm:$0xff] 0.0
          %337 = vst [vmem:[#allocation2 + $0x358] sm:$0xff] 0.0
          %338 = vst [vmem:[#allocation2 + $0x360] sm:$0xff] 0.0
          %339 = vst [vmem:[#allocation2 + $0x368] sm:$0xff] 0.0
          %340 = vst [vmem:[#allocation2 + $0x370] sm:$0xff] 0.0
          %341 = vst [vmem:[#allocation2 + $0x378] sm:$0xff] 0.0
          %342 = vst [vmem:[#allocation2 + $0x380] sm:$0xff] 0.0
          %343 = vst [vmem:[#allocation2 + $0x388] sm:$0xff] 0.0
          %344 = vst [vmem:[#allocation2 + $0x390] sm:$0xff] 0.0
          %345 = vst [vmem:[#allocation2 + $0x398] sm:$0xff] 0.0
          %346 = vst [vmem:[#allocation2 + $0x3a0] sm:$0xff] 0.0
          %347 = vst [vmem:[#allocation2 + $0x3a8] sm:$0xff] 0.0
          %348 = vst [vmem:[#allocation2 + $0x3b0] sm:$0xff] 0.0
          %349 = vst [vmem:[#allocation2 + $0x3b8] sm:$0xff] 0.0
          %350 = vst [vmem:[#allocation2 + $0x3c0] sm:$0xff] 0.0
          %351 = vst [vmem:[#allocation2 + $0x3c8] sm:$0xff] 0.0
          %352 = vst [vmem:[#allocation2 + $0x3d0] sm:$0xff] 0.0
          %353 = vst [vmem:[#allocation2 + $0x3d8] sm:$0xff] 0.0
          %354 = vst [vmem:[#allocation2 + $0x3e0] sm:$0xff] 0.0
          %355 = vst [vmem:[#allocation2 + $0x3e8] sm:$0xff] 0.0
          %356 = vst [vmem:[#allocation2 + $0x3f0] sm:$0xff] 0.0
          %357 = vst [vmem:[#allocation2 + $0x3f8] sm:$0xff] 0.0
        $region40: #{tpu_custom_call.1} parent=27 // pred_fallthru
          _
        %v358 = vld [vmem:[#allocation2] sm:$0xff]
        %v359 = vld [vmem:[#allocation2 + $0x8] sm:$0xff]
        %v360 = vld [vmem:[#allocation2 + $0x10] sm:$0xff]
        %v361 = vld [vmem:[#allocation2 + $0x18] sm:$0xff]
        %v362 = vld [vmem:[#allocation2 + $0x20] sm:$0xff]
        %v363 = vld [vmem:[#allocation2 + $0x28] sm:$0xff]
        %v364 = vld [vmem:[#allocation2 + $0x30] sm:$0xff]
        %v365 = vld [vmem:[#allocation2 + $0x38] sm:$0xff]
        %v366 = vld [vmem:[#allocation2 + $0x40] sm:$0xff]
        %v367 = vld [vmem:[#allocation2 + $0x48] sm:$0xff]
        %v368 = vld [vmem:[#allocation2 + $0x50] sm:$0xff]
        %v369 = vld [vmem:[#allocation2 + $0x58] sm:$0xff]
        %v370 = vld [vmem:[#allocation2 + $0x60] sm:$0xff]
        %v371 = vld [vmem:[#allocation2 + $0x68] sm:$0xff]
        %v372 = vld [vmem:[#allocation2 + $0x70] sm:$0xff]
        %v373 = vld [vmem:[#allocation2 + $0x78] sm:$0xff]
        %v374 = vld [vmem:[#allocation2 + $0x80] sm:$0xff]
        %v375 = vld [vmem:[#allocation2 + $0x88] sm:$0xff]
        %v376 = vld [vmem:[#allocation2 + $0x90] sm:$0xff]
        %v377 = vld [vmem:[#allocation2 + $0x98] sm:$0xff]
        %v378 = vld [vmem:[#allocation2 + $0xa0] sm:$0xff]
        %v379 = vld [vmem:[#allocation2 + $0xa8] sm:$0xff]
        %v380 = vld [vmem:[#allocation2 + $0xb0] sm:$0xff]
        %v381 = vld [vmem:[#allocation2 + $0xb8] sm:$0xff]
        %v382 = vld [vmem:[#allocation2 + $0xc0] sm:$0xff]
        %v383 = vld [vmem:[#allocation2 + $0xc8] sm:$0xff]
        %v384 = vld [vmem:[#allocation2 + $0xd0] sm:$0xff]
        %v385 = vld [vmem:[#allocation2 + $0xd8] sm:$0xff]
        %v386 = vld [vmem:[#allocation2 + $0xe0] sm:$0xff]
        %v387 = vld [vmem:[#allocation2 + $0xe8] sm:$0xff]
        %v388 = vld [vmem:[#allocation2 + $0xf0] sm:$0xff]
        %v389 = vld [vmem:[#allocation2 + $0xf8] sm:$0xff]
        %v390 = vld [vmem:[#allocation2 + $0x100] sm:$0xff]
        %v391 = vld [vmem:[#allocation2 + $0x108] sm:$0xff]
        %v392 = vld [vmem:[#allocation2 + $0x110] sm:$0xff]
        %v393 = vld [vmem:[#allocation2 + $0x118] sm:$0xff]
        %v394 = vld [vmem:[#allocation2 + $0x120] sm:$0xff]
        %v395 = vld [vmem:[#allocation2 + $0x128] sm:$0xff]
        %v396 = vld [vmem:[#allocation2 + $0x130] sm:$0xff]
        %v397 = vld [vmem:[#allocation2 + $0x138] sm:$0xff]
        %v398 = vld [vmem:[#allocation2 + $0x140] sm:$0xff]
        %v399 = vld [vmem:[#allocation2 + $0x148] sm:$0xff]
        %v400 = vld [vmem:[#allocation2 + $0x150] sm:$0xff]
        %v401 = vld [vmem:[#allocation2 + $0x158] sm:$0xff]
        %v402 = vld [vmem:[#allocation2 + $0x160] sm:$0xff]
        %v403 = vld [vmem:[#allocation2 + $0x168] sm:$0xff]
        %v404 = vld [vmem:[#allocation2 + $0x170] sm:$0xff]
        %v405 = vld [vmem:[#allocation2 + $0x178] sm:$0xff]
        %v406 = vld [vmem:[#allocation2 + $0x180] sm:$0xff]
        %v407 = vld [vmem:[#allocation2 + $0x188] sm:$0xff]
        %v408 = vld [vmem:[#allocation2 + $0x190] sm:$0xff]
        %v409 = vld [vmem:[#allocation2 + $0x198] sm:$0xff]
        %v410 = vld [vmem:[#allocation2 + $0x1a0] sm:$0xff]
        %v411 = vld [vmem:[#allocation2 + $0x1a8] sm:$0xff]
        %v412 = vld [vmem:[#allocation2 + $0x1b0] sm:$0xff]
        %v413 = vld [vmem:[#allocation2 + $0x1b8] sm:$0xff]
        %v414 = vld [vmem:[#allocation2 + $0x1c0] sm:$0xff]
        %v415 = vld [vmem:[#allocation2 + $0x1c8] sm:$0xff]
        %v416 = vld [vmem:[#allocation2 + $0x1d0] sm:$0xff]
        %v417 = vld [vmem:[#allocation2 + $0x1d8] sm:$0xff]
        %v418 = vld [vmem:[#allocation2 + $0x1e0] sm:$0xff]
        %v419 = vld [vmem:[#allocation2 + $0x1e8] sm:$0xff]
        %v420 = vld [vmem:[#allocation2 + $0x1f0] sm:$0xff]
        %v421 = vld [vmem:[#allocation2 + $0x1f8] sm:$0xff]
        %v422 = vld [vmem:[#allocation2 + $0x200] sm:$0xff]
        %v423 = vld [vmem:[#allocation2 + $0x208] sm:$0xff]
        %v424 = vld [vmem:[#allocation2 + $0x210] sm:$0xff]
        %v425 = vld [vmem:[#allocation2 + $0x218] sm:$0xff]
        %v426 = vld [vmem:[#allocation2 + $0x220] sm:$0xff]
        %v427 = vld [vmem:[#allocation2 + $0x228] sm:$0xff]
        %v428 = vld [vmem:[#allocation2 + $0x230] sm:$0xff]
        %v429 = vld [vmem:[#allocation2 + $0x238] sm:$0xff]
        %v430 = vld [vmem:[#allocation2 + $0x240] sm:$0xff]
        %v431 = vld [vmem:[#allocation2 + $0x248] sm:$0xff]
        %v432 = vld [vmem:[#allocation2 + $0x250] sm:$0xff]
        %v433 = vld [vmem:[#allocation2 + $0x258] sm:$0xff]
        %v434 = vld [vmem:[#allocation2 + $0x260] sm:$0xff]
        %v435 = vld [vmem:[#allocation2 + $0x268] sm:$0xff]
        %v436 = vld [vmem:[#allocation2 + $0x270] sm:$0xff]
        %v437 = vld [vmem:[#allocation2 + $0x278] sm:$0xff]
        %v438 = vld [vmem:[#allocation2 + $0x280] sm:$0xff]
        %v439 = vld [vmem:[#allocation2 + $0x288] sm:$0xff]
        %v440 = vld [vmem:[#allocation2 + $0x290] sm:$0xff]
        %v441 = vld [vmem:[#allocation2 + $0x298] sm:$0xff]
        %v442 = vld [vmem:[#allocation2 + $0x2a0] sm:$0xff]
        %v443 = vld [vmem:[#allocation2 + $0x2a8] sm:$0xff]
        %v444 = vld [vmem:[#allocation2 + $0x2b0] sm:$0xff]
        %v445 = vld [vmem:[#allocation2 + $0x2b8] sm:$0xff]
        %v446 = vld [vmem:[#allocation2 + $0x2c0] sm:$0xff]
        %v447 = vld [vmem:[#allocation2 + $0x2c8] sm:$0xff]
        %v448 = vld [vmem:[#allocation2 + $0x2d0] sm:$0xff]
        %v449 = vld [vmem:[#allocation2 + $0x2d8] sm:$0xff]
        %v450 = vld [vmem:[#allocation2 + $0x2e0] sm:$0xff]
        %v451 = vld [vmem:[#allocation2 + $0x2e8] sm:$0xff]
        %v452 = vld [vmem:[#allocation2 + $0x2f0] sm:$0xff]
        %v453 = vld [vmem:[#allocation2 + $0x2f8] sm:$0xff]
        %v454 = vld [vmem:[#allocation2 + $0x300] sm:$0xff]
        %v455 = vld [vmem:[#allocation2 + $0x308] sm:$0xff]
        %v456 = vld [vmem:[#allocation2 + $0x310] sm:$0xff]
        %v457 = vld [vmem:[#allocation2 + $0x318] sm:$0xff]
        %v458 = vld [vmem:[#allocation2 + $0x320] sm:$0xff]
        %v459 = vld [vmem:[#allocation2 + $0x328] sm:$0xff]
        %v460 = vld [vmem:[#allocation2 + $0x330] sm:$0xff]
        %v461 = vld [vmem:[#allocation2 + $0x338] sm:$0xff]
        %v462 = vld [vmem:[#allocation2 + $0x340] sm:$0xff]
        %v463 = vld [vmem:[#allocation2 + $0x348] sm:$0xff]
        %v464 = vld [vmem:[#allocation2 + $0x350] sm:$0xff]
        %v465 = vld [vmem:[#allocation2 + $0x358] sm:$0xff]
        %v466 = vld [vmem:[#allocation2 + $0x360] sm:$0xff]
        %v467 = vld [vmem:[#allocation2 + $0x368] sm:$0xff]
        %v468 = vld [vmem:[#allocation2 + $0x370] sm:$0xff]
        %v469 = vld [vmem:[#allocation2 + $0x378] sm:$0xff]
        %v470 = vld [vmem:[#allocation2 + $0x380] sm:$0xff]
        %v471 = vld [vmem:[#allocation2 + $0x388] sm:$0xff]
        %v472 = vld [vmem:[#allocation2 + $0x390] sm:$0xff]
        %v473 = vld [vmem:[#allocation2 + $0x398] sm:$0xff]
        %v474 = vld [vmem:[#allocation2 + $0x3a0] sm:$0xff]
        %v475 = vld [vmem:[#allocation2 + $0x3a8] sm:$0xff]
        %v476 = vld [vmem:[#allocation2 + $0x3b0] sm:$0xff]
        %v477 = vld [vmem:[#allocation2 + $0x3b8] sm:$0xff]
        %v478 = vld [vmem:[#allocation2 + $0x3c0] sm:$0xff]
        %v479 = vld [vmem:[#allocation2 + $0x3c8] sm:$0xff]
        %v480 = vld [vmem:[#allocation2 + $0x3d0] sm:$0xff]
        %v481 = vld [vmem:[#allocation2 + $0x3d8] sm:$0xff]
        %v482 = vld [vmem:[#allocation2 + $0x3e0] sm:$0xff]
        %v483 = vld [vmem:[#allocation2 + $0x3e8] sm:$0xff]
        %v484 = vld [vmem:[#allocation2 + $0x3f0] sm:$0xff]
        %v485 = vld [vmem:[#allocation2 + $0x3f8] sm:$0xff]
        %v486 = vld [vmem:[#allocation3] sm:$0xff]
        %v487 = vld [vmem:[#allocation3 + $0x8] sm:$0xff]
        %v488 = vld [vmem:[#allocation3 + $0x10] sm:$0xff]
        %v489 = vld [vmem:[#allocation3 + $0x18] sm:$0xff]
        %v490 = vld [vmem:[#allocation3 + $0x20] sm:$0xff]
        %v491 = vld [vmem:[#allocation3 + $0x28] sm:$0xff]
        %v492 = vld [vmem:[#allocation3 + $0x30] sm:$0xff]
        %v493 = vld [vmem:[#allocation3 + $0x38] sm:$0xff]
        %v494 = vld [vmem:[#allocation3 + $0x40] sm:$0xff]
        %v495 = vld [vmem:[#allocation3 + $0x48] sm:$0xff]
        %v496 = vld [vmem:[#allocation3 + $0x50] sm:$0xff]
        %v497 = vld [vmem:[#allocation3 + $0x58] sm:$0xff]
        %v498 = vld [vmem:[#allocation3 + $0x60] sm:$0xff]
        %v499 = vld [vmem:[#allocation3 + $0x68] sm:$0xff]
        %v500 = vld [vmem:[#allocation3 + $0x70] sm:$0xff]
        %v501 = vld [vmem:[#allocation3 + $0x78] sm:$0xff]
        %v502 = vld [vmem:[#allocation3 + $0x80] sm:$0xff]
        %v503 = vld [vmem:[#allocation3 + $0x88] sm:$0xff]
        %v504 = vld [vmem:[#allocation3 + $0x90] sm:$0xff]
        %v505 = vld [vmem:[#allocation3 + $0x98] sm:$0xff]
        %v506 = vld [vmem:[#allocation3 + $0xa0] sm:$0xff]
        %v507 = vld [vmem:[#allocation3 + $0xa8] sm:$0xff]
        %v508 = vld [vmem:[#allocation3 + $0xb0] sm:$0xff]
        %v509 = vld [vmem:[#allocation3 + $0xb8] sm:$0xff]
        %v510 = vld [vmem:[#allocation3 + $0xc0] sm:$0xff]
        %v511 = vld [vmem:[#allocation3 + $0xc8] sm:$0xff]
        %v512 = vld [vmem:[#allocation3 + $0xd0] sm:$0xff]
        %v513 = vld [vmem:[#allocation3 + $0xd8] sm:$0xff]
        %v514 = vld [vmem:[#allocation3 + $0xe0] sm:$0xff]
        %v515 = vld [vmem:[#allocation3 + $0xe8] sm:$0xff]
        %v516 = vld [vmem:[#allocation3 + $0xf0] sm:$0xff]
        %v517 = vld [vmem:[#allocation3 + $0xf8] sm:$0xff]
        %v518 = vld [vmem:[#allocation3 + $0x100] sm:$0xff]
        %v519 = vld [vmem:[#allocation3 + $0x108] sm:$0xff]
        %v520 = vld [vmem:[#allocation3 + $0x110] sm:$0xff]
        %v521 = vld [vmem:[#allocation3 + $0x118] sm:$0xff]
        %v522 = vld [vmem:[#allocation3 + $0x120] sm:$0xff]
        %v523 = vld [vmem:[#allocation3 + $0x128] sm:$0xff]
        %v524 = vld [vmem:[#allocation3 + $0x130] sm:$0xff]
        %v525 = vld [vmem:[#allocation3 + $0x138] sm:$0xff]
        %v526 = vld [vmem:[#allocation3 + $0x140] sm:$0xff]
        %v527 = vld [vmem:[#allocation3 + $0x148] sm:$0xff]
        %v528 = vld [vmem:[#allocation3 + $0x150] sm:$0xff]
        %v529 = vld [vmem:[#allocation3 + $0x158] sm:$0xff]
        %v530 = vld [vmem:[#allocation3 + $0x160] sm:$0xff]
        %v531 = vld [vmem:[#allocation3 + $0x168] sm:$0xff]
        %v532 = vld [vmem:[#allocation3 + $0x170] sm:$0xff]
        %v533 = vld [vmem:[#allocation3 + $0x178] sm:$0xff]
        %v534 = vld [vmem:[#allocation3 + $0x180] sm:$0xff]
        %v535 = vld [vmem:[#allocation3 + $0x188] sm:$0xff]
        %v536 = vld [vmem:[#allocation3 + $0x190] sm:$0xff]
        %v537 = vld [vmem:[#allocation3 + $0x198] sm:$0xff]
        %v538 = vld [vmem:[#allocation3 + $0x1a0] sm:$0xff]
        %v539 = vld [vmem:[#allocation3 + $0x1a8] sm:$0xff]
        %v540 = vld [vmem:[#allocation3 + $0x1b0] sm:$0xff]
        %v541 = vld [vmem:[#allocation3 + $0x1b8] sm:$0xff]
        %v542 = vld [vmem:[#allocation3 + $0x1c0] sm:$0xff]
        %v543 = vld [vmem:[#allocation3 + $0x1c8] sm:$0xff]
        %v544 = vld [vmem:[#allocation3 + $0x1d0] sm:$0xff]
        %v545 = vld [vmem:[#allocation3 + $0x1d8] sm:$0xff]
        %v546 = vld [vmem:[#allocation3 + $0x1e0] sm:$0xff]
        %v547 = vld [vmem:[#allocation3 + $0x1e8] sm:$0xff]
        %v548 = vld [vmem:[#allocation3 + $0x1f0] sm:$0xff]
        %v549 = vld [vmem:[#allocation3 + $0x1f8] sm:$0xff]
        %v550 = vld [vmem:[#allocation3 + $0x200] sm:$0xff]
        %v551 = vld [vmem:[#allocation3 + $0x208] sm:$0xff]
        %v552 = vld [vmem:[#allocation3 + $0x210] sm:$0xff]
        %v553 = vld [vmem:[#allocation3 + $0x218] sm:$0xff]
        %v554 = vld [vmem:[#allocation3 + $0x220] sm:$0xff]
        %v555 = vld [vmem:[#allocation3 + $0x228] sm:$0xff]
        %v556 = vld [vmem:[#allocation3 + $0x230] sm:$0xff]
        %v557 = vld [vmem:[#allocation3 + $0x238] sm:$0xff]
        %v558 = vld [vmem:[#allocation3 + $0x240] sm:$0xff]
        %v559 = vld [vmem:[#allocation3 + $0x248] sm:$0xff]
        %v560 = vld [vmem:[#allocation3 + $0x250] sm:$0xff]
        %v561 = vld [vmem:[#allocation3 + $0x258] sm:$0xff]
        %v562 = vld [vmem:[#allocation3 + $0x260] sm:$0xff]
        %v563 = vld [vmem:[#allocation3 + $0x268] sm:$0xff]
        %v564 = vld [vmem:[#allocation3 + $0x270] sm:$0xff]
        %v565 = vld [vmem:[#allocation3 + $0x278] sm:$0xff]
        %v566 = vld [vmem:[#allocation3 + $0x280] sm:$0xff]
        %v567 = vld [vmem:[#allocation3 + $0x288] sm:$0xff]
        %v568 = vld [vmem:[#allocation3 + $0x290] sm:$0xff]
        %v569 = vld [vmem:[#allocation3 + $0x298] sm:$0xff]
        %v570 = vld [vmem:[#allocation3 + $0x2a0] sm:$0xff]
        %v571 = vld [vmem:[#allocation3 + $0x2a8] sm:$0xff]
        %v572 = vld [vmem:[#allocation3 + $0x2b0] sm:$0xff]
        %v573 = vld [vmem:[#allocation3 + $0x2b8] sm:$0xff]
        %v574 = vld [vmem:[#allocation3 + $0x2c0] sm:$0xff]
        %v575 = vld [vmem:[#allocation3 + $0x2c8] sm:$0xff]
        %v576 = vld [vmem:[#allocation3 + $0x2d0] sm:$0xff]
        %v577 = vld [vmem:[#allocation3 + $0x2d8] sm:$0xff]
        %v578 = vld [vmem:[#allocation3 + $0x2e0] sm:$0xff]
        %v579 = vld [vmem:[#allocation3 + $0x2e8] sm:$0xff]
        %v580 = vld [vmem:[#allocation3 + $0x2f0] sm:$0xff]
        %v581 = vld [vmem:[#allocation3 + $0x2f8] sm:$0xff]
        %v582 = vld [vmem:[#allocation3 + $0x300] sm:$0xff]
        %v583 = vld [vmem:[#allocation3 + $0x308] sm:$0xff]
        %v584 = vld [vmem:[#allocation3 + $0x310] sm:$0xff]
        %v585 = vld [vmem:[#allocation3 + $0x318] sm:$0xff]
        %v586 = vld [vmem:[#allocation3 + $0x320] sm:$0xff]
        %v587 = vld [vmem:[#allocation3 + $0x328] sm:$0xff]
        %v588 = vld [vmem:[#allocation3 + $0x330] sm:$0xff]
        %v589 = vld [vmem:[#allocation3 + $0x338] sm:$0xff]
        %v590 = vld [vmem:[#allocation3 + $0x340] sm:$0xff]
        %v591 = vld [vmem:[#allocation3 + $0x348] sm:$0xff]
        %v592 = vld [vmem:[#allocation3 + $0x350] sm:$0xff]
        %v593 = vld [vmem:[#allocation3 + $0x358] sm:$0xff]
        %v594 = vld [vmem:[#allocation3 + $0x360] sm:$0xff]
        %v595 = vld [vmem:[#allocation3 + $0x368] sm:$0xff]
        %v596 = vld [vmem:[#allocation3 + $0x370] sm:$0xff]
        %v597 = vld [vmem:[#allocation3 + $0x378] sm:$0xff]
        %v598 = vld [vmem:[#allocation3 + $0x380] sm:$0xff]
        %v599 = vld [vmem:[#allocation3 + $0x388] sm:$0xff]
        %v600 = vld [vmem:[#allocation3 + $0x390] sm:$0xff]
        %v601 = vld [vmem:[#allocation3 + $0x398] sm:$0xff]
        %v602 = vld [vmem:[#allocation3 + $0x3a0] sm:$0xff]
        %v603 = vld [vmem:[#allocation3 + $0x3a8] sm:$0xff]
        %v604 = vld [vmem:[#allocation3 + $0x3b0] sm:$0xff]
        %v605 = vld [vmem:[#allocation3 + $0x3b8] sm:$0xff]
        %v606 = vld [vmem:[#allocation3 + $0x3c0] sm:$0xff]
        %v607 = vld [vmem:[#allocation3 + $0x3c8] sm:$0xff]
        %v608 = vld [vmem:[#allocation3 + $0x3d0] sm:$0xff]
        %v609 = vld [vmem:[#allocation3 + $0x3d8] sm:$0xff]
        %v610 = vld [vmem:[#allocation3 + $0x3e0] sm:$0xff]
        %v611 = vld [vmem:[#allocation3 + $0x3e8] sm:$0xff]
        %v612 = vld [vmem:[#allocation3 + $0x3f0] sm:$0xff]
        %v613 = vld [vmem:[#allocation3 + $0x3f8] sm:$0xff]
        %v614 = vld [vmem:[%s198] sm:$0xff]
        %v615 = vld [vmem:[%s198 + $0x8] sm:$0xff]
        %v616 = vld [vmem:[%s198 + $0x10] sm:$0xff]
        %v617 = vld [vmem:[%s198 + $0x18] sm:$0xff]
        %v618 = vld [vmem:[%s198 + $0x20] sm:$0xff]
        %v619 = vld [vmem:[%s198 + $0x28] sm:$0xff]
        %v620 = vld [vmem:[%s198 + $0x30] sm:$0xff]
        %v621 = vld [vmem:[%s198 + $0x38] sm:$0xff]
        %v622 = vld [vmem:[%s198 + $0x40] sm:$0xff]
        %v623 = vld [vmem:[%s198 + $0x48] sm:$0xff]
        %v624 = vld [vmem:[%s198 + $0x50] sm:$0xff]
        %v625 = vld [vmem:[%s198 + $0x58] sm:$0xff]
        %v626 = vld [vmem:[%s198 + $0x60] sm:$0xff]
        %v627 = vld [vmem:[%s198 + $0x68] sm:$0xff]
        %v628 = vld [vmem:[%s198 + $0x70] sm:$0xff]
        %v629 = vld [vmem:[%s198 + $0x78] sm:$0xff]
        %v630 = vld [vmem:[%s198 + $0x80] sm:$0xff]
        %v631 = vld [vmem:[%s198 + $0x88] sm:$0xff]
        %v632 = vld [vmem:[%s198 + $0x90] sm:$0xff]
        %v633 = vld [vmem:[%s198 + $0x98] sm:$0xff]
        %v634 = vld [vmem:[%s198 + $0xa0] sm:$0xff]
        %v635 = vld [vmem:[%s198 + $0xa8] sm:$0xff]
        %v636 = vld [vmem:[%s198 + $0xb0] sm:$0xff]
        %v637 = vld [vmem:[%s198 + $0xb8] sm:$0xff]
        %v638 = vld [vmem:[%s198 + $0xc0] sm:$0xff]
        %v639 = vld [vmem:[%s198 + $0xc8] sm:$0xff]
        %v640 = vld [vmem:[%s198 + $0xd0] sm:$0xff]
        %v641 = vld [vmem:[%s198 + $0xd8] sm:$0xff]
        %v642 = vld [vmem:[%s198 + $0xe0] sm:$0xff]
        %v643 = vld [vmem:[%s198 + $0xe8] sm:$0xff]
        %v644 = vld [vmem:[%s198 + $0xf0] sm:$0xff]
        %v645 = vld [vmem:[%s198 + $0xf8] sm:$0xff]
        %v646 = vld [vmem:[%s198 + $0x100] sm:$0xff]
        %v647 = vld [vmem:[%s198 + $0x108] sm:$0xff]
        %v648 = vld [vmem:[%s198 + $0x110] sm:$0xff]
        %v649 = vld [vmem:[%s198 + $0x118] sm:$0xff]
        %v650 = vld [vmem:[%s198 + $0x120] sm:$0xff]
        %v651 = vld [vmem:[%s198 + $0x128] sm:$0xff]
        %v652 = vld [vmem:[%s198 + $0x130] sm:$0xff]
        %v653 = vld [vmem:[%s198 + $0x138] sm:$0xff]
        %v654 = vld [vmem:[%s198 + $0x140] sm:$0xff]
        %v655 = vld [vmem:[%s198 + $0x148] sm:$0xff]
        %v656 = vld [vmem:[%s198 + $0x150] sm:$0xff]
        %v657 = vld [vmem:[%s198 + $0x158] sm:$0xff]
        %v658 = vld [vmem:[%s198 + $0x160] sm:$0xff]
        %v659 = vld [vmem:[%s198 + $0x168] sm:$0xff]
        %v660 = vld [vmem:[%s198 + $0x170] sm:$0xff]
        %v661 = vld [vmem:[%s198 + $0x178] sm:$0xff]
        %v662 = vld [vmem:[%s198 + $0x180] sm:$0xff]
        %v663 = vld [vmem:[%s198 + $0x188] sm:$0xff]
        %v664 = vld [vmem:[%s198 + $0x190] sm:$0xff]
        %v665 = vld [vmem:[%s198 + $0x198] sm:$0xff]
        %v666 = vld [vmem:[%s198 + $0x1a0] sm:$0xff]
        %v667 = vld [vmem:[%s198 + $0x1a8] sm:$0xff]
        %v668 = vld [vmem:[%s198 + $0x1b0] sm:$0xff]
        %v669 = vld [vmem:[%s198 + $0x1b8] sm:$0xff]
        %v670 = vld [vmem:[%s198 + $0x1c0] sm:$0xff]
        %v671 = vld [vmem:[%s198 + $0x1c8] sm:$0xff]
        %v672 = vld [vmem:[%s198 + $0x1d0] sm:$0xff]
        %v673 = vld [vmem:[%s198 + $0x1d8] sm:$0xff]
        %v674 = vld [vmem:[%s198 + $0x1e0] sm:$0xff]
        %v675 = vld [vmem:[%s198 + $0x1e8] sm:$0xff]
        %v676 = vld [vmem:[%s198 + $0x1f0] sm:$0xff]
        %v677 = vld [vmem:[%s198 + $0x1f8] sm:$0xff]
        %v806 = vunpack.c.l.b16 %v486
        %v807 = vunpack.c.h.b16 %v486
        %v808 = vunpack.c.l.b16 %v487
        %v809 = vunpack.c.h.b16 %v487
        %v810 = vunpack.c.l.b16 %v488
        %v811 = vunpack.c.h.b16 %v488
        %v812 = vunpack.c.l.b16 %v489
        %v813 = vunpack.c.h.b16 %v489
        %v814 = vunpack.c.l.b16 %v490
        %v815 = vunpack.c.h.b16 %v490
        %v816 = vunpack.c.l.b16 %v491
        %v817 = vunpack.c.h.b16 %v491
        %v818 = vunpack.c.l.b16 %v492
        %v819 = vunpack.c.h.b16 %v492
        %v820 = vunpack.c.l.b16 %v493
        %v821 = vunpack.c.h.b16 %v493
        %v822 = vunpack.c.l.b16 %v494
        %v823 = vunpack.c.h.b16 %v494
        %v824 = vunpack.c.l.b16 %v495
        %v825 = vunpack.c.h.b16 %v495
        %v826 = vunpack.c.l.b16 %v496
        %v827 = vunpack.c.h.b16 %v496
        %v828 = vunpack.c.l.b16 %v497
        %v829 = vunpack.c.h.b16 %v497
        %v830 = vunpack.c.l.b16 %v498
        %v831 = vunpack.c.h.b16 %v498
        %v832 = vunpack.c.l.b16 %v499
        %v833 = vunpack.c.h.b16 %v499
        %v834 = vunpack.c.l.b16 %v500
        %v835 = vunpack.c.h.b16 %v500
        %v836 = vunpack.c.l.b16 %v501
        %v837 = vunpack.c.h.b16 %v501
        %v838 = vunpack.c.l.b16 %v502
        %v839 = vunpack.c.h.b16 %v502
        %v840 = vunpack.c.l.b16 %v503
        %v841 = vunpack.c.h.b16 %v503
        %v842 = vunpack.c.l.b16 %v504
        %v843 = vunpack.c.h.b16 %v504
        %v844 = vunpack.c.l.b16 %v505
        %v845 = vunpack.c.h.b16 %v505
        %v846 = vunpack.c.l.b16 %v506
        %v847 = vunpack.c.h.b16 %v506
        %v848 = vunpack.c.l.b16 %v507
        %v849 = vunpack.c.h.b16 %v507
        %v850 = vunpack.c.l.b16 %v508
        %v851 = vunpack.c.h.b16 %v508
        %v852 = vunpack.c.l.b16 %v509
        %v853 = vunpack.c.h.b16 %v509
        %v854 = vunpack.c.l.b16 %v510
        %v855 = vunpack.c.h.b16 %v510
        %v856 = vunpack.c.l.b16 %v511
        %v857 = vunpack.c.h.b16 %v511
        %v858 = vunpack.c.l.b16 %v512
        %v859 = vunpack.c.h.b16 %v512
        %v860 = vunpack.c.l.b16 %v513
        %v861 = vunpack.c.h.b16 %v513
        %v862 = vunpack.c.l.b16 %v514
        %v863 = vunpack.c.h.b16 %v514
        %v864 = vunpack.c.l.b16 %v515
        %v865 = vunpack.c.h.b16 %v515
        %v866 = vunpack.c.l.b16 %v516
        %v867 = vunpack.c.h.b16 %v516
        %v868 = vunpack.c.l.b16 %v517
        %v869 = vunpack.c.h.b16 %v517
        %v870 = vunpack.c.l.b16 %v518
        %v871 = vunpack.c.h.b16 %v518
        %v872 = vunpack.c.l.b16 %v519
        %v873 = vunpack.c.h.b16 %v519
        %v874 = vunpack.c.l.b16 %v520
        %v875 = vunpack.c.h.b16 %v520
        %v876 = vunpack.c.l.b16 %v521
        %v877 = vunpack.c.h.b16 %v521
        %v878 = vunpack.c.l.b16 %v522
        %v879 = vunpack.c.h.b16 %v522
        %v880 = vunpack.c.l.b16 %v523
        %v881 = vunpack.c.h.b16 %v523
        %v882 = vunpack.c.l.b16 %v524
        %v883 = vunpack.c.h.b16 %v524
        %v884 = vunpack.c.l.b16 %v525
        %v885 = vunpack.c.h.b16 %v525
        %v886 = vunpack.c.l.b16 %v526
        %v887 = vunpack.c.h.b16 %v526
        %v888 = vunpack.c.l.b16 %v527
        %v889 = vunpack.c.h.b16 %v527
        %v890 = vunpack.c.l.b16 %v528
        %v891 = vunpack.c.h.b16 %v528
        %v892 = vunpack.c.l.b16 %v529
        %v893 = vunpack.c.h.b16 %v529
        %v894 = vunpack.c.l.b16 %v530
        %v895 = vunpack.c.h.b16 %v530
        %v896 = vunpack.c.l.b16 %v531
        %v897 = vunpack.c.h.b16 %v531
        %v898 = vunpack.c.l.b16 %v532
        %v899 = vunpack.c.h.b16 %v532
        %v900 = vunpack.c.l.b16 %v533
        %v901 = vunpack.c.h.b16 %v533
        %v902 = vunpack.c.l.b16 %v534
        %v903 = vunpack.c.h.b16 %v534
        %v904 = vunpack.c.l.b16 %v535
        %v905 = vunpack.c.h.b16 %v535
        %v906 = vunpack.c.l.b16 %v536
        %v907 = vunpack.c.h.b16 %v536
        %v908 = vunpack.c.l.b16 %v537
        %v909 = vunpack.c.h.b16 %v537
        %v910 = vunpack.c.l.b16 %v538
        %v911 = vunpack.c.h.b16 %v538
        %v912 = vunpack.c.l.b16 %v539
        %v913 = vunpack.c.h.b16 %v539
        %v914 = vunpack.c.l.b16 %v540
        %v915 = vunpack.c.h.b16 %v540
        %v916 = vunpack.c.l.b16 %v541
        %v917 = vunpack.c.h.b16 %v541
        %v918 = vunpack.c.l.b16 %v542
        %v919 = vunpack.c.h.b16 %v542
        %v920 = vunpack.c.l.b16 %v543
        %v921 = vunpack.c.h.b16 %v543
        %v922 = vunpack.c.l.b16 %v544
        %v923 = vunpack.c.h.b16 %v544
        %v924 = vunpack.c.l.b16 %v545
        %v925 = vunpack.c.h.b16 %v545
        %v926 = vunpack.c.l.b16 %v546
        %v927 = vunpack.c.h.b16 %v546
        %v928 = vunpack.c.l.b16 %v547
        %v929 = vunpack.c.h.b16 %v547
        %v930 = vunpack.c.l.b16 %v548
        %v931 = vunpack.c.h.b16 %v548
        %v932 = vunpack.c.l.b16 %v549
        %v933 = vunpack.c.h.b16 %v549
        %v934 = vunpack.c.l.b16 %v550
        %v935 = vunpack.c.h.b16 %v550
        %v936 = vunpack.c.l.b16 %v551
        %v937 = vunpack.c.h.b16 %v551
        %v938 = vunpack.c.l.b16 %v552
        %v939 = vunpack.c.h.b16 %v552
        %v940 = vunpack.c.l.b16 %v553
        %v941 = vunpack.c.h.b16 %v553
        %v942 = vunpack.c.l.b16 %v554
        %v943 = vunpack.c.h.b16 %v554
        %v944 = vunpack.c.l.b16 %v555
        %v945 = vunpack.c.h.b16 %v555
        %v946 = vunpack.c.l.b16 %v556
        %v947 = vunpack.c.h.b16 %v556
        %v948 = vunpack.c.l.b16 %v557
        %v949 = vunpack.c.h.b16 %v557
        %v950 = vunpack.c.l.b16 %v558
        %v951 = vunpack.c.h.b16 %v558
        %v952 = vunpack.c.l.b16 %v559
        %v953 = vunpack.c.h.b16 %v559
        %v954 = vunpack.c.l.b16 %v560
        %v955 = vunpack.c.h.b16 %v560
        %v956 = vunpack.c.l.b16 %v561
        %v957 = vunpack.c.h.b16 %v561
        %v958 = vunpack.c.l.b16 %v562
        %v959 = vunpack.c.h.b16 %v562
        %v960 = vunpack.c.l.b16 %v563
        %v961 = vunpack.c.h.b16 %v563
        %v962 = vunpack.c.l.b16 %v564
        %v963 = vunpack.c.h.b16 %v564
        %v964 = vunpack.c.l.b16 %v565
        %v965 = vunpack.c.h.b16 %v565
        %v966 = vunpack.c.l.b16 %v566
        %v967 = vunpack.c.h.b16 %v566
        %v968 = vunpack.c.l.b16 %v567
        %v969 = vunpack.c.h.b16 %v567
        %v970 = vunpack.c.l.b16 %v568
        %v971 = vunpack.c.h.b16 %v568
        %v972 = vunpack.c.l.b16 %v569
        %v973 = vunpack.c.h.b16 %v569
        %v974 = vunpack.c.l.b16 %v570
        %v975 = vunpack.c.h.b16 %v570
        %v976 = vunpack.c.l.b16 %v571
        %v977 = vunpack.c.h.b16 %v571
        %v978 = vunpack.c.l.b16 %v572
        %v979 = vunpack.c.h.b16 %v572
        %v980 = vunpack.c.l.b16 %v573
        %v981 = vunpack.c.h.b16 %v573
        %v982 = vunpack.c.l.b16 %v574
        %v983 = vunpack.c.h.b16 %v574
        %v984 = vunpack.c.l.b16 %v575
        %v985 = vunpack.c.h.b16 %v575
        %v986 = vunpack.c.l.b16 %v576
        %v987 = vunpack.c.h.b16 %v576
        %v988 = vunpack.c.l.b16 %v577
        %v989 = vunpack.c.h.b16 %v577
        %v990 = vunpack.c.l.b16 %v578
        %v991 = vunpack.c.h.b16 %v578
        %v992 = vunpack.c.l.b16 %v579
        %v993 = vunpack.c.h.b16 %v579
        %v994 = vunpack.c.l.b16 %v580
        %v995 = vunpack.c.h.b16 %v580
        %v996 = vunpack.c.l.b16 %v581
        %v997 = vunpack.c.h.b16 %v581
        %v998 = vunpack.c.l.b16 %v582
        %v999 = vunpack.c.h.b16 %v582
        %v1000 = vunpack.c.l.b16 %v583
        %v1001 = vunpack.c.h.b16 %v583
        %v1002 = vunpack.c.l.b16 %v584
        %v1003 = vunpack.c.h.b16 %v584
        %v1004 = vunpack.c.l.b16 %v585
        %v1005 = vunpack.c.h.b16 %v585
        %v1006 = vunpack.c.l.b16 %v586
        %v1007 = vunpack.c.h.b16 %v586
        %v1008 = vunpack.c.l.b16 %v587
        %v1009 = vunpack.c.h.b16 %v587
        %v1010 = vunpack.c.l.b16 %v588
        %v1011 = vunpack.c.h.b16 %v588
        %v1012 = vunpack.c.l.b16 %v589
        %v1013 = vunpack.c.h.b16 %v589
        %v1014 = vunpack.c.l.b16 %v590
        %v1015 = vunpack.c.h.b16 %v590
        %v1016 = vunpack.c.l.b16 %v591
        %v1017 = vunpack.c.h.b16 %v591
        %v1018 = vunpack.c.l.b16 %v592
        %v1019 = vunpack.c.h.b16 %v592
        %v1020 = vunpack.c.l.b16 %v593
        %v1021 = vunpack.c.h.b16 %v593
        %v1022 = vunpack.c.l.b16 %v594
        %v1023 = vunpack.c.h.b16 %v594
        %v1024 = vunpack.c.l.b16 %v595
        %v1025 = vunpack.c.h.b16 %v595
        %v1026 = vunpack.c.l.b16 %v596
        %v1027 = vunpack.c.h.b16 %v596
        %v1028 = vunpack.c.l.b16 %v597
        %v1029 = vunpack.c.h.b16 %v597
        %v1030 = vunpack.c.l.b16 %v598
        %v1031 = vunpack.c.h.b16 %v598
        %v1032 = vunpack.c.l.b16 %v599
        %v1033 = vunpack.c.h.b16 %v599
        %v1034 = vunpack.c.l.b16 %v600
        %v1035 = vunpack.c.h.b16 %v600
        %v1036 = vunpack.c.l.b16 %v601
        %v1037 = vunpack.c.h.b16 %v601
        %v1038 = vunpack.c.l.b16 %v602
        %v1039 = vunpack.c.h.b16 %v602
        %v1040 = vunpack.c.l.b16 %v603
        %v1041 = vunpack.c.h.b16 %v603
        %v1042 = vunpack.c.l.b16 %v604
        %v1043 = vunpack.c.h.b16 %v604
        %v1044 = vunpack.c.l.b16 %v605
        %v1045 = vunpack.c.h.b16 %v605
        %v1046 = vunpack.c.l.b16 %v606
        %v1047 = vunpack.c.h.b16 %v606
        %v1048 = vunpack.c.l.b16 %v607
        %v1049 = vunpack.c.h.b16 %v607
        %v1050 = vunpack.c.l.b16 %v608
        %v1051 = vunpack.c.h.b16 %v608
        %v1052 = vunpack.c.l.b16 %v609
        %v1053 = vunpack.c.h.b16 %v609
        %v1054 = vunpack.c.l.b16 %v610
        %v1055 = vunpack.c.h.b16 %v610
        %v1056 = vunpack.c.l.b16 %v611
        %v1057 = vunpack.c.h.b16 %v611
        %v1058 = vunpack.c.l.b16 %v612
        %v1059 = vunpack.c.h.b16 %v612
        %v1060 = vunpack.c.l.b16 %v613
        %v1061 = vunpack.c.h.b16 %v613
        %v1062 = vpack.c.b16 %v810, %v806
        %v1063 = vpack.c.b16 %v811, %v807
        %v1064 = vpack.c.b16 %v812, %v808
        %v1065 = vpack.c.b16 %v813, %v809
        %v1066 = vpack.c.b16 %v818, %v814
        %v1067 = vpack.c.b16 %v819, %v815
        %v1068 = vpack.c.b16 %v820, %v816
        %v1069 = vpack.c.b16 %v821, %v817
        %v1070 = vpack.c.b16 %v826, %v822
        %v1071 = vpack.c.b16 %v827, %v823
        %v1072 = vpack.c.b16 %v828, %v824
        %v1073 = vpack.c.b16 %v829, %v825
        %v1074 = vpack.c.b16 %v834, %v830
        %v1075 = vpack.c.b16 %v835, %v831
        %v1076 = vpack.c.b16 %v836, %v832
        %v1077 = vpack.c.b16 %v837, %v833
        %v1078 = vpack.c.b16 %v842, %v838
        %v1079 = vpack.c.b16 %v843, %v839
        %v1080 = vpack.c.b16 %v844, %v840
        %v1081 = vpack.c.b16 %v845, %v841
        %v1082 = vpack.c.b16 %v850, %v846
        %v1083 = vpack.c.b16 %v851, %v847
        %v1084 = vpack.c.b16 %v852, %v848
        %v1085 = vpack.c.b16 %v853, %v849
        %v1086 = vpack.c.b16 %v858, %v854
        %v1087 = vpack.c.b16 %v859, %v855
        %v1088 = vpack.c.b16 %v860, %v856
        %v1089 = vpack.c.b16 %v861, %v857
        %v1090 = vpack.c.b16 %v866, %v862
        %v1091 = vpack.c.b16 %v867, %v863
        %v1092 = vpack.c.b16 %v868, %v864
        %v1093 = vpack.c.b16 %v869, %v865
        %v1094 = vpack.c.b16 %v874, %v870
        %v1095 = vpack.c.b16 %v875, %v871
        %v1096 = vpack.c.b16 %v876, %v872
        %v1097 = vpack.c.b16 %v877, %v873
        %v1098 = vpack.c.b16 %v882, %v878
        %v1099 = vpack.c.b16 %v883, %v879
        %v1100 = vpack.c.b16 %v884, %v880
        %v1101 = vpack.c.b16 %v885, %v881
        %v1102 = vpack.c.b16 %v890, %v886
        %v1103 = vpack.c.b16 %v891, %v887
        %v1104 = vpack.c.b16 %v892, %v888
        %v1105 = vpack.c.b16 %v893, %v889
        %v1106 = vpack.c.b16 %v898, %v894
        %v1107 = vpack.c.b16 %v899, %v895
        %v1108 = vpack.c.b16 %v900, %v896
        %v1109 = vpack.c.b16 %v901, %v897
        %v1110 = vpack.c.b16 %v906, %v902
        %v1111 = vpack.c.b16 %v907, %v903
        %v1112 = vpack.c.b16 %v908, %v904
        %v1113 = vpack.c.b16 %v909, %v905
        %v1114 = vpack.c.b16 %v914, %v910
        %v1115 = vpack.c.b16 %v915, %v911
        %v1116 = vpack.c.b16 %v916, %v912
        %v1117 = vpack.c.b16 %v917, %v913
        %v1118 = vpack.c.b16 %v922, %v918
        %v1119 = vpack.c.b16 %v923, %v919
        %v1120 = vpack.c.b16 %v924, %v920
        %v1121 = vpack.c.b16 %v925, %v921
        %v1122 = vpack.c.b16 %v930, %v926
        %v1123 = vpack.c.b16 %v931, %v927
        %v1124 = vpack.c.b16 %v932, %v928
        %v1125 = vpack.c.b16 %v933, %v929
        %v1126 = vpack.c.b16 %v938, %v934
        %v1127 = vpack.c.b16 %v939, %v935
        %v1128 = vpack.c.b16 %v940, %v936
        %v1129 = vpack.c.b16 %v941, %v937
        %v1130 = vpack.c.b16 %v946, %v942
        %v1131 = vpack.c.b16 %v947, %v943
        %v1132 = vpack.c.b16 %v948, %v944
        %v1133 = vpack.c.b16 %v949, %v945
        %v1134 = vpack.c.b16 %v954, %v950
        %v1135 = vpack.c.b16 %v955, %v951
        %v1136 = vpack.c.b16 %v956, %v952
        %v1137 = vpack.c.b16 %v957, %v953
        %v1138 = vpack.c.b16 %v962, %v958
        %v1139 = vpack.c.b16 %v963, %v959
        %v1140 = vpack.c.b16 %v964, %v960
        %v1141 = vpack.c.b16 %v965, %v961
        %v1142 = vpack.c.b16 %v970, %v966
        %v1143 = vpack.c.b16 %v971, %v967
        %v1144 = vpack.c.b16 %v972, %v968
        %v1145 = vpack.c.b16 %v973, %v969
        %v1146 = vpack.c.b16 %v978, %v974
        %v1147 = vpack.c.b16 %v979, %v975
        %v1148 = vpack.c.b16 %v980, %v976
        %v1149 = vpack.c.b16 %v981, %v977
        %v1150 = vpack.c.b16 %v986, %v982
        %v1151 = vpack.c.b16 %v987, %v983
        %v1152 = vpack.c.b16 %v988, %v984
        %v1153 = vpack.c.b16 %v989, %v985
        %v1154 = vpack.c.b16 %v994, %v990
        %v1155 = vpack.c.b16 %v995, %v991
        %v1156 = vpack.c.b16 %v996, %v992
        %v1157 = vpack.c.b16 %v997, %v993
        %v1158 = vpack.c.b16 %v1002, %v998
        %v1159 = vpack.c.b16 %v1003, %v999
        %v1160 = vpack.c.b16 %v1004, %v1000
        %v1161 = vpack.c.b16 %v1005, %v1001
        %v1162 = vpack.c.b16 %v1010, %v1006
        %v1163 = vpack.c.b16 %v1011, %v1007
        %v1164 = vpack.c.b16 %v1012, %v1008
        %v1165 = vpack.c.b16 %v1013, %v1009
        %v1166 = vpack.c.b16 %v1018, %v1014
        %v1167 = vpack.c.b16 %v1019, %v1015
        %v1168 = vpack.c.b16 %v1020, %v1016
        %v1169 = vpack.c.b16 %v1021, %v1017
        %v1170 = vpack.c.b16 %v1026, %v1022
        %v1171 = vpack.c.b16 %v1027, %v1023
        %v1172 = vpack.c.b16 %v1028, %v1024
        %v1173 = vpack.c.b16 %v1029, %v1025
        %v1174 = vpack.c.b16 %v1034, %v1030
        %v1175 = vpack.c.b16 %v1035, %v1031
        %v1176 = vpack.c.b16 %v1036, %v1032
        %v1177 = vpack.c.b16 %v1037, %v1033
        %v1178 = vpack.c.b16 %v1042, %v1038
        %v1179 = vpack.c.b16 %v1043, %v1039
        %v1180 = vpack.c.b16 %v1044, %v1040
        %v1181 = vpack.c.b16 %v1045, %v1041
        %v1182 = vpack.c.b16 %v1050, %v1046
        %v1183 = vpack.c.b16 %v1051, %v1047
        %v1184 = vpack.c.b16 %v1052, %v1048
        %v1185 = vpack.c.b16 %v1053, %v1049
        %v1186 = vpack.c.b16 %v1058, %v1054
        %v1187 = vpack.c.b16 %v1059, %v1055
        %v1188 = vpack.c.b16 %v1060, %v1056
        %v1189 = vpack.c.b16 %v1061, %v1057
        %v1382 = vunpack.c.l.b16 %v614
        %v1383 = vunpack.c.h.b16 %v614
        %v1384 = vunpack.c.l.b16 %v615
        %v1385 = vunpack.c.h.b16 %v615
        %v1386 = vunpack.c.l.b16 %v616
        %v1387 = vunpack.c.h.b16 %v616
        %v1388 = vunpack.c.l.b16 %v617
        %v1389 = vunpack.c.h.b16 %v617
        %v1390 = vunpack.c.l.b16 %v618
        %v1391 = vunpack.c.h.b16 %v618
        %v1392 = vunpack.c.l.b16 %v619
        %v1393 = vunpack.c.h.b16 %v619
        %v1394 = vunpack.c.l.b16 %v620
        %v1395 = vunpack.c.h.b16 %v620
        %v1396 = vunpack.c.l.b16 %v621
        %v1397 = vunpack.c.h.b16 %v621
        %v1398 = vunpack.c.l.b16 %v622
        %v1399 = vunpack.c.h.b16 %v622
        %v1400 = vunpack.c.l.b16 %v623
        %v1401 = vunpack.c.h.b16 %v623
        %v1402 = vunpack.c.l.b16 %v624
        %v1403 = vunpack.c.h.b16 %v624
        %v1404 = vunpack.c.l.b16 %v625
        %v1405 = vunpack.c.h.b16 %v625
        %v1406 = vunpack.c.l.b16 %v626
        %v1407 = vunpack.c.h.b16 %v626
        %v1408 = vunpack.c.l.b16 %v627
        %v1409 = vunpack.c.h.b16 %v627
        %v1410 = vunpack.c.l.b16 %v628
        %v1411 = vunpack.c.h.b16 %v628
        %v1412 = vunpack.c.l.b16 %v629
        %v1413 = vunpack.c.h.b16 %v629
        %v1414 = vunpack.c.l.b16 %v630
        %v1415 = vunpack.c.h.b16 %v630
        %v1416 = vunpack.c.l.b16 %v631
        %v1417 = vunpack.c.h.b16 %v631
        %v1418 = vunpack.c.l.b16 %v632
        %v1419 = vunpack.c.h.b16 %v632
        %v1420 = vunpack.c.l.b16 %v633
        %v1421 = vunpack.c.h.b16 %v633
        %v1422 = vunpack.c.l.b16 %v634
        %v1423 = vunpack.c.h.b16 %v634
        %v1424 = vunpack.c.l.b16 %v635
        %v1425 = vunpack.c.h.b16 %v635
        %v1426 = vunpack.c.l.b16 %v636
        %v1427 = vunpack.c.h.b16 %v636
        %v1428 = vunpack.c.l.b16 %v637
        %v1429 = vunpack.c.h.b16 %v637
        %v1430 = vunpack.c.l.b16 %v638
        %v1431 = vunpack.c.h.b16 %v638
        %v1432 = vunpack.c.l.b16 %v639
        %v1433 = vunpack.c.h.b16 %v639
        %v1434 = vunpack.c.l.b16 %v640
        %v1435 = vunpack.c.h.b16 %v640
        %v1436 = vunpack.c.l.b16 %v641
        %v1437 = vunpack.c.h.b16 %v641
        %v1438 = vunpack.c.l.b16 %v642
        %v1439 = vunpack.c.h.b16 %v642
        %v1440 = vunpack.c.l.b16 %v643
        %v1441 = vunpack.c.h.b16 %v643
        %v1442 = vunpack.c.l.b16 %v644
        %v1443 = vunpack.c.h.b16 %v644
        %v1444 = vunpack.c.l.b16 %v645
        %v1445 = vunpack.c.h.b16 %v645
        %v1446 = vunpack.c.l.b16 %v646
        %v1447 = vunpack.c.h.b16 %v646
        %v1448 = vunpack.c.l.b16 %v647
        %v1449 = vunpack.c.h.b16 %v647
        %v1450 = vunpack.c.l.b16 %v648
        %v1451 = vunpack.c.h.b16 %v648
        %v1452 = vunpack.c.l.b16 %v649
        %v1453 = vunpack.c.h.b16 %v649
        %v1454 = vunpack.c.l.b16 %v650
        %v1455 = vunpack.c.h.b16 %v650
        %v1456 = vunpack.c.l.b16 %v651
        %v1457 = vunpack.c.h.b16 %v651
        %v1458 = vunpack.c.l.b16 %v652
        %v1459 = vunpack.c.h.b16 %v652
        %v1460 = vunpack.c.l.b16 %v653
        %v1461 = vunpack.c.h.b16 %v653
        %v1462 = vunpack.c.l.b16 %v654
        %v1463 = vunpack.c.h.b16 %v654
        %v1464 = vunpack.c.l.b16 %v655
        %v1465 = vunpack.c.h.b16 %v655
        %v1466 = vunpack.c.l.b16 %v656
        %v1467 = vunpack.c.h.b16 %v656
        %v1468 = vunpack.c.l.b16 %v657
        %v1469 = vunpack.c.h.b16 %v657
        %v1470 = vunpack.c.l.b16 %v658
        %v1471 = vunpack.c.h.b16 %v658
        %v1472 = vunpack.c.l.b16 %v659
        %v1473 = vunpack.c.h.b16 %v659
        %v1474 = vunpack.c.l.b16 %v660
        %v1475 = vunpack.c.h.b16 %v660
        %v1476 = vunpack.c.l.b16 %v661
        %v1477 = vunpack.c.h.b16 %v661
        %v1478 = vunpack.c.l.b16 %v662
        %v1479 = vunpack.c.h.b16 %v662
        %v1480 = vunpack.c.l.b16 %v663
        %v1481 = vunpack.c.h.b16 %v663
        %v1482 = vunpack.c.l.b16 %v664
        %v1483 = vunpack.c.h.b16 %v664
        %v1484 = vunpack.c.l.b16 %v665
        %v1485 = vunpack.c.h.b16 %v665
        %v1486 = vunpack.c.l.b16 %v666
        %v1487 = vunpack.c.h.b16 %v666
        %v1488 = vunpack.c.l.b16 %v667
        %v1489 = vunpack.c.h.b16 %v667
        %v1490 = vunpack.c.l.b16 %v668
        %v1491 = vunpack.c.h.b16 %v668
        %v1492 = vunpack.c.l.b16 %v669
        %v1493 = vunpack.c.h.b16 %v669
        %v1494 = vunpack.c.l.b16 %v670
        %v1495 = vunpack.c.h.b16 %v670
        %v1496 = vunpack.c.l.b16 %v671
        %v1497 = vunpack.c.h.b16 %v671
        %v1498 = vunpack.c.l.b16 %v672
        %v1499 = vunpack.c.h.b16 %v672
        %v1500 = vunpack.c.l.b16 %v673
        %v1501 = vunpack.c.h.b16 %v673
        %v1502 = vunpack.c.l.b16 %v674
        %v1503 = vunpack.c.h.b16 %v674
        %v1504 = vunpack.c.l.b16 %v675
        %v1505 = vunpack.c.h.b16 %v675
        %v1506 = vunpack.c.l.b16 %v676
        %v1507 = vunpack.c.h.b16 %v676
        %v1508 = vunpack.c.l.b16 %v677
        %v1509 = vunpack.c.h.b16 %v677
        %v1510 = vpack.c.b16 %v1384, %v1382
        %v1511 = vpack.c.b16 %v1385, %v1383
        %v1512 = vpack.c.b16 %v1388, %v1386
        %v1513 = vpack.c.b16 %v1389, %v1387
        %v1514 = vpack.c.b16 %v1392, %v1390
        %v1515 = vpack.c.b16 %v1393, %v1391
        %v1516 = vpack.c.b16 %v1396, %v1394
        %v1517 = vpack.c.b16 %v1397, %v1395
        %v1518 = vpack.c.b16 %v1400, %v1398
        %v1519 = vpack.c.b16 %v1401, %v1399
        %v1520 = vpack.c.b16 %v1404, %v1402
        %v1521 = vpack.c.b16 %v1405, %v1403
        %v1522 = vpack.c.b16 %v1408, %v1406
        %v1523 = vpack.c.b16 %v1409, %v1407
        %v1524 = vpack.c.b16 %v1412, %v1410
        %v1525 = vpack.c.b16 %v1413, %v1411
        %v1526 = vpack.c.b16 %v1416, %v1414
        %v1527 = vpack.c.b16 %v1417, %v1415
        %v1528 = vpack.c.b16 %v1420, %v1418
        %v1529 = vpack.c.b16 %v1421, %v1419
        %v1530 = vpack.c.b16 %v1424, %v1422
        %v1531 = vpack.c.b16 %v1425, %v1423
        %v1532 = vpack.c.b16 %v1428, %v1426
        %v1533 = vpack.c.b16 %v1429, %v1427
        %v1534 = vpack.c.b16 %v1432, %v1430
        %v1535 = vpack.c.b16 %v1433, %v1431
        %v1536 = vpack.c.b16 %v1436, %v1434
        %v1537 = vpack.c.b16 %v1437, %v1435
        %v1538 = vpack.c.b16 %v1440, %v1438
        %v1539 = vpack.c.b16 %v1441, %v1439
        %v1540 = vpack.c.b16 %v1444, %v1442
        %v1541 = vpack.c.b16 %v1445, %v1443
        %v1542 = vpack.c.b16 %v1448, %v1446
        %v1543 = vpack.c.b16 %v1449, %v1447
        %v1544 = vpack.c.b16 %v1452, %v1450
        %v1545 = vpack.c.b16 %v1453, %v1451
        %v1546 = vpack.c.b16 %v1456, %v1454
        %v1547 = vpack.c.b16 %v1457, %v1455
        %v1548 = vpack.c.b16 %v1460, %v1458
        %v1549 = vpack.c.b16 %v1461, %v1459
        %v1550 = vpack.c.b16 %v1464, %v1462
        %v1551 = vpack.c.b16 %v1465, %v1463
        %v1552 = vpack.c.b16 %v1468, %v1466
        %v1553 = vpack.c.b16 %v1469, %v1467
        %v1554 = vpack.c.b16 %v1472, %v1470
        %v1555 = vpack.c.b16 %v1473, %v1471
        %v1556 = vpack.c.b16 %v1476, %v1474
        %v1557 = vpack.c.b16 %v1477, %v1475
        %v1558 = vpack.c.b16 %v1480, %v1478
        %v1559 = vpack.c.b16 %v1481, %v1479
        %v1560 = vpack.c.b16 %v1484, %v1482
        %v1561 = vpack.c.b16 %v1485, %v1483
        %v1562 = vpack.c.b16 %v1488, %v1486
        %v1563 = vpack.c.b16 %v1489, %v1487
        %v1564 = vpack.c.b16 %v1492, %v1490
        %v1565 = vpack.c.b16 %v1493, %v1491
        %v1566 = vpack.c.b16 %v1496, %v1494
        %v1567 = vpack.c.b16 %v1497, %v1495
        %v1568 = vpack.c.b16 %v1500, %v1498
        %v1569 = vpack.c.b16 %v1501, %v1499
        %v1570 = vpack.c.b16 %v1504, %v1502
        %v1571 = vpack.c.b16 %v1505, %v1503
        %v1572 = vpack.c.b16 %v1508, %v1506
        %v1573 = vpack.c.b16 %v1509, %v1507
        %1638 = vmatpush.bf16.msra.mxu0 %v1524
        %1639 = vmatpush.bf16.msra.mxu0 %v1522
        %1640 = vmatpush.bf16.msra.mxu0 %v1520
        %1641 = vmatpush.bf16.msra.mxu0 %v1518
        %1642 = vmatpush.bf16.msra.mxu0 %v1516
        %1643 = vmatpush.bf16.msra.mxu0 %v1514
        %1644 = vmatpush.bf16.msra.mxu0 %v1512
        %1645 = vmatpush.bf16.msra.mxu0 %v1510
        %1646 = vmatmul.bf16.gmra.mxu0 %v1062
        %v1647 = vpop.f32.mrf.mxu0
        %v1648 = vadd.f32 0.0, %v1647
        %v1649 = vpop.f32.mrf.mxu0
        %v1650 = vadd.f32 0.0, %v1649
        %1651 = vmatmul.bf16.gmra.mxu0 %v1066
        %v1652 = vpop.f32.mrf.mxu0
        %v1653 = vadd.f32 0.0, %v1652
        %v1654 = vpop.f32.mrf.mxu0
        %v1655 = vadd.f32 0.0, %v1654
        %1656 = vmatmul.bf16.gmra.mxu0 %v1070
        %v1657 = vpop.f32.mrf.mxu0
        %v1658 = vadd.f32 0.0, %v1657
        %v1659 = vpop.f32.mrf.mxu0
        %v1660 = vadd.f32 0.0, %v1659
        %1661 = vmatmul.bf16.gmra.mxu0 %v1074
        %v1662 = vpop.f32.mrf.mxu0
        %v1663 = vadd.f32 0.0, %v1662
        %v1664 = vpop.f32.mrf.mxu0
        %v1665 = vadd.f32 0.0, %v1664
        %1666 = vmatmul.bf16.gmra.mxu0 %v1078
        %v1667 = vpop.f32.mrf.mxu0
        %v1668 = vadd.f32 0.0, %v1667
        %v1669 = vpop.f32.mrf.mxu0
        %v1670 = vadd.f32 0.0, %v1669
        %1671 = vmatmul.bf16.gmra.mxu0 %v1082
        %v1672 = vpop.f32.mrf.mxu0
        %v1673 = vadd.f32 0.0, %v1672
        %v1674 = vpop.f32.mrf.mxu0
        %v1675 = vadd.f32 0.0, %v1674
        %1676 = vmatmul.bf16.gmra.mxu0 %v1086
        %v1677 = vpop.f32.mrf.mxu0
        %v1678 = vadd.f32 0.0, %v1677
        %v1679 = vpop.f32.mrf.mxu0
        %v1680 = vadd.f32 0.0, %v1679
        %1681 = vmatmul.bf16.gmra.mxu0 %v1090
        %v1682 = vpop.f32.mrf.mxu0
        %v1683 = vadd.f32 0.0, %v1682
        %v1684 = vpop.f32.mrf.mxu0
        %v1685 = vadd.f32 0.0, %v1684
        %1686 = vmatmul.bf16.gmra.mxu0 %v1094
        %v1687 = vpop.f32.mrf.mxu0
        %v1688 = vadd.f32 0.0, %v1687
        %v1689 = vpop.f32.mrf.mxu0
        %v1690 = vadd.f32 0.0, %v1689
        %1691 = vmatmul.bf16.gmra.mxu0 %v1098
        %v1692 = vpop.f32.mrf.mxu0
        %v1693 = vadd.f32 0.0, %v1692
        %v1694 = vpop.f32.mrf.mxu0
        %v1695 = vadd.f32 0.0, %v1694
        %1696 = vmatmul.bf16.gmra.mxu0 %v1102
        %v1697 = vpop.f32.mrf.mxu0
        %v1698 = vadd.f32 0.0, %v1697
        %v1699 = vpop.f32.mrf.mxu0
        %v1700 = vadd.f32 0.0, %v1699
        %1701 = vmatmul.bf16.gmra.mxu0 %v1106
        %v1702 = vpop.f32.mrf.mxu0
        %v1703 = vadd.f32 0.0, %v1702
        %v1704 = vpop.f32.mrf.mxu0
        %v1705 = vadd.f32 0.0, %v1704
        %1706 = vmatmul.bf16.gmra.mxu0 %v1110
        %v1707 = vpop.f32.mrf.mxu0
        %v1708 = vadd.f32 0.0, %v1707
        %v1709 = vpop.f32.mrf.mxu0
        %v1710 = vadd.f32 0.0, %v1709
        %1711 = vmatmul.bf16.gmra.mxu0 %v1114
        %v1712 = vpop.f32.mrf.mxu0
        %v1713 = vadd.f32 0.0, %v1712
        %v1714 = vpop.f32.mrf.mxu0
        %v1715 = vadd.f32 0.0, %v1714
        %1716 = vmatmul.bf16.gmra.mxu0 %v1118
        %v1717 = vpop.f32.mrf.mxu0
        %v1718 = vadd.f32 0.0, %v1717
        %v1719 = vpop.f32.mrf.mxu0
        %v1720 = vadd.f32 0.0, %v1719
        %1721 = vmatmul.bf16.gmra.mxu0 %v1122
        %v1722 = vpop.f32.mrf.mxu0
        %v1723 = vadd.f32 0.0, %v1722
        %v1724 = vpop.f32.mrf.mxu0
        %v1725 = vadd.f32 0.0, %v1724
        %1726 = vmatmul.bf16.gmra.mxu0 %v1126
        %v1727 = vpop.f32.mrf.mxu0
        %v1728 = vadd.f32 0.0, %v1727
        %v1729 = vpop.f32.mrf.mxu0
        %v1730 = vadd.f32 0.0, %v1729
        %1731 = vmatmul.bf16.gmra.mxu0 %v1130
        %v1732 = vpop.f32.mrf.mxu0
        %v1733 = vadd.f32 0.0, %v1732
        %v1734 = vpop.f32.mrf.mxu0
        %v1735 = vadd.f32 0.0, %v1734
        %1736 = vmatmul.bf16.gmra.mxu0 %v1134
        %v1737 = vpop.f32.mrf.mxu0
        %v1738 = vadd.f32 0.0, %v1737
        %v1739 = vpop.f32.mrf.mxu0
        %v1740 = vadd.f32 0.0, %v1739
        %1741 = vmatmul.bf16.gmra.mxu0 %v1138
        %v1742 = vpop.f32.mrf.mxu0
        %v1743 = vadd.f32 0.0, %v1742
        %v1744 = vpop.f32.mrf.mxu0
        %v1745 = vadd.f32 0.0, %v1744
        %1746 = vmatmul.bf16.gmra.mxu0 %v1142
        %v1747 = vpop.f32.mrf.mxu0
        %v1748 = vadd.f32 0.0, %v1747
        %v1749 = vpop.f32.mrf.mxu0
        %v1750 = vadd.f32 0.0, %v1749
        %1751 = vmatmul.bf16.gmra.mxu0 %v1146
        %v1752 = vpop.f32.mrf.mxu0
        %v1753 = vadd.f32 0.0, %v1752
        %v1754 = vpop.f32.mrf.mxu0
        %v1755 = vadd.f32 0.0, %v1754
        %1756 = vmatmul.bf16.gmra.mxu0 %v1150
        %v1757 = vpop.f32.mrf.mxu0
        %v1758 = vadd.f32 0.0, %v1757
        %v1759 = vpop.f32.mrf.mxu0
        %v1760 = vadd.f32 0.0, %v1759
        %1761 = vmatmul.bf16.gmra.mxu0 %v1154
        %v1762 = vpop.f32.mrf.mxu0
        %v1763 = vadd.f32 0.0, %v1762
        %v1764 = vpop.f32.mrf.mxu0
        %v1765 = vadd.f32 0.0, %v1764
        %1766 = vmatmul.bf16.gmra.mxu0 %v1158
        %v1767 = vpop.f32.mrf.mxu0
        %v1768 = vadd.f32 0.0, %v1767
        %v1769 = vpop.f32.mrf.mxu0
        %v1770 = vadd.f32 0.0, %v1769
        %1771 = vmatmul.bf16.gmra.mxu0 %v1162
        %v1772 = vpop.f32.mrf.mxu0
        %v1773 = vadd.f32 0.0, %v1772
        %v1774 = vpop.f32.mrf.mxu0
        %v1775 = vadd.f32 0.0, %v1774
        %1776 = vmatmul.bf16.gmra.mxu0 %v1166
        %v1777 = vpop.f32.mrf.mxu0
        %v1778 = vadd.f32 0.0, %v1777
        %v1779 = vpop.f32.mrf.mxu0
        %v1780 = vadd.f32 0.0, %v1779
        %1781 = vmatmul.bf16.gmra.mxu0 %v1170
        %v1782 = vpop.f32.mrf.mxu0
        %v1783 = vadd.f32 0.0, %v1782
        %v1784 = vpop.f32.mrf.mxu0
        %v1785 = vadd.f32 0.0, %v1784
        %1786 = vmatmul.bf16.gmra.mxu0 %v1174
        %v1787 = vpop.f32.mrf.mxu0
        %v1788 = vadd.f32 0.0, %v1787
        %v1789 = vpop.f32.mrf.mxu0
        %v1790 = vadd.f32 0.0, %v1789
        %1791 = vmatmul.bf16.gmra.mxu0 %v1178
        %v1792 = vpop.f32.mrf.mxu0
        %v1793 = vadd.f32 0.0, %v1792
        %v1794 = vpop.f32.mrf.mxu0
        %v1795 = vadd.f32 0.0, %v1794
        %1796 = vmatmul.bf16.gmra.mxu0 %v1182
        %v1797 = vpop.f32.mrf.mxu0
        %v1798 = vadd.f32 0.0, %v1797
        %v1799 = vpop.f32.mrf.mxu0
        %v1800 = vadd.f32 0.0, %v1799
        %1801 = vmatmul.bf16.gmra.mxu0 %v1186
        %v1802 = vpop.f32.mrf.mxu0
        %v1803 = vadd.f32 0.0, %v1802
        %v1804 = vpop.f32.mrf.mxu0
        %v1805 = vadd.f32 0.0, %v1804
        %1806 = vdwg.mxu0
        %1807 = vmatpush.bf16.msra.mxu0 %v1540
        %1808 = vmatpush.bf16.msra.mxu0 %v1538
        %1809 = vmatpush.bf16.msra.mxu0 %v1536
        %1810 = vmatpush.bf16.msra.mxu0 %v1534
        %1811 = vmatpush.bf16.msra.mxu0 %v1532
        %1812 = vmatpush.bf16.msra.mxu0 %v1530
        %1813 = vmatpush.bf16.msra.mxu0 %v1528
        %1814 = vmatpush.bf16.msra.mxu0 %v1526
        %1815 = vmatmul.bf16.gmra.mxu0 %v1063
        %v1816 = vpop.f32.mrf.mxu0
        %v1817 = vadd.f32 %v1648, %v1816
        %v1818 = vpop.f32.mrf.mxu0
        %v1819 = vadd.f32 %v1650, %v1818
        %1820 = vmatmul.bf16.gmra.mxu0 %v1067
        %v1821 = vpop.f32.mrf.mxu0
        %v1822 = vadd.f32 %v1653, %v1821
        %v1823 = vpop.f32.mrf.mxu0
        %v1824 = vadd.f32 %v1655, %v1823
        %1825 = vmatmul.bf16.gmra.mxu0 %v1071
        %v1826 = vpop.f32.mrf.mxu0
        %v1827 = vadd.f32 %v1658, %v1826
        %v1828 = vpop.f32.mrf.mxu0
        %v1829 = vadd.f32 %v1660, %v1828
        %1830 = vmatmul.bf16.gmra.mxu0 %v1075
        %v1831 = vpop.f32.mrf.mxu0
        %v1832 = vadd.f32 %v1663, %v1831
        %v1833 = vpop.f32.mrf.mxu0
        %v1834 = vadd.f32 %v1665, %v1833
        %1835 = vmatmul.bf16.gmra.mxu0 %v1079
        %v1836 = vpop.f32.mrf.mxu0
        %v1837 = vadd.f32 %v1668, %v1836
        %v1838 = vpop.f32.mrf.mxu0
        %v1839 = vadd.f32 %v1670, %v1838
        %1840 = vmatmul.bf16.gmra.mxu0 %v1083
        %v1841 = vpop.f32.mrf.mxu0
        %v1842 = vadd.f32 %v1673, %v1841
        %v1843 = vpop.f32.mrf.mxu0
        %v1844 = vadd.f32 %v1675, %v1843
        %1845 = vmatmul.bf16.gmra.mxu0 %v1087
        %v1846 = vpop.f32.mrf.mxu0
        %v1847 = vadd.f32 %v1678, %v1846
        %v1848 = vpop.f32.mrf.mxu0
        %v1849 = vadd.f32 %v1680, %v1848
        %1850 = vmatmul.bf16.gmra.mxu0 %v1091
        %v1851 = vpop.f32.mrf.mxu0
        %v1852 = vadd.f32 %v1683, %v1851
        %v1853 = vpop.f32.mrf.mxu0
        %v1854 = vadd.f32 %v1685, %v1853
        %1855 = vmatmul.bf16.gmra.mxu0 %v1095
        %v1856 = vpop.f32.mrf.mxu0
        %v1857 = vadd.f32 %v1688, %v1856
        %v1858 = vpop.f32.mrf.mxu0
        %v1859 = vadd.f32 %v1690, %v1858
        %1860 = vmatmul.bf16.gmra.mxu0 %v1099
        %v1861 = vpop.f32.mrf.mxu0
        %v1862 = vadd.f32 %v1693, %v1861
        %v1863 = vpop.f32.mrf.mxu0
        %v1864 = vadd.f32 %v1695, %v1863
        %1865 = vmatmul.bf16.gmra.mxu0 %v1103
        %v1866 = vpop.f32.mrf.mxu0
        %v1867 = vadd.f32 %v1698, %v1866
        %v1868 = vpop.f32.mrf.mxu0
        %v1869 = vadd.f32 %v1700, %v1868
        %1870 = vmatmul.bf16.gmra.mxu0 %v1107
        %v1871 = vpop.f32.mrf.mxu0
        %v1872 = vadd.f32 %v1703, %v1871
        %v1873 = vpop.f32.mrf.mxu0
        %v1874 = vadd.f32 %v1705, %v1873
        %1875 = vmatmul.bf16.gmra.mxu0 %v1111
        %v1876 = vpop.f32.mrf.mxu0
        %v1877 = vadd.f32 %v1708, %v1876
        %v1878 = vpop.f32.mrf.mxu0
        %v1879 = vadd.f32 %v1710, %v1878
        %1880 = vmatmul.bf16.gmra.mxu0 %v1115
        %v1881 = vpop.f32.mrf.mxu0
        %v1882 = vadd.f32 %v1713, %v1881
        %v1883 = vpop.f32.mrf.mxu0
        %v1884 = vadd.f32 %v1715, %v1883
        %1885 = vmatmul.bf16.gmra.mxu0 %v1119
        %v1886 = vpop.f32.mrf.mxu0
        %v1887 = vadd.f32 %v1718, %v1886
        %v1888 = vpop.f32.mrf.mxu0
        %v1889 = vadd.f32 %v1720, %v1888
        %1890 = vmatmul.bf16.gmra.mxu0 %v1123
        %v1891 = vpop.f32.mrf.mxu0
        %v1892 = vadd.f32 %v1723, %v1891
        %v1893 = vpop.f32.mrf.mxu0
        %v1894 = vadd.f32 %v1725, %v1893
        %1895 = vmatmul.bf16.gmra.mxu0 %v1127
        %v1896 = vpop.f32.mrf.mxu0
        %v1897 = vadd.f32 %v1728, %v1896
        %v1898 = vpop.f32.mrf.mxu0
        %v1899 = vadd.f32 %v1730, %v1898
        %1900 = vmatmul.bf16.gmra.mxu0 %v1131
        %v1901 = vpop.f32.mrf.mxu0
        %v1902 = vadd.f32 %v1733, %v1901
        %v1903 = vpop.f32.mrf.mxu0
        %v1904 = vadd.f32 %v1735, %v1903
        %1905 = vmatmul.bf16.gmra.mxu0 %v1135
        %v1906 = vpop.f32.mrf.mxu0
        %v1907 = vadd.f32 %v1738, %v1906
        %v1908 = vpop.f32.mrf.mxu0
        %v1909 = vadd.f32 %v1740, %v1908
        %1910 = vmatmul.bf16.gmra.mxu0 %v1139
        %v1911 = vpop.f32.mrf.mxu0
        %v1912 = vadd.f32 %v1743, %v1911
        %v1913 = vpop.f32.mrf.mxu0
        %v1914 = vadd.f32 %v1745, %v1913
        %1915 = vmatmul.bf16.gmra.mxu0 %v1143
        %v1916 = vpop.f32.mrf.mxu0
        %v1917 = vadd.f32 %v1748, %v1916
        %v1918 = vpop.f32.mrf.mxu0
        %v1919 = vadd.f32 %v1750, %v1918
        %1920 = vmatmul.bf16.gmra.mxu0 %v1147
        %v1921 = vpop.f32.mrf.mxu0
        %v1922 = vadd.f32 %v1753, %v1921
        %v1923 = vpop.f32.mrf.mxu0
        %v1924 = vadd.f32 %v1755, %v1923
        %1925 = vmatmul.bf16.gmra.mxu0 %v1151
        %v1926 = vpop.f32.mrf.mxu0
        %v1927 = vadd.f32 %v1758, %v1926
        %v1928 = vpop.f32.mrf.mxu0
        %v1929 = vadd.f32 %v1760, %v1928
        %1930 = vmatmul.bf16.gmra.mxu0 %v1155
        %v1931 = vpop.f32.mrf.mxu0
        %v1932 = vadd.f32 %v1763, %v1931
        %v1933 = vpop.f32.mrf.mxu0
        %v1934 = vadd.f32 %v1765, %v1933
        %1935 = vmatmul.bf16.gmra.mxu0 %v1159
        %v1936 = vpop.f32.mrf.mxu0
        %v1937 = vadd.f32 %v1768, %v1936
        %v1938 = vpop.f32.mrf.mxu0
        %v1939 = vadd.f32 %v1770, %v1938
        %1940 = vmatmul.bf16.gmra.mxu0 %v1163
        %v1941 = vpop.f32.mrf.mxu0
        %v1942 = vadd.f32 %v1773, %v1941
        %v1943 = vpop.f32.mrf.mxu0
        %v1944 = vadd.f32 %v1775, %v1943
        %1945 = vmatmul.bf16.gmra.mxu0 %v1167
        %v1946 = vpop.f32.mrf.mxu0
        %v1947 = vadd.f32 %v1778, %v1946
        %v1948 = vpop.f32.mrf.mxu0
        %v1949 = vadd.f32 %v1780, %v1948
        %1950 = vmatmul.bf16.gmra.mxu0 %v1171
        %v1951 = vpop.f32.mrf.mxu0
        %v1952 = vadd.f32 %v1783, %v1951
        %v1953 = vpop.f32.mrf.mxu0
        %v1954 = vadd.f32 %v1785, %v1953
        %1955 = vmatmul.bf16.gmra.mxu0 %v1175
        %v1956 = vpop.f32.mrf.mxu0
        %v1957 = vadd.f32 %v1788, %v1956
        %v1958 = vpop.f32.mrf.mxu0
        %v1959 = vadd.f32 %v1790, %v1958
        %1960 = vmatmul.bf16.gmra.mxu0 %v1179
        %v1961 = vpop.f32.mrf.mxu0
        %v1962 = vadd.f32 %v1793, %v1961
        %v1963 = vpop.f32.mrf.mxu0
        %v1964 = vadd.f32 %v1795, %v1963
        %1965 = vmatmul.bf16.gmra.mxu0 %v1183
        %v1966 = vpop.f32.mrf.mxu0
        %v1967 = vadd.f32 %v1798, %v1966
        %v1968 = vpop.f32.mrf.mxu0
        %v1969 = vadd.f32 %v1800, %v1968
        %1970 = vmatmul.bf16.gmra.mxu0 %v1187
        %v1971 = vpop.f32.mrf.mxu0
        %v1972 = vadd.f32 %v1803, %v1971
        %v1973 = vpop.f32.mrf.mxu0
        %v1974 = vadd.f32 %v1805, %v1973
        %1975 = vdwg.mxu0
        %1976 = vmatpush.bf16.msra.mxu0 %v1556
        %1977 = vmatpush.bf16.msra.mxu0 %v1554
        %1978 = vmatpush.bf16.msra.mxu0 %v1552
        %1979 = vmatpush.bf16.msra.mxu0 %v1550
        %1980 = vmatpush.bf16.msra.mxu0 %v1548
        %1981 = vmatpush.bf16.msra.mxu0 %v1546
        %1982 = vmatpush.bf16.msra.mxu0 %v1544
        %1983 = vmatpush.bf16.msra.mxu0 %v1542
        %1984 = vmatmul.bf16.gmra.mxu0 %v1064
        %v1985 = vpop.f32.mrf.mxu0
        %v1986 = vadd.f32 %v1817, %v1985
        %v1987 = vpop.f32.mrf.mxu0
        %v1988 = vadd.f32 %v1819, %v1987
        %1989 = vmatmul.bf16.gmra.mxu0 %v1068
        %v1990 = vpop.f32.mrf.mxu0
        %v1991 = vadd.f32 %v1822, %v1990
        %v1992 = vpop.f32.mrf.mxu0
        %v1993 = vadd.f32 %v1824, %v1992
        %1994 = vmatmul.bf16.gmra.mxu0 %v1072
        %v1995 = vpop.f32.mrf.mxu0
        %v1996 = vadd.f32 %v1827, %v1995
        %v1997 = vpop.f32.mrf.mxu0
        %v1998 = vadd.f32 %v1829, %v1997
        %1999 = vmatmul.bf16.gmra.mxu0 %v1076
        %v2000 = vpop.f32.mrf.mxu0
        %v2001 = vadd.f32 %v1832, %v2000
        %v2002 = vpop.f32.mrf.mxu0
        %v2003 = vadd.f32 %v1834, %v2002
        %2004 = vmatmul.bf16.gmra.mxu0 %v1080
        %v2005 = vpop.f32.mrf.mxu0
        %v2006 = vadd.f32 %v1837, %v2005
        %v2007 = vpop.f32.mrf.mxu0
        %v2008 = vadd.f32 %v1839, %v2007
        %2009 = vmatmul.bf16.gmra.mxu0 %v1084
        %v2010 = vpop.f32.mrf.mxu0
        %v2011 = vadd.f32 %v1842, %v2010
        %v2012 = vpop.f32.mrf.mxu0
        %v2013 = vadd.f32 %v1844, %v2012
        %2014 = vmatmul.bf16.gmra.mxu0 %v1088
        %v2015 = vpop.f32.mrf.mxu0
        %v2016 = vadd.f32 %v1847, %v2015
        %v2017 = vpop.f32.mrf.mxu0
        %v2018 = vadd.f32 %v1849, %v2017
        %2019 = vmatmul.bf16.gmra.mxu0 %v1092
        %v2020 = vpop.f32.mrf.mxu0
        %v2021 = vadd.f32 %v1852, %v2020
        %v2022 = vpop.f32.mrf.mxu0
        %v2023 = vadd.f32 %v1854, %v2022
        %2024 = vmatmul.bf16.gmra.mxu0 %v1096
        %v2025 = vpop.f32.mrf.mxu0
        %v2026 = vadd.f32 %v1857, %v2025
        %v2027 = vpop.f32.mrf.mxu0
        %v2028 = vadd.f32 %v1859, %v2027
        %2029 = vmatmul.bf16.gmra.mxu0 %v1100
        %v2030 = vpop.f32.mrf.mxu0
        %v2031 = vadd.f32 %v1862, %v2030
        %v2032 = vpop.f32.mrf.mxu0
        %v2033 = vadd.f32 %v1864, %v2032
        %2034 = vmatmul.bf16.gmra.mxu0 %v1104
        %v2035 = vpop.f32.mrf.mxu0
        %v2036 = vadd.f32 %v1867, %v2035
        %v2037 = vpop.f32.mrf.mxu0
        %v2038 = vadd.f32 %v1869, %v2037
        %2039 = vmatmul.bf16.gmra.mxu0 %v1108
        %v2040 = vpop.f32.mrf.mxu0
        %v2041 = vadd.f32 %v1872, %v2040
        %v2042 = vpop.f32.mrf.mxu0
        %v2043 = vadd.f32 %v1874, %v2042
        %2044 = vmatmul.bf16.gmra.mxu0 %v1112
        %v2045 = vpop.f32.mrf.mxu0
        %v2046 = vadd.f32 %v1877, %v2045
        %v2047 = vpop.f32.mrf.mxu0
        %v2048 = vadd.f32 %v1879, %v2047
        %2049 = vmatmul.bf16.gmra.mxu0 %v1116
        %v2050 = vpop.f32.mrf.mxu0
        %v2051 = vadd.f32 %v1882, %v2050
        %v2052 = vpop.f32.mrf.mxu0
        %v2053 = vadd.f32 %v1884, %v2052
        %2054 = vmatmul.bf16.gmra.mxu0 %v1120
        %v2055 = vpop.f32.mrf.mxu0
        %v2056 = vadd.f32 %v1887, %v2055
        %v2057 = vpop.f32.mrf.mxu0
        %v2058 = vadd.f32 %v1889, %v2057
        %2059 = vmatmul.bf16.gmra.mxu0 %v1124
        %v2060 = vpop.f32.mrf.mxu0
        %v2061 = vadd.f32 %v1892, %v2060
        %v2062 = vpop.f32.mrf.mxu0
        %v2063 = vadd.f32 %v1894, %v2062
        %2064 = vmatmul.bf16.gmra.mxu0 %v1128
        %v2065 = vpop.f32.mrf.mxu0
        %v2066 = vadd.f32 %v1897, %v2065
        %v2067 = vpop.f32.mrf.mxu0
        %v2068 = vadd.f32 %v1899, %v2067
        %2069 = vmatmul.bf16.gmra.mxu0 %v1132
        %v2070 = vpop.f32.mrf.mxu0
        %v2071 = vadd.f32 %v1902, %v2070
        %v2072 = vpop.f32.mrf.mxu0
        %v2073 = vadd.f32 %v1904, %v2072
        %2074 = vmatmul.bf16.gmra.mxu0 %v1136
        %v2075 = vpop.f32.mrf.mxu0
        %v2076 = vadd.f32 %v1907, %v2075
        %v2077 = vpop.f32.mrf.mxu0
        %v2078 = vadd.f32 %v1909, %v2077
        %2079 = vmatmul.bf16.gmra.mxu0 %v1140
        %v2080 = vpop.f32.mrf.mxu0
        %v2081 = vadd.f32 %v1912, %v2080
        %v2082 = vpop.f32.mrf.mxu0
        %v2083 = vadd.f32 %v1914, %v2082
        %2084 = vmatmul.bf16.gmra.mxu0 %v1144
        %v2085 = vpop.f32.mrf.mxu0
        %v2086 = vadd.f32 %v1917, %v2085
        %v2087 = vpop.f32.mrf.mxu0
        %v2088 = vadd.f32 %v1919, %v2087
        %2089 = vmatmul.bf16.gmra.mxu0 %v1148
        %v2090 = vpop.f32.mrf.mxu0
        %v2091 = vadd.f32 %v1922, %v2090
        %v2092 = vpop.f32.mrf.mxu0
        %v2093 = vadd.f32 %v1924, %v2092
        %2094 = vmatmul.bf16.gmra.mxu0 %v1152
        %v2095 = vpop.f32.mrf.mxu0
        %v2096 = vadd.f32 %v1927, %v2095
        %v2097 = vpop.f32.mrf.mxu0
        %v2098 = vadd.f32 %v1929, %v2097
        %2099 = vmatmul.bf16.gmra.mxu0 %v1156
        %v2100 = vpop.f32.mrf.mxu0
        %v2101 = vadd.f32 %v1932, %v2100
        %v2102 = vpop.f32.mrf.mxu0
        %v2103 = vadd.f32 %v1934, %v2102
        %2104 = vmatmul.bf16.gmra.mxu0 %v1160
        %v2105 = vpop.f32.mrf.mxu0
        %v2106 = vadd.f32 %v1937, %v2105
        %v2107 = vpop.f32.mrf.mxu0
        %v2108 = vadd.f32 %v1939, %v2107
        %2109 = vmatmul.bf16.gmra.mxu0 %v1164
        %v2110 = vpop.f32.mrf.mxu0
        %v2111 = vadd.f32 %v1942, %v2110
        %v2112 = vpop.f32.mrf.mxu0
        %v2113 = vadd.f32 %v1944, %v2112
        %2114 = vmatmul.bf16.gmra.mxu0 %v1168
        %v2115 = vpop.f32.mrf.mxu0
        %v2116 = vadd.f32 %v1947, %v2115
        %v2117 = vpop.f32.mrf.mxu0
        %v2118 = vadd.f32 %v1949, %v2117
        %2119 = vmatmul.bf16.gmra.mxu0 %v1172
        %v2120 = vpop.f32.mrf.mxu0
        %v2121 = vadd.f32 %v1952, %v2120
        %v2122 = vpop.f32.mrf.mxu0
        %v2123 = vadd.f32 %v1954, %v2122
        %2124 = vmatmul.bf16.gmra.mxu0 %v1176
        %v2125 = vpop.f32.mrf.mxu0
        %v2126 = vadd.f32 %v1957, %v2125
        %v2127 = vpop.f32.mrf.mxu0
        %v2128 = vadd.f32 %v1959, %v2127
        %2129 = vmatmul.bf16.gmra.mxu0 %v1180
        %v2130 = vpop.f32.mrf.mxu0
        %v2131 = vadd.f32 %v1962, %v2130
        %v2132 = vpop.f32.mrf.mxu0
        %v2133 = vadd.f32 %v1964, %v2132
        %2134 = vmatmul.bf16.gmra.mxu0 %v1184
        %v2135 = vpop.f32.mrf.mxu0
        %v2136 = vadd.f32 %v1967, %v2135
        %v2137 = vpop.f32.mrf.mxu0
        %v2138 = vadd.f32 %v1969, %v2137
        %2139 = vmatmul.bf16.gmra.mxu0 %v1188
        %v2140 = vpop.f32.mrf.mxu0
        %v2141 = vadd.f32 %v1972, %v2140
        %v2142 = vpop.f32.mrf.mxu0
        %v2143 = vadd.f32 %v1974, %v2142
        %2144 = vdwg.mxu0
        %2145 = vmatpush.bf16.msra.mxu0 %v1572
        %2146 = vmatpush.bf16.msra.mxu0 %v1570
        %2147 = vmatpush.bf16.msra.mxu0 %v1568
        %2148 = vmatpush.bf16.msra.mxu0 %v1566
        %2149 = vmatpush.bf16.msra.mxu0 %v1564
        %2150 = vmatpush.bf16.msra.mxu0 %v1562
        %2151 = vmatpush.bf16.msra.mxu0 %v1560
        %2152 = vmatpush.bf16.msra.mxu0 %v1558
        %2153 = vmatmul.bf16.gmra.mxu0 %v1065
        %v2154 = vpop.f32.mrf.mxu0
        %v2155 = vadd.f32 %v1986, %v2154
        %v2156 = vpop.f32.mrf.mxu0
        %v2157 = vadd.f32 %v1988, %v2156
        %2158 = vmatmul.bf16.gmra.mxu0 %v1069
        %v2159 = vpop.f32.mrf.mxu0
        %v2160 = vadd.f32 %v1991, %v2159
        %v2161 = vpop.f32.mrf.mxu0
        %v2162 = vadd.f32 %v1993, %v2161
        %2163 = vmatmul.bf16.gmra.mxu0 %v1073
        %v2164 = vpop.f32.mrf.mxu0
        %v2165 = vadd.f32 %v1996, %v2164
        %v2166 = vpop.f32.mrf.mxu0
        %v2167 = vadd.f32 %v1998, %v2166
        %2168 = vmatmul.bf16.gmra.mxu0 %v1077
        %v2169 = vpop.f32.mrf.mxu0
        %v2170 = vadd.f32 %v2001, %v2169
        %v2171 = vpop.f32.mrf.mxu0
        %v2172 = vadd.f32 %v2003, %v2171
        %2173 = vmatmul.bf16.gmra.mxu0 %v1081
        %v2174 = vpop.f32.mrf.mxu0
        %v2175 = vadd.f32 %v2006, %v2174
        %v2176 = vpop.f32.mrf.mxu0
        %v2177 = vadd.f32 %v2008, %v2176
        %2178 = vmatmul.bf16.gmra.mxu0 %v1085
        %v2179 = vpop.f32.mrf.mxu0
        %v2180 = vadd.f32 %v2011, %v2179
        %v2181 = vpop.f32.mrf.mxu0
        %v2182 = vadd.f32 %v2013, %v2181
        %2183 = vmatmul.bf16.gmra.mxu0 %v1089
        %v2184 = vpop.f32.mrf.mxu0
        %v2185 = vadd.f32 %v2016, %v2184
        %v2186 = vpop.f32.mrf.mxu0
        %v2187 = vadd.f32 %v2018, %v2186
        %2188 = vmatmul.bf16.gmra.mxu0 %v1093
        %v2189 = vpop.f32.mrf.mxu0
        %v2190 = vadd.f32 %v2021, %v2189
        %v2191 = vpop.f32.mrf.mxu0
        %v2192 = vadd.f32 %v2023, %v2191
        %2193 = vmatmul.bf16.gmra.mxu0 %v1097
        %v2194 = vpop.f32.mrf.mxu0
        %v2195 = vadd.f32 %v2026, %v2194
        %v2196 = vpop.f32.mrf.mxu0
        %v2197 = vadd.f32 %v2028, %v2196
        %2198 = vmatmul.bf16.gmra.mxu0 %v1101
        %v2199 = vpop.f32.mrf.mxu0
        %v2200 = vadd.f32 %v2031, %v2199
        %v2201 = vpop.f32.mrf.mxu0
        %v2202 = vadd.f32 %v2033, %v2201
        %2203 = vmatmul.bf16.gmra.mxu0 %v1105
        %v2204 = vpop.f32.mrf.mxu0
        %v2205 = vadd.f32 %v2036, %v2204
        %v2206 = vpop.f32.mrf.mxu0
        %v2207 = vadd.f32 %v2038, %v2206
        %2208 = vmatmul.bf16.gmra.mxu0 %v1109
        %v2209 = vpop.f32.mrf.mxu0
        %v2210 = vadd.f32 %v2041, %v2209
        %v2211 = vpop.f32.mrf.mxu0
        %v2212 = vadd.f32 %v2043, %v2211
        %2213 = vmatmul.bf16.gmra.mxu0 %v1113
        %v2214 = vpop.f32.mrf.mxu0
        %v2215 = vadd.f32 %v2046, %v2214
        %v2216 = vpop.f32.mrf.mxu0
        %v2217 = vadd.f32 %v2048, %v2216
        %2218 = vmatmul.bf16.gmra.mxu0 %v1117
        %v2219 = vpop.f32.mrf.mxu0
        %v2220 = vadd.f32 %v2051, %v2219
        %v2221 = vpop.f32.mrf.mxu0
        %v2222 = vadd.f32 %v2053, %v2221
        %2223 = vmatmul.bf16.gmra.mxu0 %v1121
        %v2224 = vpop.f32.mrf.mxu0
        %v2225 = vadd.f32 %v2056, %v2224
        %v2226 = vpop.f32.mrf.mxu0
        %v2227 = vadd.f32 %v2058, %v2226
        %2228 = vmatmul.bf16.gmra.mxu0 %v1125
        %v2229 = vpop.f32.mrf.mxu0
        %v2230 = vadd.f32 %v2061, %v2229
        %v2231 = vpop.f32.mrf.mxu0
        %v2232 = vadd.f32 %v2063, %v2231
        %2233 = vmatmul.bf16.gmra.mxu0 %v1129
        %v2234 = vpop.f32.mrf.mxu0
        %v2235 = vadd.f32 %v2066, %v2234
        %v2236 = vpop.f32.mrf.mxu0
        %v2237 = vadd.f32 %v2068, %v2236
        %2238 = vmatmul.bf16.gmra.mxu0 %v1133
        %v2239 = vpop.f32.mrf.mxu0
        %v2240 = vadd.f32 %v2071, %v2239
        %v2241 = vpop.f32.mrf.mxu0
        %v2242 = vadd.f32 %v2073, %v2241
        %2243 = vmatmul.bf16.gmra.mxu0 %v1137
        %v2244 = vpop.f32.mrf.mxu0
        %v2245 = vadd.f32 %v2076, %v2244
        %v2246 = vpop.f32.mrf.mxu0
        %v2247 = vadd.f32 %v2078, %v2246
        %2248 = vmatmul.bf16.gmra.mxu0 %v1141
        %v2249 = vpop.f32.mrf.mxu0
        %v2250 = vadd.f32 %v2081, %v2249
        %v2251 = vpop.f32.mrf.mxu0
        %v2252 = vadd.f32 %v2083, %v2251
        %2253 = vmatmul.bf16.gmra.mxu0 %v1145
        %v2254 = vpop.f32.mrf.mxu0
        %v2255 = vadd.f32 %v2086, %v2254
        %v2256 = vpop.f32.mrf.mxu0
        %v2257 = vadd.f32 %v2088, %v2256
        %2258 = vmatmul.bf16.gmra.mxu0 %v1149
        %v2259 = vpop.f32.mrf.mxu0
        %v2260 = vadd.f32 %v2091, %v2259
        %v2261 = vpop.f32.mrf.mxu0
        %v2262 = vadd.f32 %v2093, %v2261
        %2263 = vmatmul.bf16.gmra.mxu0 %v1153
        %v2264 = vpop.f32.mrf.mxu0
        %v2265 = vadd.f32 %v2096, %v2264
        %v2266 = vpop.f32.mrf.mxu0
        %v2267 = vadd.f32 %v2098, %v2266
        %2268 = vmatmul.bf16.gmra.mxu0 %v1157
        %v2269 = vpop.f32.mrf.mxu0
        %v2270 = vadd.f32 %v2101, %v2269
        %v2271 = vpop.f32.mrf.mxu0
        %v2272 = vadd.f32 %v2103, %v2271
        %2273 = vmatmul.bf16.gmra.mxu0 %v1161
        %v2274 = vpop.f32.mrf.mxu0
        %v2275 = vadd.f32 %v2106, %v2274
        %v2276 = vpop.f32.mrf.mxu0
        %v2277 = vadd.f32 %v2108, %v2276
        %2278 = vmatmul.bf16.gmra.mxu0 %v1165
        %v2279 = vpop.f32.mrf.mxu0
        %v2280 = vadd.f32 %v2111, %v2279
        %v2281 = vpop.f32.mrf.mxu0
        %v2282 = vadd.f32 %v2113, %v2281
        %2283 = vmatmul.bf16.gmra.mxu0 %v1169
        %v2284 = vpop.f32.mrf.mxu0
        %v2285 = vadd.f32 %v2116, %v2284
        %v2286 = vpop.f32.mrf.mxu0
        %v2287 = vadd.f32 %v2118, %v2286
        %2288 = vmatmul.bf16.gmra.mxu0 %v1173
        %v2289 = vpop.f32.mrf.mxu0
        %v2290 = vadd.f32 %v2121, %v2289
        %v2291 = vpop.f32.mrf.mxu0
        %v2292 = vadd.f32 %v2123, %v2291
        %2293 = vmatmul.bf16.gmra.mxu0 %v1177
        %v2294 = vpop.f32.mrf.mxu0
        %v2295 = vadd.f32 %v2126, %v2294
        %v2296 = vpop.f32.mrf.mxu0
        %v2297 = vadd.f32 %v2128, %v2296
        %2298 = vmatmul.bf16.gmra.mxu0 %v1181
        %v2299 = vpop.f32.mrf.mxu0
        %v2300 = vadd.f32 %v2131, %v2299
        %v2301 = vpop.f32.mrf.mxu0
        %v2302 = vadd.f32 %v2133, %v2301
        %2303 = vmatmul.bf16.gmra.mxu0 %v1185
        %v2304 = vpop.f32.mrf.mxu0
        %v2305 = vadd.f32 %v2136, %v2304
        %v2306 = vpop.f32.mrf.mxu0
        %v2307 = vadd.f32 %v2138, %v2306
        %2308 = vmatmul.bf16.gmra.mxu0 %v1189
        %v2309 = vpop.f32.mrf.mxu0
        %v2310 = vadd.f32 %v2141, %v2309
        %v2311 = vpop.f32.mrf.mxu0
        %v2312 = vadd.f32 %v2143, %v2311
        %2313 = vdwg.mxu0
        %2314 = vmatpush.bf16.msra.mxu0 %v1525
        %2315 = vmatpush.bf16.msra.mxu0 %v1523
        %2316 = vmatpush.bf16.msra.mxu0 %v1521
        %2317 = vmatpush.bf16.msra.mxu0 %v1519
        %2318 = vmatpush.bf16.msra.mxu0 %v1517
        %2319 = vmatpush.bf16.msra.mxu0 %v1515
        %2320 = vmatpush.bf16.msra.mxu0 %v1513
        %2321 = vmatpush.bf16.msra.mxu0 %v1511
        %2322 = vmatmul.bf16.gmra.mxu0 %v1062
        %v2323 = vpop.f32.mrf.mxu0
        %v2324 = vadd.f32 0.0, %v2323
        %v2325 = vpop.f32.mrf.mxu0
        %v2326 = vadd.f32 0.0, %v2325
        %2327 = vmatmul.bf16.gmra.mxu0 %v1066
        %v2328 = vpop.f32.mrf.mxu0
        %v2329 = vadd.f32 0.0, %v2328
        %v2330 = vpop.f32.mrf.mxu0
        %v2331 = vadd.f32 0.0, %v2330
        %2332 = vmatmul.bf16.gmra.mxu0 %v1070
        %v2333 = vpop.f32.mrf.mxu0
        %v2334 = vadd.f32 0.0, %v2333
        %v2335 = vpop.f32.mrf.mxu0
        %v2336 = vadd.f32 0.0, %v2335
        %2337 = vmatmul.bf16.gmra.mxu0 %v1074
        %v2338 = vpop.f32.mrf.mxu0
        %v2339 = vadd.f32 0.0, %v2338
        %v2340 = vpop.f32.mrf.mxu0
        %v2341 = vadd.f32 0.0, %v2340
        %2342 = vmatmul.bf16.gmra.mxu0 %v1078
        %v2343 = vpop.f32.mrf.mxu0
        %v2344 = vadd.f32 0.0, %v2343
        %v2345 = vpop.f32.mrf.mxu0
        %v2346 = vadd.f32 0.0, %v2345
        %2347 = vmatmul.bf16.gmra.mxu0 %v1082
        %v2348 = vpop.f32.mrf.mxu0
        %v2349 = vadd.f32 0.0, %v2348
        %v2350 = vpop.f32.mrf.mxu0
        %v2351 = vadd.f32 0.0, %v2350
        %2352 = vmatmul.bf16.gmra.mxu0 %v1086
        %v2353 = vpop.f32.mrf.mxu0
        %v2354 = vadd.f32 0.0, %v2353
        %v2355 = vpop.f32.mrf.mxu0
        %v2356 = vadd.f32 0.0, %v2355
        %2357 = vmatmul.bf16.gmra.mxu0 %v1090
        %v2358 = vpop.f32.mrf.mxu0
        %v2359 = vadd.f32 0.0, %v2358
        %v2360 = vpop.f32.mrf.mxu0
        %v2361 = vadd.f32 0.0, %v2360
        %2362 = vmatmul.bf16.gmra.mxu0 %v1094
        %v2363 = vpop.f32.mrf.mxu0
        %v2364 = vadd.f32 0.0, %v2363
        %v2365 = vpop.f32.mrf.mxu0
        %v2366 = vadd.f32 0.0, %v2365
        %2367 = vmatmul.bf16.gmra.mxu0 %v1098
        %v2368 = vpop.f32.mrf.mxu0
        %v2369 = vadd.f32 0.0, %v2368
        %v2370 = vpop.f32.mrf.mxu0
        %v2371 = vadd.f32 0.0, %v2370
        %2372 = vmatmul.bf16.gmra.mxu0 %v1102
        %v2373 = vpop.f32.mrf.mxu0
        %v2374 = vadd.f32 0.0, %v2373
        %v2375 = vpop.f32.mrf.mxu0
        %v2376 = vadd.f32 0.0, %v2375
        %2377 = vmatmul.bf16.gmra.mxu0 %v1106
        %v2378 = vpop.f32.mrf.mxu0
        %v2379 = vadd.f32 0.0, %v2378
        %v2380 = vpop.f32.mrf.mxu0
        %v2381 = vadd.f32 0.0, %v2380
        %2382 = vmatmul.bf16.gmra.mxu0 %v1110
        %v2383 = vpop.f32.mrf.mxu0
        %v2384 = vadd.f32 0.0, %v2383
        %v2385 = vpop.f32.mrf.mxu0
        %v2386 = vadd.f32 0.0, %v2385
        %2387 = vmatmul.bf16.gmra.mxu0 %v1114
        %v2388 = vpop.f32.mrf.mxu0
        %v2389 = vadd.f32 0.0, %v2388
        %v2390 = vpop.f32.mrf.mxu0
        %v2391 = vadd.f32 0.0, %v2390
        %2392 = vmatmul.bf16.gmra.mxu0 %v1118
        %v2393 = vpop.f32.mrf.mxu0
        %v2394 = vadd.f32 0.0, %v2393
        %v2395 = vpop.f32.mrf.mxu0
        %v2396 = vadd.f32 0.0, %v2395
        %2397 = vmatmul.bf16.gmra.mxu0 %v1122
        %v2398 = vpop.f32.mrf.mxu0
        %v2399 = vadd.f32 0.0, %v2398
        %v2400 = vpop.f32.mrf.mxu0
        %v2401 = vadd.f32 0.0, %v2400
        %2402 = vmatmul.bf16.gmra.mxu0 %v1126
        %v2403 = vpop.f32.mrf.mxu0
        %v2404 = vadd.f32 0.0, %v2403
        %v2405 = vpop.f32.mrf.mxu0
        %v2406 = vadd.f32 0.0, %v2405
        %2407 = vmatmul.bf16.gmra.mxu0 %v1130
        %v2408 = vpop.f32.mrf.mxu0
        %v2409 = vadd.f32 0.0, %v2408
        %v2410 = vpop.f32.mrf.mxu0
        %v2411 = vadd.f32 0.0, %v2410
        %2412 = vmatmul.bf16.gmra.mxu0 %v1134
        %v2413 = vpop.f32.mrf.mxu0
        %v2414 = vadd.f32 0.0, %v2413
        %v2415 = vpop.f32.mrf.mxu0
        %v2416 = vadd.f32 0.0, %v2415
        %2417 = vmatmul.bf16.gmra.mxu0 %v1138
        %v2418 = vpop.f32.mrf.mxu0
        %v2419 = vadd.f32 0.0, %v2418
        %v2420 = vpop.f32.mrf.mxu0
        %v2421 = vadd.f32 0.0, %v2420
        %2422 = vmatmul.bf16.gmra.mxu0 %v1142
        %v2423 = vpop.f32.mrf.mxu0
        %v2424 = vadd.f32 0.0, %v2423
        %v2425 = vpop.f32.mrf.mxu0
        %v2426 = vadd.f32 0.0, %v2425
        %2427 = vmatmul.bf16.gmra.mxu0 %v1146
        %v2428 = vpop.f32.mrf.mxu0
        %v2429 = vadd.f32 0.0, %v2428
        %v2430 = vpop.f32.mrf.mxu0
        %v2431 = vadd.f32 0.0, %v2430
        %2432 = vmatmul.bf16.gmra.mxu0 %v1150
        %v2433 = vpop.f32.mrf.mxu0
        %v2434 = vadd.f32 0.0, %v2433
        %v2435 = vpop.f32.mrf.mxu0
        %v2436 = vadd.f32 0.0, %v2435
        %2437 = vmatmul.bf16.gmra.mxu0 %v1154
        %v2438 = vpop.f32.mrf.mxu0
        %v2439 = vadd.f32 0.0, %v2438
        %v2440 = vpop.f32.mrf.mxu0
        %v2441 = vadd.f32 0.0, %v2440
        %2442 = vmatmul.bf16.gmra.mxu0 %v1158
        %v2443 = vpop.f32.mrf.mxu0
        %v2444 = vadd.f32 0.0, %v2443
        %v2445 = vpop.f32.mrf.mxu0
        %v2446 = vadd.f32 0.0, %v2445
        %2447 = vmatmul.bf16.gmra.mxu0 %v1162
        %v2448 = vpop.f32.mrf.mxu0
        %v2449 = vadd.f32 0.0, %v2448
        %v2450 = vpop.f32.mrf.mxu0
        %v2451 = vadd.f32 0.0, %v2450
        %2452 = vmatmul.bf16.gmra.mxu0 %v1166
        %v2453 = vpop.f32.mrf.mxu0
        %v2454 = vadd.f32 0.0, %v2453
        %v2455 = vpop.f32.mrf.mxu0
        %v2456 = vadd.f32 0.0, %v2455
        %2457 = vmatmul.bf16.gmra.mxu0 %v1170
        %v2458 = vpop.f32.mrf.mxu0
        %v2459 = vadd.f32 0.0, %v2458
        %v2460 = vpop.f32.mrf.mxu0
        %v2461 = vadd.f32 0.0, %v2460
        %2462 = vmatmul.bf16.gmra.mxu0 %v1174
        %v2463 = vpop.f32.mrf.mxu0
        %v2464 = vadd.f32 0.0, %v2463
        %v2465 = vpop.f32.mrf.mxu0
        %v2466 = vadd.f32 0.0, %v2465
        %2467 = vmatmul.bf16.gmra.mxu0 %v1178
        %v2468 = vpop.f32.mrf.mxu0
        %v2469 = vadd.f32 0.0, %v2468
        %v2470 = vpop.f32.mrf.mxu0
        %v2471 = vadd.f32 0.0, %v2470
        %2472 = vmatmul.bf16.gmra.mxu0 %v1182
        %v2473 = vpop.f32.mrf.mxu0
        %v2474 = vadd.f32 0.0, %v2473
        %v2475 = vpop.f32.mrf.mxu0
        %v2476 = vadd.f32 0.0, %v2475
        %2477 = vmatmul.bf16.gmra.mxu0 %v1186
        %v2478 = vpop.f32.mrf.mxu0
        %v2479 = vadd.f32 0.0, %v2478
        %v2480 = vpop.f32.mrf.mxu0
        %v2481 = vadd.f32 0.0, %v2480
        %2482 = vdwg.mxu0
        %2483 = vmatpush.bf16.msra.mxu0 %v1541
        %2484 = vmatpush.bf16.msra.mxu0 %v1539
        %2485 = vmatpush.bf16.msra.mxu0 %v1537
        %2486 = vmatpush.bf16.msra.mxu0 %v1535
        %2487 = vmatpush.bf16.msra.mxu0 %v1533
        %2488 = vmatpush.bf16.msra.mxu0 %v1531
        %2489 = vmatpush.bf16.msra.mxu0 %v1529
        %2490 = vmatpush.bf16.msra.mxu0 %v1527
        %2491 = vmatmul.bf16.gmra.mxu0 %v1063
        %v2492 = vpop.f32.mrf.mxu0
        %v2493 = vadd.f32 %v2324, %v2492
        %v2494 = vpop.f32.mrf.mxu0
        %v2495 = vadd.f32 %v2326, %v2494
        %2496 = vmatmul.bf16.gmra.mxu0 %v1067
        %v2497 = vpop.f32.mrf.mxu0
        %v2498 = vadd.f32 %v2329, %v2497
        %v2499 = vpop.f32.mrf.mxu0
        %v2500 = vadd.f32 %v2331, %v2499
        %2501 = vmatmul.bf16.gmra.mxu0 %v1071
        %v2502 = vpop.f32.mrf.mxu0
        %v2503 = vadd.f32 %v2334, %v2502
        %v2504 = vpop.f32.mrf.mxu0
        %v2505 = vadd.f32 %v2336, %v2504
        %2506 = vmatmul.bf16.gmra.mxu0 %v1075
        %v2507 = vpop.f32.mrf.mxu0
        %v2508 = vadd.f32 %v2339, %v2507
        %v2509 = vpop.f32.mrf.mxu0
        %v2510 = vadd.f32 %v2341, %v2509
        %2511 = vmatmul.bf16.gmra.mxu0 %v1079
        %v2512 = vpop.f32.mrf.mxu0
        %v2513 = vadd.f32 %v2344, %v2512
        %v2514 = vpop.f32.mrf.mxu0
        %v2515 = vadd.f32 %v2346, %v2514
        %2516 = vmatmul.bf16.gmra.mxu0 %v1083
        %v2517 = vpop.f32.mrf.mxu0
        %v2518 = vadd.f32 %v2349, %v2517
        %v2519 = vpop.f32.mrf.mxu0
        %v2520 = vadd.f32 %v2351, %v2519
        %2521 = vmatmul.bf16.gmra.mxu0 %v1087
        %v2522 = vpop.f32.mrf.mxu0
        %v2523 = vadd.f32 %v2354, %v2522
        %v2524 = vpop.f32.mrf.mxu0
        %v2525 = vadd.f32 %v2356, %v2524
        %2526 = vmatmul.bf16.gmra.mxu0 %v1091
        %v2527 = vpop.f32.mrf.mxu0
        %v2528 = vadd.f32 %v2359, %v2527
        %v2529 = vpop.f32.mrf.mxu0
        %v2530 = vadd.f32 %v2361, %v2529
        %2531 = vmatmul.bf16.gmra.mxu0 %v1095
        %v2532 = vpop.f32.mrf.mxu0
        %v2533 = vadd.f32 %v2364, %v2532
        %v2534 = vpop.f32.mrf.mxu0
        %v2535 = vadd.f32 %v2366, %v2534
        %2536 = vmatmul.bf16.gmra.mxu0 %v1099
        %v2537 = vpop.f32.mrf.mxu0
        %v2538 = vadd.f32 %v2369, %v2537
        %v2539 = vpop.f32.mrf.mxu0
        %v2540 = vadd.f32 %v2371, %v2539
        %2541 = vmatmul.bf16.gmra.mxu0 %v1103
        %v2542 = vpop.f32.mrf.mxu0
        %v2543 = vadd.f32 %v2374, %v2542
        %v2544 = vpop.f32.mrf.mxu0
        %v2545 = vadd.f32 %v2376, %v2544
        %2546 = vmatmul.bf16.gmra.mxu0 %v1107
        %v2547 = vpop.f32.mrf.mxu0
        %v2548 = vadd.f32 %v2379, %v2547
        %v2549 = vpop.f32.mrf.mxu0
        %v2550 = vadd.f32 %v2381, %v2549
        %2551 = vmatmul.bf16.gmra.mxu0 %v1111
        %v2552 = vpop.f32.mrf.mxu0
        %v2553 = vadd.f32 %v2384, %v2552
        %v2554 = vpop.f32.mrf.mxu0
        %v2555 = vadd.f32 %v2386, %v2554
        %2556 = vmatmul.bf16.gmra.mxu0 %v1115
        %v2557 = vpop.f32.mrf.mxu0
        %v2558 = vadd.f32 %v2389, %v2557
        %v2559 = vpop.f32.mrf.mxu0
        %v2560 = vadd.f32 %v2391, %v2559
        %2561 = vmatmul.bf16.gmra.mxu0 %v1119
        %v2562 = vpop.f32.mrf.mxu0
        %v2563 = vadd.f32 %v2394, %v2562
        %v2564 = vpop.f32.mrf.mxu0
        %v2565 = vadd.f32 %v2396, %v2564
        %2566 = vmatmul.bf16.gmra.mxu0 %v1123
        %v2567 = vpop.f32.mrf.mxu0
        %v2568 = vadd.f32 %v2399, %v2567
        %v2569 = vpop.f32.mrf.mxu0
        %v2570 = vadd.f32 %v2401, %v2569
        %2571 = vmatmul.bf16.gmra.mxu0 %v1127
        %v2572 = vpop.f32.mrf.mxu0
        %v2573 = vadd.f32 %v2404, %v2572
        %v2574 = vpop.f32.mrf.mxu0
        %v2575 = vadd.f32 %v2406, %v2574
        %2576 = vmatmul.bf16.gmra.mxu0 %v1131
        %v2577 = vpop.f32.mrf.mxu0
        %v2578 = vadd.f32 %v2409, %v2577
        %v2579 = vpop.f32.mrf.mxu0
        %v2580 = vadd.f32 %v2411, %v2579
        %2581 = vmatmul.bf16.gmra.mxu0 %v1135
        %v2582 = vpop.f32.mrf.mxu0
        %v2583 = vadd.f32 %v2414, %v2582
        %v2584 = vpop.f32.mrf.mxu0
        %v2585 = vadd.f32 %v2416, %v2584
        %2586 = vmatmul.bf16.gmra.mxu0 %v1139
        %v2587 = vpop.f32.mrf.mxu0
        %v2588 = vadd.f32 %v2419, %v2587
        %v2589 = vpop.f32.mrf.mxu0
        %v2590 = vadd.f32 %v2421, %v2589
        %2591 = vmatmul.bf16.gmra.mxu0 %v1143
        %v2592 = vpop.f32.mrf.mxu0
        %v2593 = vadd.f32 %v2424, %v2592
        %v2594 = vpop.f32.mrf.mxu0
        %v2595 = vadd.f32 %v2426, %v2594
        %2596 = vmatmul.bf16.gmra.mxu0 %v1147
        %v2597 = vpop.f32.mrf.mxu0
        %v2598 = vadd.f32 %v2429, %v2597
        %v2599 = vpop.f32.mrf.mxu0
        %v2600 = vadd.f32 %v2431, %v2599
        %2601 = vmatmul.bf16.gmra.mxu0 %v1151
        %v2602 = vpop.f32.mrf.mxu0
        %v2603 = vadd.f32 %v2434, %v2602
        %v2604 = vpop.f32.mrf.mxu0
        %v2605 = vadd.f32 %v2436, %v2604
        %2606 = vmatmul.bf16.gmra.mxu0 %v1155
        %v2607 = vpop.f32.mrf.mxu0
        %v2608 = vadd.f32 %v2439, %v2607
        %v2609 = vpop.f32.mrf.mxu0
        %v2610 = vadd.f32 %v2441, %v2609
        %2611 = vmatmul.bf16.gmra.mxu0 %v1159
        %v2612 = vpop.f32.mrf.mxu0
        %v2613 = vadd.f32 %v2444, %v2612
        %v2614 = vpop.f32.mrf.mxu0
        %v2615 = vadd.f32 %v2446, %v2614
        %2616 = vmatmul.bf16.gmra.mxu0 %v1163
        %v2617 = vpop.f32.mrf.mxu0
        %v2618 = vadd.f32 %v2449, %v2617
        %v2619 = vpop.f32.mrf.mxu0
        %v2620 = vadd.f32 %v2451, %v2619
        %2621 = vmatmul.bf16.gmra.mxu0 %v1167
        %v2622 = vpop.f32.mrf.mxu0
        %v2623 = vadd.f32 %v2454, %v2622
        %v2624 = vpop.f32.mrf.mxu0
        %v2625 = vadd.f32 %v2456, %v2624
        %2626 = vmatmul.bf16.gmra.mxu0 %v1171
        %v2627 = vpop.f32.mrf.mxu0
        %v2628 = vadd.f32 %v2459, %v2627
        %v2629 = vpop.f32.mrf.mxu0
        %v2630 = vadd.f32 %v2461, %v2629
        %2631 = vmatmul.bf16.gmra.mxu0 %v1175
        %v2632 = vpop.f32.mrf.mxu0
        %v2633 = vadd.f32 %v2464, %v2632
        %v2634 = vpop.f32.mrf.mxu0
        %v2635 = vadd.f32 %v2466, %v2634
        %2636 = vmatmul.bf16.gmra.mxu0 %v1179
        %v2637 = vpop.f32.mrf.mxu0
        %v2638 = vadd.f32 %v2469, %v2637
        %v2639 = vpop.f32.mrf.mxu0
        %v2640 = vadd.f32 %v2471, %v2639
        %2641 = vmatmul.bf16.gmra.mxu0 %v1183
        %v2642 = vpop.f32.mrf.mxu0
        %v2643 = vadd.f32 %v2474, %v2642
        %v2644 = vpop.f32.mrf.mxu0
        %v2645 = vadd.f32 %v2476, %v2644
        %2646 = vmatmul.bf16.gmra.mxu0 %v1187
        %v2647 = vpop.f32.mrf.mxu0
        %v2648 = vadd.f32 %v2479, %v2647
        %v2649 = vpop.f32.mrf.mxu0
        %v2650 = vadd.f32 %v2481, %v2649
        %2651 = vdwg.mxu0
        %2652 = vmatpush.bf16.msra.mxu0 %v1557
        %2653 = vmatpush.bf16.msra.mxu0 %v1555
        %2654 = vmatpush.bf16.msra.mxu0 %v1553
        %2655 = vmatpush.bf16.msra.mxu0 %v1551
        %2656 = vmatpush.bf16.msra.mxu0 %v1549
        %2657 = vmatpush.bf16.msra.mxu0 %v1547
        %2658 = vmatpush.bf16.msra.mxu0 %v1545
        %2659 = vmatpush.bf16.msra.mxu0 %v1543
        %2660 = vmatmul.bf16.gmra.mxu0 %v1064
        %v2661 = vpop.f32.mrf.mxu0
        %v2662 = vadd.f32 %v2493, %v2661
        %v2663 = vpop.f32.mrf.mxu0
        %v2664 = vadd.f32 %v2495, %v2663
        %2665 = vmatmul.bf16.gmra.mxu0 %v1068
        %v2666 = vpop.f32.mrf.mxu0
        %v2667 = vadd.f32 %v2498, %v2666
        %v2668 = vpop.f32.mrf.mxu0
        %v2669 = vadd.f32 %v2500, %v2668
        %2670 = vmatmul.bf16.gmra.mxu0 %v1072
        %v2671 = vpop.f32.mrf.mxu0
        %v2672 = vadd.f32 %v2503, %v2671
        %v2673 = vpop.f32.mrf.mxu0
        %v2674 = vadd.f32 %v2505, %v2673
        %2675 = vmatmul.bf16.gmra.mxu0 %v1076
        %v2676 = vpop.f32.mrf.mxu0
        %v2677 = vadd.f32 %v2508, %v2676
        %v2678 = vpop.f32.mrf.mxu0
        %v2679 = vadd.f32 %v2510, %v2678
        %2680 = vmatmul.bf16.gmra.mxu0 %v1080
        %v2681 = vpop.f32.mrf.mxu0
        %v2682 = vadd.f32 %v2513, %v2681
        %v2683 = vpop.f32.mrf.mxu0
        %v2684 = vadd.f32 %v2515, %v2683
        %2685 = vmatmul.bf16.gmra.mxu0 %v1084
        %v2686 = vpop.f32.mrf.mxu0
        %v2687 = vadd.f32 %v2518, %v2686
        %v2688 = vpop.f32.mrf.mxu0
        %v2689 = vadd.f32 %v2520, %v2688
        %2690 = vmatmul.bf16.gmra.mxu0 %v1088
        %v2691 = vpop.f32.mrf.mxu0
        %v2692 = vadd.f32 %v2523, %v2691
        %v2693 = vpop.f32.mrf.mxu0
        %v2694 = vadd.f32 %v2525, %v2693
        %2695 = vmatmul.bf16.gmra.mxu0 %v1092
        %v2696 = vpop.f32.mrf.mxu0
        %v2697 = vadd.f32 %v2528, %v2696
        %v2698 = vpop.f32.mrf.mxu0
        %v2699 = vadd.f32 %v2530, %v2698
        %2700 = vmatmul.bf16.gmra.mxu0 %v1096
        %v2701 = vpop.f32.mrf.mxu0
        %v2702 = vadd.f32 %v2533, %v2701
        %v2703 = vpop.f32.mrf.mxu0
        %v2704 = vadd.f32 %v2535, %v2703
        %2705 = vmatmul.bf16.gmra.mxu0 %v1100
        %v2706 = vpop.f32.mrf.mxu0
        %v2707 = vadd.f32 %v2538, %v2706
        %v2708 = vpop.f32.mrf.mxu0
        %v2709 = vadd.f32 %v2540, %v2708
        %2710 = vmatmul.bf16.gmra.mxu0 %v1104
        %v2711 = vpop.f32.mrf.mxu0
        %v2712 = vadd.f32 %v2543, %v2711
        %v2713 = vpop.f32.mrf.mxu0
        %v2714 = vadd.f32 %v2545, %v2713
        %2715 = vmatmul.bf16.gmra.mxu0 %v1108
        %v2716 = vpop.f32.mrf.mxu0
        %v2717 = vadd.f32 %v2548, %v2716
        %v2718 = vpop.f32.mrf.mxu0
        %v2719 = vadd.f32 %v2550, %v2718
        %2720 = vmatmul.bf16.gmra.mxu0 %v1112
        %v2721 = vpop.f32.mrf.mxu0
        %v2722 = vadd.f32 %v2553, %v2721
        %v2723 = vpop.f32.mrf.mxu0
        %v2724 = vadd.f32 %v2555, %v2723
        %2725 = vmatmul.bf16.gmra.mxu0 %v1116
        %v2726 = vpop.f32.mrf.mxu0
        %v2727 = vadd.f32 %v2558, %v2726
        %v2728 = vpop.f32.mrf.mxu0
        %v2729 = vadd.f32 %v2560, %v2728
        %2730 = vmatmul.bf16.gmra.mxu0 %v1120
        %v2731 = vpop.f32.mrf.mxu0
        %v2732 = vadd.f32 %v2563, %v2731
        %v2733 = vpop.f32.mrf.mxu0
        %v2734 = vadd.f32 %v2565, %v2733
        %2735 = vmatmul.bf16.gmra.mxu0 %v1124
        %v2736 = vpop.f32.mrf.mxu0
        %v2737 = vadd.f32 %v2568, %v2736
        %v2738 = vpop.f32.mrf.mxu0
        %v2739 = vadd.f32 %v2570, %v2738
        %2740 = vmatmul.bf16.gmra.mxu0 %v1128
        %v2741 = vpop.f32.mrf.mxu0
        %v2742 = vadd.f32 %v2573, %v2741
        %v2743 = vpop.f32.mrf.mxu0
        %v2744 = vadd.f32 %v2575, %v2743
        %2745 = vmatmul.bf16.gmra.mxu0 %v1132
        %v2746 = vpop.f32.mrf.mxu0
        %v2747 = vadd.f32 %v2578, %v2746
        %v2748 = vpop.f32.mrf.mxu0
        %v2749 = vadd.f32 %v2580, %v2748
        %2750 = vmatmul.bf16.gmra.mxu0 %v1136
        %v2751 = vpop.f32.mrf.mxu0
        %v2752 = vadd.f32 %v2583, %v2751
        %v2753 = vpop.f32.mrf.mxu0
        %v2754 = vadd.f32 %v2585, %v2753
        %2755 = vmatmul.bf16.gmra.mxu0 %v1140
        %v2756 = vpop.f32.mrf.mxu0
        %v2757 = vadd.f32 %v2588, %v2756
        %v2758 = vpop.f32.mrf.mxu0
        %v2759 = vadd.f32 %v2590, %v2758
        %2760 = vmatmul.bf16.gmra.mxu0 %v1144
        %v2761 = vpop.f32.mrf.mxu0
        %v2762 = vadd.f32 %v2593, %v2761
        %v2763 = vpop.f32.mrf.mxu0
        %v2764 = vadd.f32 %v2595, %v2763
        %2765 = vmatmul.bf16.gmra.mxu0 %v1148
        %v2766 = vpop.f32.mrf.mxu0
        %v2767 = vadd.f32 %v2598, %v2766
        %v2768 = vpop.f32.mrf.mxu0
        %v2769 = vadd.f32 %v2600, %v2768
        %2770 = vmatmul.bf16.gmra.mxu0 %v1152
        %v2771 = vpop.f32.mrf.mxu0
        %v2772 = vadd.f32 %v2603, %v2771
        %v2773 = vpop.f32.mrf.mxu0
        %v2774 = vadd.f32 %v2605, %v2773
        %2775 = vmatmul.bf16.gmra.mxu0 %v1156
        %v2776 = vpop.f32.mrf.mxu0
        %v2777 = vadd.f32 %v2608, %v2776
        %v2778 = vpop.f32.mrf.mxu0
        %v2779 = vadd.f32 %v2610, %v2778
        %2780 = vmatmul.bf16.gmra.mxu0 %v1160
        %v2781 = vpop.f32.mrf.mxu0
        %v2782 = vadd.f32 %v2613, %v2781
        %v2783 = vpop.f32.mrf.mxu0
        %v2784 = vadd.f32 %v2615, %v2783
        %2785 = vmatmul.bf16.gmra.mxu0 %v1164
        %v2786 = vpop.f32.mrf.mxu0
        %v2787 = vadd.f32 %v2618, %v2786
        %v2788 = vpop.f32.mrf.mxu0
        %v2789 = vadd.f32 %v2620, %v2788
        %2790 = vmatmul.bf16.gmra.mxu0 %v1168
        %v2791 = vpop.f32.mrf.mxu0
        %v2792 = vadd.f32 %v2623, %v2791
        %v2793 = vpop.f32.mrf.mxu0
        %v2794 = vadd.f32 %v2625, %v2793
        %2795 = vmatmul.bf16.gmra.mxu0 %v1172
        %v2796 = vpop.f32.mrf.mxu0
        %v2797 = vadd.f32 %v2628, %v2796
        %v2798 = vpop.f32.mrf.mxu0
        %v2799 = vadd.f32 %v2630, %v2798
        %2800 = vmatmul.bf16.gmra.mxu0 %v1176
        %v2801 = vpop.f32.mrf.mxu0
        %v2802 = vadd.f32 %v2633, %v2801
        %v2803 = vpop.f32.mrf.mxu0
        %v2804 = vadd.f32 %v2635, %v2803
        %2805 = vmatmul.bf16.gmra.mxu0 %v1180
        %v2806 = vpop.f32.mrf.mxu0
        %v2807 = vadd.f32 %v2638, %v2806
        %v2808 = vpop.f32.mrf.mxu0
        %v2809 = vadd.f32 %v2640, %v2808
        %2810 = vmatmul.bf16.gmra.mxu0 %v1184
        %v2811 = vpop.f32.mrf.mxu0
        %v2812 = vadd.f32 %v2643, %v2811
        %v2813 = vpop.f32.mrf.mxu0
        %v2814 = vadd.f32 %v2645, %v2813
        %2815 = vmatmul.bf16.gmra.mxu0 %v1188
        %v2816 = vpop.f32.mrf.mxu0
        %v2817 = vadd.f32 %v2648, %v2816
        %v2818 = vpop.f32.mrf.mxu0
        %v2819 = vadd.f32 %v2650, %v2818
        %2820 = vdwg.mxu0
        %2821 = vmatpush.bf16.msra.mxu0 %v1573
        %2822 = vmatpush.bf16.msra.mxu0 %v1571
        %2823 = vmatpush.bf16.msra.mxu0 %v1569
        %2824 = vmatpush.bf16.msra.mxu0 %v1567
        %2825 = vmatpush.bf16.msra.mxu0 %v1565
        %2826 = vmatpush.bf16.msra.mxu0 %v1563
        %2827 = vmatpush.bf16.msra.mxu0 %v1561
        %2828 = vmatpush.bf16.msra.mxu0 %v1559
        %2829 = vmatmul.bf16.gmra.mxu0 %v1065
        %v2830 = vpop.f32.mrf.mxu0
        %v2831 = vadd.f32 %v2662, %v2830
        %v2832 = vpop.f32.mrf.mxu0
        %v2833 = vadd.f32 %v2664, %v2832
        %2834 = vmatmul.bf16.gmra.mxu0 %v1069
        %v2835 = vpop.f32.mrf.mxu0
        %v2836 = vadd.f32 %v2667, %v2835
        %v2837 = vpop.f32.mrf.mxu0
        %v2838 = vadd.f32 %v2669, %v2837
        %2839 = vmatmul.bf16.gmra.mxu0 %v1073
        %v2840 = vpop.f32.mrf.mxu0
        %v2841 = vadd.f32 %v2672, %v2840
        %v2842 = vpop.f32.mrf.mxu0
        %v2843 = vadd.f32 %v2674, %v2842
        %2844 = vmatmul.bf16.gmra.mxu0 %v1077
        %v2845 = vpop.f32.mrf.mxu0
        %v2846 = vadd.f32 %v2677, %v2845
        %v2847 = vpop.f32.mrf.mxu0
        %v2848 = vadd.f32 %v2679, %v2847
        %2849 = vmatmul.bf16.gmra.mxu0 %v1081
        %v2850 = vpop.f32.mrf.mxu0
        %v2851 = vadd.f32 %v2682, %v2850
        %v2852 = vpop.f32.mrf.mxu0
        %v2853 = vadd.f32 %v2684, %v2852
        %2854 = vmatmul.bf16.gmra.mxu0 %v1085
        %v2855 = vpop.f32.mrf.mxu0
        %v2856 = vadd.f32 %v2687, %v2855
        %v2857 = vpop.f32.mrf.mxu0
        %v2858 = vadd.f32 %v2689, %v2857
        %2859 = vmatmul.bf16.gmra.mxu0 %v1089
        %v2860 = vpop.f32.mrf.mxu0
        %v2861 = vadd.f32 %v2692, %v2860
        %v2862 = vpop.f32.mrf.mxu0
        %v2863 = vadd.f32 %v2694, %v2862
        %2864 = vmatmul.bf16.gmra.mxu0 %v1093
        %v2865 = vpop.f32.mrf.mxu0
        %v2866 = vadd.f32 %v2697, %v2865
        %v2867 = vpop.f32.mrf.mxu0
        %v2868 = vadd.f32 %v2699, %v2867
        %2869 = vmatmul.bf16.gmra.mxu0 %v1097
        %v2870 = vpop.f32.mrf.mxu0
        %v2871 = vadd.f32 %v2702, %v2870
        %v2872 = vpop.f32.mrf.mxu0
        %v2873 = vadd.f32 %v2704, %v2872
        %2874 = vmatmul.bf16.gmra.mxu0 %v1101
        %v2875 = vpop.f32.mrf.mxu0
        %v2876 = vadd.f32 %v2707, %v2875
        %v2877 = vpop.f32.mrf.mxu0
        %v2878 = vadd.f32 %v2709, %v2877
        %2879 = vmatmul.bf16.gmra.mxu0 %v1105
        %v2880 = vpop.f32.mrf.mxu0
        %v2881 = vadd.f32 %v2712, %v2880
        %v2882 = vpop.f32.mrf.mxu0
        %v2883 = vadd.f32 %v2714, %v2882
        %2884 = vmatmul.bf16.gmra.mxu0 %v1109
        %v2885 = vpop.f32.mrf.mxu0
        %v2886 = vadd.f32 %v2717, %v2885
        %v2887 = vpop.f32.mrf.mxu0
        %v2888 = vadd.f32 %v2719, %v2887
        %2889 = vmatmul.bf16.gmra.mxu0 %v1113
        %v2890 = vpop.f32.mrf.mxu0
        %v2891 = vadd.f32 %v2722, %v2890
        %v2892 = vpop.f32.mrf.mxu0
        %v2893 = vadd.f32 %v2724, %v2892
        %2894 = vmatmul.bf16.gmra.mxu0 %v1117
        %v2895 = vpop.f32.mrf.mxu0
        %v2896 = vadd.f32 %v2727, %v2895
        %v2897 = vpop.f32.mrf.mxu0
        %v2898 = vadd.f32 %v2729, %v2897
        %2899 = vmatmul.bf16.gmra.mxu0 %v1121
        %v2900 = vpop.f32.mrf.mxu0
        %v2901 = vadd.f32 %v2732, %v2900
        %v2902 = vpop.f32.mrf.mxu0
        %v2903 = vadd.f32 %v2734, %v2902
        %2904 = vmatmul.bf16.gmra.mxu0 %v1125
        %v2905 = vpop.f32.mrf.mxu0
        %v2906 = vadd.f32 %v2737, %v2905
        %v2907 = vpop.f32.mrf.mxu0
        %v2908 = vadd.f32 %v2739, %v2907
        %2909 = vmatmul.bf16.gmra.mxu0 %v1129
        %v2910 = vpop.f32.mrf.mxu0
        %v2911 = vadd.f32 %v2742, %v2910
        %v2912 = vpop.f32.mrf.mxu0
        %v2913 = vadd.f32 %v2744, %v2912
        %2914 = vmatmul.bf16.gmra.mxu0 %v1133
        %v2915 = vpop.f32.mrf.mxu0
        %v2916 = vadd.f32 %v2747, %v2915
        %v2917 = vpop.f32.mrf.mxu0
        %v2918 = vadd.f32 %v2749, %v2917
        %2919 = vmatmul.bf16.gmra.mxu0 %v1137
        %v2920 = vpop.f32.mrf.mxu0
        %v2921 = vadd.f32 %v2752, %v2920
        %v2922 = vpop.f32.mrf.mxu0
        %v2923 = vadd.f32 %v2754, %v2922
        %2924 = vmatmul.bf16.gmra.mxu0 %v1141
        %v2925 = vpop.f32.mrf.mxu0
        %v2926 = vadd.f32 %v2757, %v2925
        %v2927 = vpop.f32.mrf.mxu0
        %v2928 = vadd.f32 %v2759, %v2927
        %2929 = vmatmul.bf16.gmra.mxu0 %v1145
        %v2930 = vpop.f32.mrf.mxu0
        %v2931 = vadd.f32 %v2762, %v2930
        %v2932 = vpop.f32.mrf.mxu0
        %v2933 = vadd.f32 %v2764, %v2932
        %2934 = vmatmul.bf16.gmra.mxu0 %v1149
        %v2935 = vpop.f32.mrf.mxu0
        %v2936 = vadd.f32 %v2767, %v2935
        %v2937 = vpop.f32.mrf.mxu0
        %v2938 = vadd.f32 %v2769, %v2937
        %2939 = vmatmul.bf16.gmra.mxu0 %v1153
        %v2940 = vpop.f32.mrf.mxu0
        %v2941 = vadd.f32 %v2772, %v2940
        %v2942 = vpop.f32.mrf.mxu0
        %v2943 = vadd.f32 %v2774, %v2942
        %2944 = vmatmul.bf16.gmra.mxu0 %v1157
        %v2945 = vpop.f32.mrf.mxu0
        %v2946 = vadd.f32 %v2777, %v2945
        %v2947 = vpop.f32.mrf.mxu0
        %v2948 = vadd.f32 %v2779, %v2947
        %2949 = vmatmul.bf16.gmra.mxu0 %v1161
        %v2950 = vpop.f32.mrf.mxu0
        %v2951 = vadd.f32 %v2782, %v2950
        %v2952 = vpop.f32.mrf.mxu0
        %v2953 = vadd.f32 %v2784, %v2952
        %2954 = vmatmul.bf16.gmra.mxu0 %v1165
        %v2955 = vpop.f32.mrf.mxu0
        %v2956 = vadd.f32 %v2787, %v2955
        %v2957 = vpop.f32.mrf.mxu0
        %v2958 = vadd.f32 %v2789, %v2957
        %2959 = vmatmul.bf16.gmra.mxu0 %v1169
        %v2960 = vpop.f32.mrf.mxu0
        %v2961 = vadd.f32 %v2792, %v2960
        %v2962 = vpop.f32.mrf.mxu0
        %v2963 = vadd.f32 %v2794, %v2962
        %2964 = vmatmul.bf16.gmra.mxu0 %v1173
        %v2965 = vpop.f32.mrf.mxu0
        %v2966 = vadd.f32 %v2797, %v2965
        %v2967 = vpop.f32.mrf.mxu0
        %v2968 = vadd.f32 %v2799, %v2967
        %2969 = vmatmul.bf16.gmra.mxu0 %v1177
        %v2970 = vpop.f32.mrf.mxu0
        %v2971 = vadd.f32 %v2802, %v2970
        %v2972 = vpop.f32.mrf.mxu0
        %v2973 = vadd.f32 %v2804, %v2972
        %2974 = vmatmul.bf16.gmra.mxu0 %v1181
        %v2975 = vpop.f32.mrf.mxu0
        %v2976 = vadd.f32 %v2807, %v2975
        %v2977 = vpop.f32.mrf.mxu0
        %v2978 = vadd.f32 %v2809, %v2977
        %2979 = vmatmul.bf16.gmra.mxu0 %v1185
        %v2980 = vpop.f32.mrf.mxu0
        %v2981 = vadd.f32 %v2812, %v2980
        %v2982 = vpop.f32.mrf.mxu0
        %v2983 = vadd.f32 %v2814, %v2982
        %2984 = vmatmul.bf16.gmra.mxu0 %v1189
        %v2985 = vpop.f32.mrf.mxu0
        %v2986 = vadd.f32 %v2817, %v2985
        %v2987 = vpop.f32.mrf.mxu0
        %v2988 = vadd.f32 %v2819, %v2987
        %2989 = vdwg.mxu0
        %v2990 = vadd.f32 %v358, %v2155
        %v2991 = vadd.f32 %v359, %v2831
        %v2992 = vadd.f32 %v360, %v2157
        %v2993 = vadd.f32 %v361, %v2833
        %v2994 = vadd.f32 %v362, %v2160
        %v2995 = vadd.f32 %v363, %v2836
        %v2996 = vadd.f32 %v364, %v2162
        %v2997 = vadd.f32 %v365, %v2838
        %v2998 = vadd.f32 %v366, %v2165
        %v2999 = vadd.f32 %v367, %v2841
        %v3000 = vadd.f32 %v368, %v2167
        %v3001 = vadd.f32 %v369, %v2843
        %v3002 = vadd.f32 %v370, %v2170
        %v3003 = vadd.f32 %v371, %v2846
        %v3004 = vadd.f32 %v372, %v2172
        %v3005 = vadd.f32 %v373, %v2848
        %v3006 = vadd.f32 %v374, %v2175
        %v3007 = vadd.f32 %v375, %v2851
        %v3008 = vadd.f32 %v376, %v2177
        %v3009 = vadd.f32 %v377, %v2853
        %v3010 = vadd.f32 %v378, %v2180
        %v3011 = vadd.f32 %v379, %v2856
        %v3012 = vadd.f32 %v380, %v2182
        %v3013 = vadd.f32 %v381, %v2858
        %v3014 = vadd.f32 %v382, %v2185
        %v3015 = vadd.f32 %v383, %v2861
        %v3016 = vadd.f32 %v384, %v2187
        %v3017 = vadd.f32 %v385, %v2863
        %v3018 = vadd.f32 %v386, %v2190
        %v3019 = vadd.f32 %v387, %v2866
        %v3020 = vadd.f32 %v388, %v2192
        %v3021 = vadd.f32 %v389, %v2868
        %v3022 = vadd.f32 %v390, %v2195
        %v3023 = vadd.f32 %v391, %v2871
        %v3024 = vadd.f32 %v392, %v2197
        %v3025 = vadd.f32 %v393, %v2873
        %v3026 = vadd.f32 %v394, %v2200
        %v3027 = vadd.f32 %v395, %v2876
        %v3028 = vadd.f32 %v396, %v2202
        %v3029 = vadd.f32 %v397, %v2878
        %v3030 = vadd.f32 %v398, %v2205
        %v3031 = vadd.f32 %v399, %v2881
        %v3032 = vadd.f32 %v400, %v2207
        %v3033 = vadd.f32 %v401, %v2883
        %v3034 = vadd.f32 %v402, %v2210
        %v3035 = vadd.f32 %v403, %v2886
        %v3036 = vadd.f32 %v404, %v2212
        %v3037 = vadd.f32 %v405, %v2888
        %v3038 = vadd.f32 %v406, %v2215
        %v3039 = vadd.f32 %v407, %v2891
        %v3040 = vadd.f32 %v408, %v2217
        %v3041 = vadd.f32 %v409, %v2893
        %v3042 = vadd.f32 %v410, %v2220
        %v3043 = vadd.f32 %v411, %v2896
        %v3044 = vadd.f32 %v412, %v2222
        %v3045 = vadd.f32 %v413, %v2898
        %v3046 = vadd.f32 %v414, %v2225
        %v3047 = vadd.f32 %v415, %v2901
        %v3048 = vadd.f32 %v416, %v2227
        %v3049 = vadd.f32 %v417, %v2903
        %v3050 = vadd.f32 %v418, %v2230
        %v3051 = vadd.f32 %v419, %v2906
        %v3052 = vadd.f32 %v420, %v2232
        %v3053 = vadd.f32 %v421, %v2908
        %v3054 = vadd.f32 %v422, %v2235
        %v3055 = vadd.f32 %v423, %v2911
        %v3056 = vadd.f32 %v424, %v2237
        %v3057 = vadd.f32 %v425, %v2913
        %v3058 = vadd.f32 %v426, %v2240
        %v3059 = vadd.f32 %v427, %v2916
        %v3060 = vadd.f32 %v428, %v2242
        %v3061 = vadd.f32 %v429, %v2918
        %v3062 = vadd.f32 %v430, %v2245
        %v3063 = vadd.f32 %v431, %v2921
        %v3064 = vadd.f32 %v432, %v2247
        %v3065 = vadd.f32 %v433, %v2923
        %v3066 = vadd.f32 %v434, %v2250
        %v3067 = vadd.f32 %v435, %v2926
        %v3068 = vadd.f32 %v436, %v2252
        %v3069 = vadd.f32 %v437, %v2928
        %v3070 = vadd.f32 %v438, %v2255
        %v3071 = vadd.f32 %v439, %v2931
        %v3072 = vadd.f32 %v440, %v2257
        %v3073 = vadd.f32 %v441, %v2933
        %v3074 = vadd.f32 %v442, %v2260
        %v3075 = vadd.f32 %v443, %v2936
        %v3076 = vadd.f32 %v444, %v2262
        %v3077 = vadd.f32 %v445, %v2938
        %v3078 = vadd.f32 %v446, %v2265
        %v3079 = vadd.f32 %v447, %v2941
        %v3080 = vadd.f32 %v448, %v2267
        %v3081 = vadd.f32 %v449, %v2943
        %v3082 = vadd.f32 %v450, %v2270
        %v3083 = vadd.f32 %v451, %v2946
        %v3084 = vadd.f32 %v452, %v2272
        %v3085 = vadd.f32 %v453, %v2948
        %v3086 = vadd.f32 %v454, %v2275
        %v3087 = vadd.f32 %v455, %v2951
        %v3088 = vadd.f32 %v456, %v2277
        %v3089 = vadd.f32 %v457, %v2953
        %v3090 = vadd.f32 %v458, %v2280
        %v3091 = vadd.f32 %v459, %v2956
        %v3092 = vadd.f32 %v460, %v2282
        %v3093 = vadd.f32 %v461, %v2958
        %v3094 = vadd.f32 %v462, %v2285
        %v3095 = vadd.f32 %v463, %v2961
        %v3096 = vadd.f32 %v464, %v2287
        %v3097 = vadd.f32 %v465, %v2963
        %v3098 = vadd.f32 %v466, %v2290
        %v3099 = vadd.f32 %v467, %v2966
        %v3100 = vadd.f32 %v468, %v2292
        %v3101 = vadd.f32 %v469, %v2968
        %v3102 = vadd.f32 %v470, %v2295
        %v3103 = vadd.f32 %v471, %v2971
        %v3104 = vadd.f32 %v472, %v2297
        %v3105 = vadd.f32 %v473, %v2973
        %v3106 = vadd.f32 %v474, %v2300
        %v3107 = vadd.f32 %v475, %v2976
        %v3108 = vadd.f32 %v476, %v2302
        %v3109 = vadd.f32 %v477, %v2978
        %v3110 = vadd.f32 %v478, %v2305
        %v3111 = vadd.f32 %v479, %v2981
        %v3112 = vadd.f32 %v480, %v2307
        %v3113 = vadd.f32 %v481, %v2983
        %v3114 = vadd.f32 %v482, %v2310
        %v3115 = vadd.f32 %v483, %v2986
        %v3116 = vadd.f32 %v484, %v2312
        %v3117 = vadd.f32 %v485, %v2988
        %3118 = vst [vmem:[#allocation2] sm:$0xff] %v2990
        %3119 = vst [vmem:[#allocation2 + $0x8] sm:$0xff] %v2991
        %3120 = vst [vmem:[#allocation2 + $0x10] sm:$0xff] %v2992
        %3121 = vst [vmem:[#allocation2 + $0x18] sm:$0xff] %v2993
        %3122 = vst [vmem:[#allocation2 + $0x20] sm:$0xff] %v2994
        %3123 = vst [vmem:[#allocation2 + $0x28] sm:$0xff] %v2995
        %3124 = vst [vmem:[#allocation2 + $0x30] sm:$0xff] %v2996
        %3125 = vst [vmem:[#allocation2 + $0x38] sm:$0xff] %v2997
        %3126 = vst [vmem:[#allocation2 + $0x40] sm:$0xff] %v2998
        %3127 = vst [vmem:[#allocation2 + $0x48] sm:$0xff] %v2999
        %3128 = vst [vmem:[#allocation2 + $0x50] sm:$0xff] %v3000
        %3129 = vst [vmem:[#allocation2 + $0x58] sm:$0xff] %v3001
        %3130 = vst [vmem:[#allocation2 + $0x60] sm:$0xff] %v3002
        %3131 = vst [vmem:[#allocation2 + $0x68] sm:$0xff] %v3003
        %3132 = vst [vmem:[#allocation2 + $0x70] sm:$0xff] %v3004
        %3133 = vst [vmem:[#allocation2 + $0x78] sm:$0xff] %v3005
        %3134 = vst [vmem:[#allocation2 + $0x80] sm:$0xff] %v3006
        %3135 = vst [vmem:[#allocation2 + $0x88] sm:$0xff] %v3007
        %3136 = vst [vmem:[#allocation2 + $0x90] sm:$0xff] %v3008
        %3137 = vst [vmem:[#allocation2 + $0x98] sm:$0xff] %v3009
        %3138 = vst [vmem:[#allocation2 + $0xa0] sm:$0xff] %v3010
        %3139 = vst [vmem:[#allocation2 + $0xa8] sm:$0xff] %v3011
        %3140 = vst [vmem:[#allocation2 + $0xb0] sm:$0xff] %v3012
        %3141 = vst [vmem:[#allocation2 + $0xb8] sm:$0xff] %v3013
        %3142 = vst [vmem:[#allocation2 + $0xc0] sm:$0xff] %v3014
        %3143 = vst [vmem:[#allocation2 + $0xc8] sm:$0xff] %v3015
        %3144 = vst [vmem:[#allocation2 + $0xd0] sm:$0xff] %v3016
        %3145 = vst [vmem:[#allocation2 + $0xd8] sm:$0xff] %v3017
        %3146 = vst [vmem:[#allocation2 + $0xe0] sm:$0xff] %v3018
        %3147 = vst [vmem:[#allocation2 + $0xe8] sm:$0xff] %v3019
        %3148 = vst [vmem:[#allocation2 + $0xf0] sm:$0xff] %v3020
        %3149 = vst [vmem:[#allocation2 + $0xf8] sm:$0xff] %v3021
        %3150 = vst [vmem:[#allocation2 + $0x100] sm:$0xff] %v3022
        %3151 = vst [vmem:[#allocation2 + $0x108] sm:$0xff] %v3023
        %3152 = vst [vmem:[#allocation2 + $0x110] sm:$0xff] %v3024
        %3153 = vst [vmem:[#allocation2 + $0x118] sm:$0xff] %v3025
        %3154 = vst [vmem:[#allocation2 + $0x120] sm:$0xff] %v3026
        %3155 = vst [vmem:[#allocation2 + $0x128] sm:$0xff] %v3027
        %3156 = vst [vmem:[#allocation2 + $0x130] sm:$0xff] %v3028
        %3157 = vst [vmem:[#allocation2 + $0x138] sm:$0xff] %v3029
        %3158 = vst [vmem:[#allocation2 + $0x140] sm:$0xff] %v3030
        %3159 = vst [vmem:[#allocation2 + $0x148] sm:$0xff] %v3031
        %3160 = vst [vmem:[#allocation2 + $0x150] sm:$0xff] %v3032
        %3161 = vst [vmem:[#allocation2 + $0x158] sm:$0xff] %v3033
        %3162 = vst [vmem:[#allocation2 + $0x160] sm:$0xff] %v3034
        %3163 = vst [vmem:[#allocation2 + $0x168] sm:$0xff] %v3035
        %3164 = vst [vmem:[#allocation2 + $0x170] sm:$0xff] %v3036
        %3165 = vst [vmem:[#allocation2 + $0x178] sm:$0xff] %v3037
        %3166 = vst [vmem:[#allocation2 + $0x180] sm:$0xff] %v3038
        %3167 = vst [vmem:[#allocation2 + $0x188] sm:$0xff] %v3039
        %3168 = vst [vmem:[#allocation2 + $0x190] sm:$0xff] %v3040
        %3169 = vst [vmem:[#allocation2 + $0x198] sm:$0xff] %v3041
        %3170 = vst [vmem:[#allocation2 + $0x1a0] sm:$0xff] %v3042
        %3171 = vst [vmem:[#allocation2 + $0x1a8] sm:$0xff] %v3043
        %3172 = vst [vmem:[#allocation2 + $0x1b0] sm:$0xff] %v3044
        %3173 = vst [vmem:[#allocation2 + $0x1b8] sm:$0xff] %v3045
        %3174 = vst [vmem:[#allocation2 + $0x1c0] sm:$0xff] %v3046
        %3175 = vst [vmem:[#allocation2 + $0x1c8] sm:$0xff] %v3047
        %3176 = vst [vmem:[#allocation2 + $0x1d0] sm:$0xff] %v3048
        %3177 = vst [vmem:[#allocation2 + $0x1d8] sm:$0xff] %v3049
        %3178 = vst [vmem:[#allocation2 + $0x1e0] sm:$0xff] %v3050
        %3179 = vst [vmem:[#allocation2 + $0x1e8] sm:$0xff] %v3051
        %3180 = vst [vmem:[#allocation2 + $0x1f0] sm:$0xff] %v3052
        %3181 = vst [vmem:[#allocation2 + $0x1f8] sm:$0xff] %v3053
        %3182 = vst [vmem:[#allocation2 + $0x200] sm:$0xff] %v3054
        %3183 = vst [vmem:[#allocation2 + $0x208] sm:$0xff] %v3055
        %3184 = vst [vmem:[#allocation2 + $0x210] sm:$0xff] %v3056
        %3185 = vst [vmem:[#allocation2 + $0x218] sm:$0xff] %v3057
        %3186 = vst [vmem:[#allocation2 + $0x220] sm:$0xff] %v3058
        %3187 = vst [vmem:[#allocation2 + $0x228] sm:$0xff] %v3059
        %3188 = vst [vmem:[#allocation2 + $0x230] sm:$0xff] %v3060
        %3189 = vst [vmem:[#allocation2 + $0x238] sm:$0xff] %v3061
        %3190 = vst [vmem:[#allocation2 + $0x240] sm:$0xff] %v3062
        %3191 = vst [vmem:[#allocation2 + $0x248] sm:$0xff] %v3063
        %3192 = vst [vmem:[#allocation2 + $0x250] sm:$0xff] %v3064
        %3193 = vst [vmem:[#allocation2 + $0x258] sm:$0xff] %v3065
        %3194 = vst [vmem:[#allocation2 + $0x260] sm:$0xff] %v3066
        %3195 = vst [vmem:[#allocation2 + $0x268] sm:$0xff] %v3067
        %3196 = vst [vmem:[#allocation2 + $0x270] sm:$0xff] %v3068
        %3197 = vst [vmem:[#allocation2 + $0x278] sm:$0xff] %v3069
        %3198 = vst [vmem:[#allocation2 + $0x280] sm:$0xff] %v3070
        %3199 = vst [vmem:[#allocation2 + $0x288] sm:$0xff] %v3071
        %3200 = vst [vmem:[#allocation2 + $0x290] sm:$0xff] %v3072
        %3201 = vst [vmem:[#allocation2 + $0x298] sm:$0xff] %v3073
        %3202 = vst [vmem:[#allocation2 + $0x2a0] sm:$0xff] %v3074
        %3203 = vst [vmem:[#allocation2 + $0x2a8] sm:$0xff] %v3075
        %3204 = vst [vmem:[#allocation2 + $0x2b0] sm:$0xff] %v3076
        %3205 = vst [vmem:[#allocation2 + $0x2b8] sm:$0xff] %v3077
        %3206 = vst [vmem:[#allocation2 + $0x2c0] sm:$0xff] %v3078
        %3207 = vst [vmem:[#allocation2 + $0x2c8] sm:$0xff] %v3079
        %3208 = vst [vmem:[#allocation2 + $0x2d0] sm:$0xff] %v3080
        %3209 = vst [vmem:[#allocation2 + $0x2d8] sm:$0xff] %v3081
        %3210 = vst [vmem:[#allocation2 + $0x2e0] sm:$0xff] %v3082
        %3211 = vst [vmem:[#allocation2 + $0x2e8] sm:$0xff] %v3083
        %3212 = vst [vmem:[#allocation2 + $0x2f0] sm:$0xff] %v3084
        %3213 = vst [vmem:[#allocation2 + $0x2f8] sm:$0xff] %v3085
        %3214 = vst [vmem:[#allocation2 + $0x300] sm:$0xff] %v3086
        %3215 = vst [vmem:[#allocation2 + $0x308] sm:$0xff] %v3087
        %3216 = vst [vmem:[#allocation2 + $0x310] sm:$0xff] %v3088
        %3217 = vst [vmem:[#allocation2 + $0x318] sm:$0xff] %v3089
        %3218 = vst [vmem:[#allocation2 + $0x320] sm:$0xff] %v3090
        %3219 = vst [vmem:[#allocation2 + $0x328] sm:$0xff] %v3091
        %3220 = vst [vmem:[#allocation2 + $0x330] sm:$0xff] %v3092
        %3221 = vst [vmem:[#allocation2 + $0x338] sm:$0xff] %v3093
        %3222 = vst [vmem:[#allocation2 + $0x340] sm:$0xff] %v3094
        %3223 = vst [vmem:[#allocation2 + $0x348] sm:$0xff] %v3095
        %3224 = vst [vmem:[#allocation2 + $0x350] sm:$0xff] %v3096
        %3225 = vst [vmem:[#allocation2 + $0x358] sm:$0xff] %v3097
        %3226 = vst [vmem:[#allocation2 + $0x360] sm:$0xff] %v3098
        %3227 = vst [vmem:[#allocation2 + $0x368] sm:$0xff] %v3099
        %3228 = vst [vmem:[#allocation2 + $0x370] sm:$0xff] %v3100
        %3229 = vst [vmem:[#allocation2 + $0x378] sm:$0xff] %v3101
        %3230 = vst [vmem:[#allocation2 + $0x380] sm:$0xff] %v3102
        %3231 = vst [vmem:[#allocation2 + $0x388] sm:$0xff] %v3103
        %3232 = vst [vmem:[#allocation2 + $0x390] sm:$0xff] %v3104
        %3233 = vst [vmem:[#allocation2 + $0x398] sm:$0xff] %v3105
        %3234 = vst [vmem:[#allocation2 + $0x3a0] sm:$0xff] %v3106
        %3235 = vst [vmem:[#allocation2 + $0x3a8] sm:$0xff] %v3107
        %3236 = vst [vmem:[#allocation2 + $0x3b0] sm:$0xff] %v3108
        %3237 = vst [vmem:[#allocation2 + $0x3b8] sm:$0xff] %v3109
        %3238 = vst [vmem:[#allocation2 + $0x3c0] sm:$0xff] %v3110
        %3239 = vst [vmem:[#allocation2 + $0x3c8] sm:$0xff] %v3111
        %3240 = vst [vmem:[#allocation2 + $0x3d0] sm:$0xff] %v3112
        %3241 = vst [vmem:[#allocation2 + $0x3d8] sm:$0xff] %v3113
        %3242 = vst [vmem:[#allocation2 + $0x3e0] sm:$0xff] %v3114
        %3243 = vst [vmem:[#allocation2 + $0x3e8] sm:$0xff] %v3115
        %3244 = vst [vmem:[#allocation2 + $0x3f0] sm:$0xff] %v3116
        %3245 = vst [vmem:[#allocation2 + $0x3f8] sm:$0xff] %v3117
        // Predicated region
        $region41: #{tpu_custom_call.1} parent=27 // pred_check
          %p3246 = pneg %p226
        $region42: #{tpu_custom_call.1} parent=27 // pred_check_branch
          %3248 = sbr.rel (%p3246) target = $region44
        $region43: #{tpu_custom_call.1} parent=27 // pred_region
          %v3249 = vld [vmem:[#allocation2] sm:$0xff]
          %v3250 = vld [vmem:[#allocation2 + $0x8] sm:$0xff]
          %v3251 = vld [vmem:[#allocation2 + $0x10] sm:$0xff]
          %v3252 = vld [vmem:[#allocation2 + $0x18] sm:$0xff]
          %v3253 = vld [vmem:[#allocation2 + $0x20] sm:$0xff]
          %v3254 = vld [vmem:[#allocation2 + $0x28] sm:$0xff]
          %v3255 = vld [vmem:[#allocation2 + $0x30] sm:$0xff]
          %v3256 = vld [vmem:[#allocation2 + $0x38] sm:$0xff]
          %v3257 = vld [vmem:[#allocation2 + $0x40] sm:$0xff]
          %v3258 = vld [vmem:[#allocation2 + $0x48] sm:$0xff]
          %v3259 = vld [vmem:[#allocation2 + $0x50] sm:$0xff]
          %v3260 = vld [vmem:[#allocation2 + $0x58] sm:$0xff]
          %v3261 = vld [vmem:[#allocation2 + $0x60] sm:$0xff]
          %v3262 = vld [vmem:[#allocation2 + $0x68] sm:$0xff]
          %v3263 = vld [vmem:[#allocation2 + $0x70] sm:$0xff]
          %v3264 = vld [vmem:[#allocation2 + $0x78] sm:$0xff]
          %v3265 = vld [vmem:[#allocation2 + $0x80] sm:$0xff]
          %v3266 = vld [vmem:[#allocation2 + $0x88] sm:$0xff]
          %v3267 = vld [vmem:[#allocation2 + $0x90] sm:$0xff]
          %v3268 = vld [vmem:[#allocation2 + $0x98] sm:$0xff]
          %v3269 = vld [vmem:[#allocation2 + $0xa0] sm:$0xff]
          %v3270 = vld [vmem:[#allocation2 + $0xa8] sm:$0xff]
          %v3271 = vld [vmem:[#allocation2 + $0xb0] sm:$0xff]
          %v3272 = vld [vmem:[#allocation2 + $0xb8] sm:$0xff]
          %v3273 = vld [vmem:[#allocation2 + $0xc0] sm:$0xff]
          %v3274 = vld [vmem:[#allocation2 + $0xc8] sm:$0xff]
          %v3275 = vld [vmem:[#allocation2 + $0xd0] sm:$0xff]
          %v3276 = vld [vmem:[#allocation2 + $0xd8] sm:$0xff]
          %v3277 = vld [vmem:[#allocation2 + $0xe0] sm:$0xff]
          %v3278 = vld [vmem:[#allocation2 + $0xe8] sm:$0xff]
          %v3279 = vld [vmem:[#allocation2 + $0xf0] sm:$0xff]
          %v3280 = vld [vmem:[#allocation2 + $0xf8] sm:$0xff]
          %v3281 = vld [vmem:[#allocation2 + $0x100] sm:$0xff]
          %v3282 = vld [vmem:[#allocation2 + $0x108] sm:$0xff]
          %v3283 = vld [vmem:[#allocation2 + $0x110] sm:$0xff]
          %v3284 = vld [vmem:[#allocation2 + $0x118] sm:$0xff]
          %v3285 = vld [vmem:[#allocation2 + $0x120] sm:$0xff]
          %v3286 = vld [vmem:[#allocation2 + $0x128] sm:$0xff]
          %v3287 = vld [vmem:[#allocation2 + $0x130] sm:$0xff]
          %v3288 = vld [vmem:[#allocation2 + $0x138] sm:$0xff]
          %v3289 = vld [vmem:[#allocation2 + $0x140] sm:$0xff]
          %v3290 = vld [vmem:[#allocation2 + $0x148] sm:$0xff]
          %v3291 = vld [vmem:[#allocation2 + $0x150] sm:$0xff]
          %v3292 = vld [vmem:[#allocation2 + $0x158] sm:$0xff]
          %v3293 = vld [vmem:[#allocation2 + $0x160] sm:$0xff]
          %v3294 = vld [vmem:[#allocation2 + $0x168] sm:$0xff]
          %v3295 = vld [vmem:[#allocation2 + $0x170] sm:$0xff]
          %v3296 = vld [vmem:[#allocation2 + $0x178] sm:$0xff]
          %v3297 = vld [vmem:[#allocation2 + $0x180] sm:$0xff]
          %v3298 = vld [vmem:[#allocation2 + $0x188] sm:$0xff]
          %v3299 = vld [vmem:[#allocation2 + $0x190] sm:$0xff]
          %v3300 = vld [vmem:[#allocation2 + $0x198] sm:$0xff]
          %v3301 = vld [vmem:[#allocation2 + $0x1a0] sm:$0xff]
          %v3302 = vld [vmem:[#allocation2 + $0x1a8] sm:$0xff]
          %v3303 = vld [vmem:[#allocation2 + $0x1b0] sm:$0xff]
          %v3304 = vld [vmem:[#allocation2 + $0x1b8] sm:$0xff]
          %v3305 = vld [vmem:[#allocation2 + $0x1c0] sm:$0xff]
          %v3306 = vld [vmem:[#allocation2 + $0x1c8] sm:$0xff]
          %v3307 = vld [vmem:[#allocation2 + $0x1d0] sm:$0xff]
          %v3308 = vld [vmem:[#allocation2 + $0x1d8] sm:$0xff]
          %v3309 = vld [vmem:[#allocation2 + $0x1e0] sm:$0xff]
          %v3310 = vld [vmem:[#allocation2 + $0x1e8] sm:$0xff]
          %v3311 = vld [vmem:[#allocation2 + $0x1f0] sm:$0xff]
          %v3312 = vld [vmem:[#allocation2 + $0x1f8] sm:$0xff]
          %v3313 = vld [vmem:[#allocation2 + $0x200] sm:$0xff]
          %v3314 = vld [vmem:[#allocation2 + $0x208] sm:$0xff]
          %v3315 = vld [vmem:[#allocation2 + $0x210] sm:$0xff]
          %v3316 = vld [vmem:[#allocation2 + $0x218] sm:$0xff]
          %v3317 = vld [vmem:[#allocation2 + $0x220] sm:$0xff]
          %v3318 = vld [vmem:[#allocation2 + $0x228] sm:$0xff]
          %v3319 = vld [vmem:[#allocation2 + $0x230] sm:$0xff]
          %v3320 = vld [vmem:[#allocation2 + $0x238] sm:$0xff]
          %v3321 = vld [vmem:[#allocation2 + $0x240] sm:$0xff]
          %v3322 = vld [vmem:[#allocation2 + $0x248] sm:$0xff]
          %v3323 = vld [vmem:[#allocation2 + $0x250] sm:$0xff]
          %v3324 = vld [vmem:[#allocation2 + $0x258] sm:$0xff]
          %v3325 = vld [vmem:[#allocation2 + $0x260] sm:$0xff]
          %v3326 = vld [vmem:[#allocation2 + $0x268] sm:$0xff]
          %v3327 = vld [vmem:[#allocation2 + $0x270] sm:$0xff]
          %v3328 = vld [vmem:[#allocation2 + $0x278] sm:$0xff]
          %v3329 = vld [vmem:[#allocation2 + $0x280] sm:$0xff]
          %v3330 = vld [vmem:[#allocation2 + $0x288] sm:$0xff]
          %v3331 = vld [vmem:[#allocation2 + $0x290] sm:$0xff]
          %v3332 = vld [vmem:[#allocation2 + $0x298] sm:$0xff]
          %v3333 = vld [vmem:[#allocation2 + $0x2a0] sm:$0xff]
          %v3334 = vld [vmem:[#allocation2 + $0x2a8] sm:$0xff]
          %v3335 = vld [vmem:[#allocation2 + $0x2b0] sm:$0xff]
          %v3336 = vld [vmem:[#allocation2 + $0x2b8] sm:$0xff]
          %v3337 = vld [vmem:[#allocation2 + $0x2c0] sm:$0xff]
          %v3338 = vld [vmem:[#allocation2 + $0x2c8] sm:$0xff]
          %v3339 = vld [vmem:[#allocation2 + $0x2d0] sm:$0xff]
          %v3340 = vld [vmem:[#allocation2 + $0x2d8] sm:$0xff]
          %v3341 = vld [vmem:[#allocation2 + $0x2e0] sm:$0xff]
          %v3342 = vld [vmem:[#allocation2 + $0x2e8] sm:$0xff]
          %v3343 = vld [vmem:[#allocation2 + $0x2f0] sm:$0xff]
          %v3344 = vld [vmem:[#allocation2 + $0x2f8] sm:$0xff]
          %v3345 = vld [vmem:[#allocation2 + $0x300] sm:$0xff]
          %v3346 = vld [vmem:[#allocation2 + $0x308] sm:$0xff]
          %v3347 = vld [vmem:[#allocation2 + $0x310] sm:$0xff]
          %v3348 = vld [vmem:[#allocation2 + $0x318] sm:$0xff]
          %v3349 = vld [vmem:[#allocation2 + $0x320] sm:$0xff]
          %v3350 = vld [vmem:[#allocation2 + $0x328] sm:$0xff]
          %v3351 = vld [vmem:[#allocation2 + $0x330] sm:$0xff]
          %v3352 = vld [vmem:[#allocation2 + $0x338] sm:$0xff]
          %v3353 = vld [vmem:[#allocation2 + $0x340] sm:$0xff]
          %v3354 = vld [vmem:[#allocation2 + $0x348] sm:$0xff]
          %v3355 = vld [vmem:[#allocation2 + $0x350] sm:$0xff]
          %v3356 = vld [vmem:[#allocation2 + $0x358] sm:$0xff]
          %v3357 = vld [vmem:[#allocation2 + $0x360] sm:$0xff]
          %v3358 = vld [vmem:[#allocation2 + $0x368] sm:$0xff]
          %v3359 = vld [vmem:[#allocation2 + $0x370] sm:$0xff]
          %v3360 = vld [vmem:[#allocation2 + $0x378] sm:$0xff]
          %v3361 = vld [vmem:[#allocation2 + $0x380] sm:$0xff]
          %v3362 = vld [vmem:[#allocation2 + $0x388] sm:$0xff]
          %v3363 = vld [vmem:[#allocation2 + $0x390] sm:$0xff]
          %v3364 = vld [vmem:[#allocation2 + $0x398] sm:$0xff]
          %v3365 = vld [vmem:[#allocation2 + $0x3a0] sm:$0xff]
          %v3366 = vld [vmem:[#allocation2 + $0x3a8] sm:$0xff]
          %v3367 = vld [vmem:[#allocation2 + $0x3b0] sm:$0xff]
          %v3368 = vld [vmem:[#allocation2 + $0x3b8] sm:$0xff]
          %v3369 = vld [vmem:[#allocation2 + $0x3c0] sm:$0xff]
          %v3370 = vld [vmem:[#allocation2 + $0x3c8] sm:$0xff]
          %v3371 = vld [vmem:[#allocation2 + $0x3d0] sm:$0xff]
          %v3372 = vld [vmem:[#allocation2 + $0x3d8] sm:$0xff]
          %v3373 = vld [vmem:[#allocation2 + $0x3e0] sm:$0xff]
          %v3374 = vld [vmem:[#allocation2 + $0x3e8] sm:$0xff]
          %v3375 = vld [vmem:[#allocation2 + $0x3f0] sm:$0xff]
          %v3376 = vld [vmem:[#allocation2 + $0x3f8] sm:$0xff]
          %v3377 = vpack.c.bf16 %v3250, %v3249
          %v3378 = vpack.c.bf16 %v3252, %v3251
          %v3379 = vpack.c.bf16 %v3254, %v3253
          %v3380 = vpack.c.bf16 %v3256, %v3255
          %v3381 = vpack.c.bf16 %v3258, %v3257
          %v3382 = vpack.c.bf16 %v3260, %v3259
          %v3383 = vpack.c.bf16 %v3262, %v3261
          %v3384 = vpack.c.bf16 %v3264, %v3263
          %v3385 = vpack.c.bf16 %v3266, %v3265
          %v3386 = vpack.c.bf16 %v3268, %v3267
          %v3387 = vpack.c.bf16 %v3270, %v3269
          %v3388 = vpack.c.bf16 %v3272, %v3271
          %v3389 = vpack.c.bf16 %v3274, %v3273
          %v3390 = vpack.c.bf16 %v3276, %v3275
          %v3391 = vpack.c.bf16 %v3278, %v3277
          %v3392 = vpack.c.bf16 %v3280, %v3279
          %v3393 = vpack.c.bf16 %v3282, %v3281
          %v3394 = vpack.c.bf16 %v3284, %v3283
          %v3395 = vpack.c.bf16 %v3286, %v3285
          %v3396 = vpack.c.bf16 %v3288, %v3287
          %v3397 = vpack.c.bf16 %v3290, %v3289
          %v3398 = vpack.c.bf16 %v3292, %v3291
          %v3399 = vpack.c.bf16 %v3294, %v3293
          %v3400 = vpack.c.bf16 %v3296, %v3295
          %v3401 = vpack.c.bf16 %v3298, %v3297
          %v3402 = vpack.c.bf16 %v3300, %v3299
          %v3403 = vpack.c.bf16 %v3302, %v3301
          %v3404 = vpack.c.bf16 %v3304, %v3303
          %v3405 = vpack.c.bf16 %v3306, %v3305
          %v3406 = vpack.c.bf16 %v3308, %v3307
          %v3407 = vpack.c.bf16 %v3310, %v3309
          %v3408 = vpack.c.bf16 %v3312, %v3311
          %v3409 = vpack.c.bf16 %v3314, %v3313
          %v3410 = vpack.c.bf16 %v3316, %v3315
          %v3411 = vpack.c.bf16 %v3318, %v3317
          %v3412 = vpack.c.bf16 %v3320, %v3319
          %v3413 = vpack.c.bf16 %v3322, %v3321
          %v3414 = vpack.c.bf16 %v3324, %v3323
          %v3415 = vpack.c.bf16 %v3326, %v3325
          %v3416 = vpack.c.bf16 %v3328, %v3327
          %v3417 = vpack.c.bf16 %v3330, %v3329
          %v3418 = vpack.c.bf16 %v3332, %v3331
          %v3419 = vpack.c.bf16 %v3334, %v3333
          %v3420 = vpack.c.bf16 %v3336, %v3335
          %v3421 = vpack.c.bf16 %v3338, %v3337
          %v3422 = vpack.c.bf16 %v3340, %v3339
          %v3423 = vpack.c.bf16 %v3342, %v3341
          %v3424 = vpack.c.bf16 %v3344, %v3343
          %v3425 = vpack.c.bf16 %v3346, %v3345
          %v3426 = vpack.c.bf16 %v3348, %v3347
          %v3427 = vpack.c.bf16 %v3350, %v3349
          %v3428 = vpack.c.bf16 %v3352, %v3351
          %v3429 = vpack.c.bf16 %v3354, %v3353
          %v3430 = vpack.c.bf16 %v3356, %v3355
          %v3431 = vpack.c.bf16 %v3358, %v3357
          %v3432 = vpack.c.bf16 %v3360, %v3359
          %v3433 = vpack.c.bf16 %v3362, %v3361
          %v3434 = vpack.c.bf16 %v3364, %v3363
          %v3435 = vpack.c.bf16 %v3366, %v3365
          %v3436 = vpack.c.bf16 %v3368, %v3367
          %v3437 = vpack.c.bf16 %v3370, %v3369
          %v3438 = vpack.c.bf16 %v3372, %v3371
          %v3439 = vpack.c.bf16 %v3374, %v3373
          %v3440 = vpack.c.bf16 %v3376, %v3375
          %3441 = vst [vmem:[%s219] sm:$0xff] %v3377
          %3442 = vst [vmem:[%s219 + $0x8] sm:$0xff] %v3378
          %3443 = vst [vmem:[%s219 + $0x10] sm:$0xff] %v3379
          %3444 = vst [vmem:[%s219 + $0x18] sm:$0xff] %v3380
          %3445 = vst [vmem:[%s219 + $0x20] sm:$0xff] %v3381
          %3446 = vst [vmem:[%s219 + $0x28] sm:$0xff] %v3382
          %3447 = vst [vmem:[%s219 + $0x30] sm:$0xff] %v3383
          %3448 = vst [vmem:[%s219 + $0x38] sm:$0xff] %v3384
          %3449 = vst [vmem:[%s219 + $0x40] sm:$0xff] %v3385
          %3450 = vst [vmem:[%s219 + $0x48] sm:$0xff] %v3386
          %3451 = vst [vmem:[%s219 + $0x50] sm:$0xff] %v3387
          %3452 = vst [vmem:[%s219 + $0x58] sm:$0xff] %v3388
          %3453 = vst [vmem:[%s219 + $0x60] sm:$0xff] %v3389
          %3454 = vst [vmem:[%s219 + $0x68] sm:$0xff] %v3390
          %3455 = vst [vmem:[%s219 + $0x70] sm:$0xff] %v3391
          %3456 = vst [vmem:[%s219 + $0x78] sm:$0xff] %v3392
          %3457 = vst [vmem:[%s219 + $0x80] sm:$0xff] %v3393
          %3458 = vst [vmem:[%s219 + $0x88] sm:$0xff] %v3394
          %3459 = vst [vmem:[%s219 + $0x90] sm:$0xff] %v3395
          %3460 = vst [vmem:[%s219 + $0x98] sm:$0xff] %v3396
          %3461 = vst [vmem:[%s219 + $0xa0] sm:$0xff] %v3397
          %3462 = vst [vmem:[%s219 + $0xa8] sm:$0xff] %v3398
          %3463 = vst [vmem:[%s219 + $0xb0] sm:$0xff] %v3399
          %3464 = vst [vmem:[%s219 + $0xb8] sm:$0xff] %v3400
          %3465 = vst [vmem:[%s219 + $0xc0] sm:$0xff] %v3401
          %3466 = vst [vmem:[%s219 + $0xc8] sm:$0xff] %v3402
          %3467 = vst [vmem:[%s219 + $0xd0] sm:$0xff] %v3403
          %3468 = vst [vmem:[%s219 + $0xd8] sm:$0xff] %v3404
          %3469 = vst [vmem:[%s219 + $0xe0] sm:$0xff] %v3405
          %3470 = vst [vmem:[%s219 + $0xe8] sm:$0xff] %v3406
          %3471 = vst [vmem:[%s219 + $0xf0] sm:$0xff] %v3407
          %3472 = vst [vmem:[%s219 + $0xf8] sm:$0xff] %v3408
          %3473 = vst [vmem:[%s219 + $0x100] sm:$0xff] %v3409
          %3474 = vst [vmem:[%s219 + $0x108] sm:$0xff] %v3410
          %3475 = vst [vmem:[%s219 + $0x110] sm:$0xff] %v3411
          %3476 = vst [vmem:[%s219 + $0x118] sm:$0xff] %v3412
          %3477 = vst [vmem:[%s219 + $0x120] sm:$0xff] %v3413
          %3478 = vst [vmem:[%s219 + $0x128] sm:$0xff] %v3414
          %3479 = vst [vmem:[%s219 + $0x130] sm:$0xff] %v3415
          %3480 = vst [vmem:[%s219 + $0x138] sm:$0xff] %v3416
          %3481 = vst [vmem:[%s219 + $0x140] sm:$0xff] %v3417
          %3482 = vst [vmem:[%s219 + $0x148] sm:$0xff] %v3418
          %3483 = vst [vmem:[%s219 + $0x150] sm:$0xff] %v3419
          %3484 = vst [vmem:[%s219 + $0x158] sm:$0xff] %v3420
          %3485 = vst [vmem:[%s219 + $0x160] sm:$0xff] %v3421
          %3486 = vst [vmem:[%s219 + $0x168] sm:$0xff] %v3422
          %3487 = vst [vmem:[%s219 + $0x170] sm:$0xff] %v3423
          %3488 = vst [vmem:[%s219 + $0x178] sm:$0xff] %v3424
          %3489 = vst [vmem:[%s219 + $0x180] sm:$0xff] %v3425
          %3490 = vst [vmem:[%s219 + $0x188] sm:$0xff] %v3426
          %3491 = vst [vmem:[%s219 + $0x190] sm:$0xff] %v3427
          %3492 = vst [vmem:[%s219 + $0x198] sm:$0xff] %v3428
          %3493 = vst [vmem:[%s219 + $0x1a0] sm:$0xff] %v3429
          %3494 = vst [vmem:[%s219 + $0x1a8] sm:$0xff] %v3430
          %3495 = vst [vmem:[%s219 + $0x1b0] sm:$0xff] %v3431
          %3496 = vst [vmem:[%s219 + $0x1b8] sm:$0xff] %v3432
          %3497 = vst [vmem:[%s219 + $0x1c0] sm:$0xff] %v3433
          %3498 = vst [vmem:[%s219 + $0x1c8] sm:$0xff] %v3434
          %3499 = vst [vmem:[%s219 + $0x1d0] sm:$0xff] %v3435
          %3500 = vst [vmem:[%s219 + $0x1d8] sm:$0xff] %v3436
          %3501 = vst [vmem:[%s219 + $0x1e0] sm:$0xff] %v3437
          %3502 = vst [vmem:[%s219 + $0x1e8] sm:$0xff] %v3438
          %3503 = vst [vmem:[%s219 + $0x1f0] sm:$0xff] %v3439
          %3504 = vst [vmem:[%s219 + $0x1f8] sm:$0xff] %v3440
        $region44: #{tpu_custom_call.1} parent=27 // pred_fallthru
          _
        %s3505 = sand.u32 %s105, 1
        %s3506 = scalar_lea.sflag [#allocation5], %s3505
        %s3507 = sand.u32 %s105, 1
        %s3508 = smul.addr %s3507, 512
        %s3509 = scalar_lea.vmem [#allocation8], %s3508
        // Predicated region
        $region45: #{tpu_custom_call.1} parent=27 // pred_check
          %p3510 = pneg %p115
        $region46: #{tpu_custom_call.1} parent=27 // pred_check_branch
          %3512 = sbr.rel (%p3510) target = $region48
        $region47: #{tpu_custom_call.1} parent=27 // pred_region
          %s3513 = smul.u32 64, %s25
          %s3514 = smul.u32 2, %s26
          %3516 = vsyncadd %s3506, 0
          %s3517 = smul.addr %s3513, 8
          %s3518 = sadd.s32 %s3514, %s3517
          %s3519 = smul.addr %s3518, 4
          %s3520 = scalar_lea.hbm %s2, %s3519
          %s3521 = sshll.u32 %s3509, 4
          %s3522 = int_to_ptr.vmem [resolvable:$true] %s3521
          %s3523 = sshll.u32 %s3520, 4
          %s3524 = int_to_ptr.hbm [resolvable:$true] %s3523
          %3529 = dma.vmem_to_hbm [thread:$0]  %s3522, 8192, %s3524, %s3506, 128, 512, 8
        $region48: #{tpu_custom_call.1} parent=27 // pred_fallthru
          _
      $region28: #{tpu_custom_call.1} parent=5 // pred_fallthru
        _
      %p3530 = scmp.le.s32.totalorder 2, %s15
      // Predicated region
      $region49: #{tpu_custom_call.1} parent=5 // pred_check
        %p3531 = pneg %p3530
      $region50: #{tpu_custom_call.1} parent=5 // pred_check_branch
        %3533 = sbr.rel (%p3531) target = $region52
      $region51: #{tpu_custom_call.1} parent=5 // pred_region
        %s3534 = ssub.s32 %s15, 2
        // Predicated region
        $region53: #{tpu_custom_call.1} parent=51 // pred_check
          %p3535 = pneg %p121
        $region54: #{tpu_custom_call.1} parent=51 // pred_check_branch
          %3537 = sbr.rel (%p3535) target = $region56
        $region55: #{tpu_custom_call.1} parent=51 // pred_region
          %s3538 = sand.u32 %s106, 1
          %s3539 = scalar_lea.sflag [#allocation5], %s3538
          %s3540 = sand.u32 %s106, 1
          %s3541 = smul.addr %s3540, 512
          %s3542 = scalar_lea.vmem [#allocation8], %s3541
          %3544 = dma.done %s3539, 8192
        $region56: #{tpu_custom_call.1} parent=51 // pred_fallthru
          _
      $region52: #{tpu_custom_call.1} parent=5 // pred_fallthru
        _
    $region6: #{tpu_custom_call.1} parent=1 // loop_footer
      %s19 = sadd.s32 1, %s15
    $region7: #{tpu_custom_call.1} parent=1 // loop_footer_branch
      %14 = sbr.rel target = $region3
    $region8: #{tpu_custom_call.1} parent=1 // loop_exit
      _
    %3545 = vsyncpa [#allocation4], 1
    %s3546 = scalar_lea.sflag [#allocation4], 1
    %3547 = vsyncpa %s3546, 1
    %3548 = vsyncpa [#allocation7], 1
    %s3549 = scalar_lea.sflag [#allocation7], 1
    %3550 = vsyncpa %s3549, 1
    %3551 = vsyncpa [#allocation5], 1
    %s3552 = scalar_lea.sflag [#allocation5], 1
    %3553 = vsyncpa %s3552, 1

</llo_original>
